<compile_context>
chip_gen: v7x
topology: tpu7x:2x2x1
jax: 0.10.0
libtpu: 0.0.40
codegen_flags: <defaults>
</compile_context>

<pallas_src>
import jax
import jax.numpy as jnp
from jax.experimental import pallas as pl
from jax.experimental.pallas import tpu as pltpu


def _round_up(x, m):
    return ((x + m - 1) // m) * m


def _fit_tile(dim, preferred, align):
    """Largest tile (multiple of `align`, <= preferred) that covers dim if small."""
    return min(_round_up(preferred, align), _round_up(dim, align))


def _complex_matmul_kernel(x_ref, a_ref, o_ref, acc_r, acc_i):
    """One (tm, tn) output tile, accumulated over the K grid axis.

    x_ref: (2, tm, tk)  stacked [real, imag] activation tile
    a_ref: (2, tk, tn)  stacked [real, imag] tile of A = Q^H
    o_ref: (2, tm, tn)  stacked [real, imag] f32 output tile
    acc_r, acc_i: (tm, tn) f32 VMEM accumulators (live across the K axis)
    """
    k = pl.program_id(2)

    @pl.when(k == 0)
    def _():
        acc_r[...] = jnp.zeros_like(acc_r)
        acc_i[...] = jnp.zeros_like(acc_i)

    xr = x_ref[0]
    xi = x_ref[1]
    ar = a_ref[0]
    ai = a_ref[1]

    # 3-matmul complex product (Karatsuba).  The two adds are O(tile^2) VPU
    # work vs O(tile^3) MXU work, so doing them in-kernel is cheaper than
    # shipping a third pre-summed weight plane from HBM.
    p1 = jnp.dot(xr, ar, preferred_element_type=jnp.float32)
    p2 = jnp.dot(xi, ai, preferred_element_type=jnp.float32)
    p3 = jnp.dot(xr + xi, ar + ai, preferred_element_type=jnp.float32)

    acc_r[...] += p1 - p2
    acc_i[...] += p3 - p1 - p2

    @pl.when(k == pl.num_programs(2) - 1)
    def _():
        o_ref[0] = acc_r[...].astype(o_ref.dtype)
        o_ref[1] = acc_i[...].astype(o_ref.dtype)


def unitary_complex_linear(x, weight_real, weight_imag, *,
                           compute_dtype=jnp.bfloat16,
                           tm=512, tn=512, tk=512):
    """Forward of UnitaryComplexLinear: out = x @ qr(Wr + i*Wi)[0].conj().T.

    x: complex (M, N); weight_real/imag: (N, N) float32.  Returns complex64 (M, N).
    """
    n = weight_real.shape[0]
    assert weight_real.shape == weight_imag.shape == (n, n)
    m = x.shape[0]
    assert x.shape == (m, n)

    # ---- parameter transform (plain JAX; hoist / jit-cache if weights are static)
    # TODO(synk): complex QR has no clean Pallas equivalent; it stays in jnp.linalg.qr.
    w = weight_real.astype(jnp.complex64) + 1j * weight_imag.astype(jnp.complex64)
    q, _ = jnp.linalg.qr(w)
    a = jnp.conj(q).T                                   # (K=n, N=n); out = x @ a

    # ---- tile / padding choices (MXU-sized, lane-dense) ----
    tm = _fit_tile(m, tm, 256)   # 256/512-row tiles keep the MXU busy, megacore-friendly
    tn = _fit_tile(n, tn, 128)   # output lanes: multiple of 128 -> unmasked vst
    tk = _fit_tile(n, tk, 128)   # contraction tile
    m_pad = _round_up(m, tm)
    n_pad = _round_up(n, tn)
    k_pad = _round_up(n, tk)

    # ---- stacked real/imag planes, zero-padded to tile multiples ----
    x_planes = jnp.stack([jnp.real(x), jnp.imag(x)]).astype(jnp.float32)
    x_planes = jnp.pad(x_planes, ((0, 0), (0, m_pad - m), (0, k_pad - n)))
    x_planes = x_planes.astype(compute_dtype)

    a_planes = jnp.stack([jnp.real(a), jnp.imag(a)]).astype(jnp.float32)
    a_planes = jnp.pad(a_planes, ((0, 0), (0, k_pad - n), (0, n_pad - n)))
    a_planes = a_planes.astype(compute_dtype)

    grid = (m_pad // tm, n_pad // tn, k_pad // tk)
    in_bytes = jnp.dtype(compute_dtype).itemsize

    # Working set: double-buffered input/output blocks + resident accumulators.
    vmem_need = (2 * (2 * tm * tk * in_bytes)        # x block
                 + 2 * (2 * tk * tn * in_bytes)      # A block
                 + 2 * (2 * tm * tn * 4)             # output block
                 + 2 * (tm * tn * 4))                # f32 accumulators (scratch)
    vmem_limit = max(int(vmem_need * 3 // 2), 32 * 1024 * 1024)

    cost = pl.CostEstimate(
        flops=3 * 2 * m_pad * k_pad * n_pad,         # 3 real matmuls (Karatsuba)
        transcendentals=0,
        bytes_accessed=(grid[1] * 2 * m_pad * k_pad * in_bytes
                        + grid[0] * 2 * k_pad * n_pad * in_bytes
                        + 2 * m_pad * n_pad * 4),
    )

    out_planes = pl.pallas_call(
        _complex_matmul_kernel,
        out_shape=jax.ShapeDtypeStruct((2, m_pad, n_pad), jnp.float32),
        grid_spec=pltpu.PrefetchScalarGridSpec(
            num_scalar_prefetch=0,
            grid=grid,
            in_specs=[
                pl.BlockSpec((2, tm, tk), lambda i, j, k: (0, i, k)),   # x planes
                pl.BlockSpec((2, tk, tn), lambda i, j, k: (0, k, j)),   # A = Q^H planes
            ],
            out_specs=pl.BlockSpec((2, tm, tn), lambda i, j, k: (0, i, j)),
            scratch_shapes=[pltpu.VMEM((tm, tn), jnp.float32),
                            pltpu.VMEM((tm, tn), jnp.float32)],
        ),
        compiler_params=pltpu.CompilerParams(
            dimension_semantics=("parallel", "parallel", "arbitrary"),
            vmem_limit_bytes=vmem_limit),
        cost_estimate=cost,
    )(x_planes, a_planes)

    out = jax.lax.complex(out_planes[0, :m, :n], out_planes[1, :m, :n])
    return out.astype(jnp.complex64)


if __name__ == "__main__":
    key = jax.random.PRNGKey(0)
    k_wr, k_wi, k_xr, k_xi = jax.random.split(key, 4)

    features = 32        # in_features == out_features (unitarity requirement)
    batch = 8

    weight_real = jax.random.normal(k_wr, (features, features), jnp.float32)
    weight_imag = jax.random.normal(k_wi, (features, features), jnp.float32)
    x = (jax.random.normal(k_xr, (batch, features), jnp.float32)
         + 1j * jax.random.normal(k_xi, (batch, features), jnp.float32)
         ).astype(jnp.complex64)

    fwd = jax.jit(unitary_complex_linear,
                  static_argnames=("compute_dtype", "tm", "tn", "tk"))

    # Default path: bf16 MXU inputs, f32 accumulation (v6e/v7x MXU rates).
    out = jax.block_until_ready(
        fwd(x, weight_real, weight_imag, compute_dtype=jnp.bfloat16))

    # Plain-JAX reference.
    w = weight_real.astype(jnp.complex64) + 1j * weight_imag.astype(jnp.complex64)
    q, _ = jnp.linalg.qr(w)
    ref = x @ jnp.conj(q).T

    assert out.shape == (batch, features) and out.dtype == jnp.complex64
    rel_err = jnp.max(jnp.abs(out - ref)) / jnp.max(jnp.abs(ref))
    assert rel_err < 5e-2, f"bf16 path rel_err={rel_err}"     # bf16 inputs -> loose tol

    # Full-precision path: tight tolerance.
    out_f32 = jax.block_until_ready(
        fwd(x, weight_real, weight_imag, compute_dtype=jnp.float32))
    assert jnp.max(jnp.abs(out_f32 - ref)) < 1e-4

    print("KERNEL_OK")
</pallas_src>

<mosaic_0001>
module attributes {stable_mosaic.version = 11 : i64} {
  func.func @_complex_matmul_kernel(%arg0: i32, %arg1: i32, %arg2: i32, %arg3: memref<2x256x128xbf16, #tpu.memory_space<vmem>>, %arg4: memref<2x128x128xbf16, #tpu.memory_space<vmem>>, %arg5: memref<2x256x128xf32, #tpu.memory_space<vmem>>, %arg6: memref<256x128xf32, #tpu.memory_space<vmem>>, %arg7: memref<256x128xf32, #tpu.memory_space<vmem>>) attributes {dimension_semantics = [#tpu.dimension_semantics<parallel>, #tpu.dimension_semantics<parallel>, #tpu.dimension_semantics<arbitrary>], iteration_bounds = array<i64: 1, 1, 1>, scalar_prefetch = 0 : i64, scratch_operands = 2 : i64, tpu.core_type = #tpu.core_type<tc>, window_params = [{transform_indices = @transform_0, window_bounds = array<i64: 2, 256, 128>}, {transform_indices = @transform_1, window_bounds = array<i64: 2, 128, 128>}, {transform_indices = @transform_2, window_bounds = array<i64: 2, 256, 128>}]} {
    %c0_i32 = arith.constant 0 : i32
    %0 = arith.cmpi eq, %arg2, %c0_i32 : i32
    %1 = arith.extui %0 : i1 to i32
    %c0_i32_0 = arith.constant 0 : i32
    %2 = arith.cmpi ne, %1, %c0_i32_0 : i32
    scf.if %2 {
      %cst_23 = arith.constant 0.000000e+00 : f32
      %28 = vector.broadcast %cst_23 : f32 to vector<256x128xf32>
      %c0_24 = arith.constant 0 : index
      %c0_25 = arith.constant 0 : index
      %29 = vector.load %arg6[%c0_24, %c0_25] : memref<256x128xf32, #tpu.memory_space<vmem>>, vector<256x128xf32>
      tpu.vector_store %arg6[%c0_24, %c0_25], %28 {strides = array<i32>} : memref<256x128xf32, #tpu.memory_space<vmem>>, vector<256x128xf32>,
      %cst_26 = arith.constant 0.000000e+00 : f32
      %30 = vector.broadcast %cst_26 : f32 to vector<256x128xf32>
      %c0_27 = arith.constant 0 : index
      %c0_28 = arith.constant 0 : index
      %31 = vector.load %arg7[%c0_27, %c0_28] : memref<256x128xf32, #tpu.memory_space<vmem>>, vector<256x128xf32>
      tpu.vector_store %arg7[%c0_27, %c0_28], %30 {strides = array<i32>} : memref<256x128xf32, #tpu.memory_space<vmem>>, vector<256x128xf32>,
    } else {
    }
    %c0 = arith.constant 0 : index
    %c0_1 = arith.constant 0 : index
    %c0_2 = arith.constant 0 : index
    %3 = vector.load %arg3[%c0, %c0_1, %c0_2] : memref<2x256x128xbf16, #tpu.memory_space<vmem>>, vector<1x256x128xbf16>
    %4 = vector.shape_cast %3 : vector<1x256x128xbf16> to vector<256x128xbf16>
    %c1 = arith.constant 1 : index
    %c0_3 = arith.constant 0 : index
    %c0_4 = arith.constant 0 : index
    %5 = vector.load %arg3[%c1, %c0_3, %c0_4] : memref<2x256x128xbf16, #tpu.memory_space<vmem>>, vector<1x256x128xbf16>
    %6 = vector.shape_cast %5 : vector<1x256x128xbf16> to vector<256x128xbf16>
    %c0_5 = arith.constant 0 : index
    %c0_6 = arith.constant 0 : index
    %c0_7 = arith.constant 0 : index
    %7 = vector.load %arg4[%c0_5, %c0_6, %c0_7] : memref<2x128x128xbf16, #tpu.memory_space<vmem>>, vector<1x128x128xbf16>
    %8 = vector.shape_cast %7 : vector<1x128x128xbf16> to vector<128x128xbf16>
    %c1_8 = arith.constant 1 : index
    %c0_9 = arith.constant 0 : index
    %c0_10 = arith.constant 0 : index
    %9 = vector.load %arg4[%c1_8, %c0_9, %c0_10] : memref<2x128x128xbf16, #tpu.memory_space<vmem>>, vector<1x128x128xbf16>
    %10 = vector.shape_cast %9 : vector<1x128x128xbf16> to vector<128x128xbf16>
    %cst = arith.constant dense<0.000000e+00> : vector<256x128xf32>
    %11 = tpu.matmul %4, %8, %cst {dimension_numbers = #tpu.dot_dimension_numbers<[1], [0], [0], [1], [0, 0, 1, 1], [], []>} : vector<256x128xbf16>, vector<128x128xbf16>, vector<256x128xf32> -> vector<256x128xf32>
    %cst_11 = arith.constant dense<0.000000e+00> : vector<256x128xf32>
    %12 = tpu.matmul %6, %10, %cst_11 {dimension_numbers = #tpu.dot_dimension_numbers<[1], [0], [0], [1], [0, 0, 1, 1], [], []>} : vector<256x128xbf16>, vector<128x128xbf16>, vector<256x128xf32> -> vector<256x128xf32>
    %13 = arith.addf %4, %6 : vector<256x128xbf16>
    %14 = arith.addf %8, %10 : vector<128x128xbf16>
    %cst_12 = arith.constant dense<0.000000e+00> : vector<256x128xf32>
    %15 = tpu.matmul %13, %14, %cst_12 {dimension_numbers = #tpu.dot_dimension_numbers<[1], [0], [0], [1], [0, 0, 1, 1], [], []>} : vector<256x128xbf16>, vector<128x128xbf16>, vector<256x128xf32> -> vector<256x128xf32>
    %c0_13 = arith.constant 0 : index
    %c0_14 = arith.constant 0 : index
    %16 = vector.load %arg6[%c0_13, %c0_14] : memref<256x128xf32, #tpu.memory_space<vmem>>, vector<256x128xf32>
    %17 = arith.subf %11, %12 : vector<256x128xf32>
    %18 = arith.addf %16, %17 : vector<256x128xf32>
    %c0_15 = arith.constant 0 : index
    %c0_16 = arith.constant 0 : index
    %19 = vector.load %arg6[%c0_15, %c0_16] : memref<256x128xf32, #tpu.memory_space<vmem>>, vector<256x128xf32>
    tpu.vector_store %arg6[%c0_15, %c0_16], %18 {strides = array<i32>} : memref<256x128xf32, #tpu.memory_space<vmem>>, vector<256x128xf32>,
    %c0_17 = arith.constant 0 : index
    %c0_18 = arith.constant 0 : index
    %20 = vector.load %arg7[%c0_17, %c0_18] : memref<256x128xf32, #tpu.memory_space<vmem>>, vector<256x128xf32>
    %21 = arith.subf %15, %11 : vector<256x128xf32>
    %22 = arith.subf %21, %12 : vector<256x128xf32>
    %23 = arith.addf %20, %22 : vector<256x128xf32>
    %c0_19 = arith.constant 0 : index
    %c0_20 = arith.constant 0 : index
    %24 = vector.load %arg7[%c0_19, %c0_20] : memref<256x128xf32, #tpu.memory_space<vmem>>, vector<256x128xf32>
    tpu.vector_store %arg7[%c0_19, %c0_20], %23 {strides = array<i32>} : memref<256x128xf32, #tpu.memory_space<vmem>>, vector<256x128xf32>,
    %c0_i32_21 = arith.constant 0 : i32
    %25 = arith.cmpi eq, %arg2, %c0_i32_21 : i32
    %26 = arith.extui %25 : i1 to i32
    %c0_i32_22 = arith.constant 0 : i32
    %27 = arith.cmpi ne, %26, %c0_i32_22 : i32
    scf.if %27 {
      %c0_23 = arith.constant 0 : index
      %c0_24 = arith.constant 0 : index
      %28 = vector.load %arg6[%c0_23, %c0_24] : memref<256x128xf32, #tpu.memory_space<vmem>>, vector<256x128xf32>
      %c0_25 = arith.constant 0 : index
      %c0_26 = arith.constant 0 : index
      %c0_27 = arith.constant 0 : index
      %29 = vector.load %arg5[%c0_25, %c0_26, %c0_27] : memref<2x256x128xf32, #tpu.memory_space<vmem>>, vector<1x256x128xf32>
      %30 = vector.shape_cast %29 : vector<1x256x128xf32> to vector<256x128xf32>
      %31 = vector.shape_cast %28 : vector<256x128xf32> to vector<1x256x128xf32>
      tpu.vector_store %arg5[%c0_25, %c0_26, %c0_27], %31 {strides = array<i32>} : memref<2x256x128xf32, #tpu.memory_space<vmem>>, vector<1x256x128xf32>,
      %c0_28 = arith.constant 0 : index
      %c0_29 = arith.constant 0 : index
      %32 = vector.load %arg7[%c0_28, %c0_29] : memref<256x128xf32, #tpu.memory_space<vmem>>, vector<256x128xf32>
      %c1_30 = arith.constant 1 : index
      %c0_31 = arith.constant 0 : index
      %c0_32 = arith.constant 0 : index
      %33 = vector.load %arg5[%c1_30, %c0_31, %c0_32] : memref<2x256x128xf32, #tpu.memory_space<vmem>>, vector<1x256x128xf32>
      %34 = vector.shape_cast %33 : vector<1x256x128xf32> to vector<256x128xf32>
      %35 = vector.shape_cast %32 : vector<256x128xf32> to vector<1x256x128xf32>
      tpu.vector_store %arg5[%c1_30, %c0_31, %c0_32], %35 {strides = array<i32>} : memref<2x256x128xf32, #tpu.memory_space<vmem>>, vector<1x256x128xf32>,
    } else {
    }
    return
  }
  func.func @transform_0(%arg0: i32, %arg1: i32, %arg2: i32) -> (i32, i32, i32) {
    %c0_i32 = arith.constant 0 : i32
    %c0_i32_0 = arith.constant 0 : i32
    return %c0_i32, %arg0, %arg2 : i32, i32, i32
  }
  func.func @transform_1(%arg0: i32, %arg1: i32, %arg2: i32) -> (i32, i32, i32) {
    %c0_i32 = arith.constant 0 : i32
    %c0_i32_0 = arith.constant 0 : i32
    return %c0_i32, %arg2, %arg1 : i32, i32, i32
  }
  func.func @transform_2(%arg0: i32, %arg1: i32, %arg2: i32) -> (i32, i32, i32) {
    %c0_i32 = arith.constant 0 : i32
    %c0_i32_0 = arith.constant 0 : i32
    return %c0_i32, %arg0, %arg1 : i32, i32, i32
  }
}

</mosaic_0001>

<llo_original>
// kernel: custom-call
$region0: #{custom-call}
  %s0 = inlined_call_operand.hbm [shape: c64[8,32], index: 0, kind: input, shape index: {}]
  %s1 = inlined_call_operand.vmem [shape: f32[8,32], index: 1, kind: output, shape index: {}]
  $region1: #{custom-call} parent=0
    #allocation0 [shape = 's32[1]{0}', space=sflag, size = 0x4, scoped, tag = 'scoped memory for custom-call']
    %2 = vsyncpa [#allocation0], 0
    %s3 = sshll.u32 %s1, 4
    %s4 = int_to_ptr.vmem [resolvable:$true] %s3
    %6 = dma.hbm_to_vmem [thread:$0]  %s0, 128, %s4, [#allocation0]
    %7 = dma.done [#allocation0], 128
    %8 = vsyncpa [#allocation0], 1

// kernel: custom-call.1
$region0: #{custom-call.1}
  %s0 = inlined_call_operand.hbm [shape: c64[8,32], index: 0, kind: input, shape index: {}]
  %s1 = inlined_call_operand.vmem [shape: f32[8,32], index: 1, kind: output, shape index: {}]
  %s2 = scalar_lea.hbm %s0, 128
  $region1: #{custom-call.1} parent=0
    #allocation0 [shape = 's32[1]{0}', space=sflag, size = 0x4, scoped, tag = 'scoped memory for custom-call.1']
    %3 = vsyncpa [#allocation0], 0
    %s4 = sshll.u32 %s1, 4
    %s5 = int_to_ptr.vmem [resolvable:$true] %s4
    %7 = dma.hbm_to_vmem [thread:$0]  %s2, 128, %s5, [#allocation0]
    %8 = dma.done [#allocation0], 128
    %9 = vsyncpa [#allocation0], 1

// kernel: custom-call.6
$region0: #{custom-call.6}
  %s0 = inlined_call_operand.vmem [shape: f32[32,32], index: 0, kind: input, shape index: {}]
  %s1 = inlined_call_operand.vmem [shape: f32[32,32], index: 1, kind: input, shape index: {}]
  %s2 = inlined_call_operand.vmem [shape: f32[32,32], index: 2, kind: output, shape index: {0}]
  %s3 = inlined_call_operand.vmem [shape: f32[32,32], index: 3, kind: output, shape index: {1}]
  %s4 = inlined_call_operand.vmem [shape: f32[32], index: 4, kind: output, shape index: {2}]
  %s5 = inlined_call_operand.vmem [shape: f32[32], index: 5, kind: output, shape index: {3}]
  %6 = xla_tuple %s2, %s3, %s4, %s5
  $region1: #{custom-call.6} parent=0
    #allocation0 [shape = 'u8[16384]{0}', space=vmem, size = 0x4000, scoped, tag = 'operand span for operand 0']
    #allocation1 [shape = 'u8[16384]{0}', space=vmem, size = 0x4000, scoped, tag = 'operand span for operand 1']
    #allocation2 [shape = 'u8[16384]{0}', space=vmem, size = 0x4000, scoped, tag = 'operand span for operand 2']
    #allocation3 [shape = 'u8[16384]{0}', space=vmem, size = 0x4000, scoped, tag = 'operand span for operand 3']
    #allocation4 [shape = 'u8[4096]{0}', space=vmem, size = 0x1000, scoped, tag = 'operand span for operand 4']
    #allocation5 [shape = 'u8[512]{0}', space=vmem, size = 0x400, scoped, tag = 'packed  for operand 4']
    #allocation6 [shape = 'u8[4096]{0}', space=vmem, size = 0x1000, scoped, tag = 'operand span for operand 5']
    #allocation7 [shape = 'u8[512]{0}', space=vmem, size = 0x400, scoped, tag = 'packed  for operand 5']
    #allocation8 [shape = 'f32[32,128]{1,0}', space=vmem, size = 0x4000, scoped, tag = 'scratch for real Householder reflectors']
    #allocation9 [shape = 'f32[32,128]{1,0}', space=vmem, size = 0x4000, scoped, tag = 'scratch for imaginary Householder reflectors']
    // Predicated region
    $region2: #{custom-call.6} parent=1 // pred_check
      _
    $region3: #{custom-call.6} parent=1 // pred_check_branch
      %8 = sbr.rel (0) target = $region5
    $region4: #{custom-call.6} parent=1 // pred_region
      // Predicated region
      $region6: #{custom-call.6} parent=4 // pred_check
        _
      $region7: #{custom-call.6} parent=4 // pred_check_branch
        %10 = sbr.rel (0) target = $region9
      $region8: #{custom-call.6} parent=4 // pred_region
        // Predicated region
        $region21: #{custom-call.6} parent=8 // pred_check
          _
        $region22: #{custom-call.6} parent=8 // pred_check_branch
          %31 = sbr.rel (0) target = $region24
        $region23: #{custom-call.6} parent=8 // pred_region
          loop: start=0, step=1, limit=1
          $region25: #{custom-call.6} parent=23 // loop_pre_header
            _
          $region26: #{custom-call.6} parent=23 // loop_header
            %s33 = sphi 0, %s37
            %p34 = scmp.ge.s32.totalorder %s33, 1
            %s38 = sphi %s0, %s0
            %s39 = sphi [#allocation0], [#allocation0]
          $region27: #{custom-call.6} parent=23 // loop_header_branch
            %36 = sbr.rel (%p34) target = $region31
          $region28: #{custom-call.6} parent=23 // loop_body
            %v40 = vld [vmem:[%s38] sm:$0xff]
            %41 = vst [vmem:[%s39] sm:$0xff] %v40
            %v42 = vld [vmem:[%s38 + $0x8] sm:$0xff]
            %43 = vst [vmem:[%s39 + $0x8] sm:$0xff] %v42
            %v44 = vld [vmem:[%s38 + $0x10] sm:$0xff]
            %45 = vst [vmem:[%s39 + $0x10] sm:$0xff] %v44
            %v46 = vld [vmem:[%s38 + $0x18] sm:$0xff]
            %47 = vst [vmem:[%s39 + $0x18] sm:$0xff] %v46
          $region29: #{custom-call.6} parent=23 // loop_footer
            %s37 = sadd.s32 1, %s33
          $region30: #{custom-call.6} parent=23 // loop_footer_branch
            %32 = sbr.rel target = $region26
          $region31: #{custom-call.6} parent=23 // loop_exit
            _
        $region24: #{custom-call.6} parent=8 // pred_fallthru
          _
        // Predicated region
        $region32: #{custom-call.6} parent=8 // pred_check
          _
        $region33: #{custom-call.6} parent=8 // pred_check_branch
          %49 = sbr.rel target = $region35
        $region34: #{custom-call.6} parent=8 // pred_region
          _
        $region35: #{custom-call.6} parent=8 // pred_fallthru
          _
      $region9: #{custom-call.6} parent=4 // pred_fallthru
        _
      // Predicated region
      $region10: #{custom-call.6} parent=4 // pred_check
        _
      $region11: #{custom-call.6} parent=4 // pred_check_branch
        %12 = sbr.rel target = $region13
      $region12: #{custom-call.6} parent=4 // pred_region
        loop: start=0, step=1, limit=1
        $region14: #{custom-call.6} parent=12 // loop_pre_header
          _
        $region15: #{custom-call.6} parent=12 // loop_header
          %s15 = sphi 0, %s19
          %p16 = scmp.ge.s32.totalorder %s15, 1
          %s20 = sphi %s0, %s0
          %s21 = sphi [#allocation0], [#allocation0]
        $region16: #{custom-call.6} parent=12 // loop_header_branch
          %18 = sbr.rel (%p16) target = $region20
        $region17: #{custom-call.6} parent=12 // loop_body
          %v22 = vld [vmem:[%s20] sm:$0xff]
          %23 = vst [vmem:[%s21] sm:$0xff] %v22
          %v24 = vld [vmem:[%s20 + $0x8] sm:$0xff]
          %25 = vst [vmem:[%s21 + $0x8] sm:$0xff] %v24
          %v26 = vld [vmem:[%s20 + $0x10] sm:$0xff]
          %27 = vst [vmem:[%s21 + $0x10] sm:$0xff] %v26
          %v28 = vld [vmem:[%s20 + $0x18] sm:$0xff]
          %29 = vst [vmem:[%s21 + $0x18] sm:$0xff] %v28
        $region18: #{custom-call.6} parent=12 // loop_footer
          %s19 = sadd.s32 1, %s15
        $region19: #{custom-call.6} parent=12 // loop_footer_branch
          %14 = sbr.rel target = $region15
        $region20: #{custom-call.6} parent=12 // loop_exit
          _
      $region13: #{custom-call.6} parent=4 // pred_fallthru
        _
    $region5: #{custom-call.6} parent=1 // pred_fallthru
      _
    %50 = vnop
    // Predicated region
    $region36: #{custom-call.6} parent=1 // pred_check
      _
    $region37: #{custom-call.6} parent=1 // pred_check_branch
      %52 = sbr.rel (0) target = $region39
    $region38: #{custom-call.6} parent=1 // pred_region
      // Predicated region
      $region40: #{custom-call.6} parent=38 // pred_check
        _
      $region41: #{custom-call.6} parent=38 // pred_check_branch
        %54 = sbr.rel (0) target = $region43
      $region42: #{custom-call.6} parent=38 // pred_region
        // Predicated region
        $region55: #{custom-call.6} parent=42 // pred_check
          _
        $region56: #{custom-call.6} parent=42 // pred_check_branch
          %75 = sbr.rel (0) target = $region58
        $region57: #{custom-call.6} parent=42 // pred_region
          loop: start=0, step=1, limit=1
          $region59: #{custom-call.6} parent=57 // loop_pre_header
            _
          $region60: #{custom-call.6} parent=57 // loop_header
            %s77 = sphi 0, %s81
            %p78 = scmp.ge.s32.totalorder %s77, 1
            %s82 = sphi %s1, %s1
            %s83 = sphi [#allocation1], [#allocation1]
          $region61: #{custom-call.6} parent=57 // loop_header_branch
            %80 = sbr.rel (%p78) target = $region65
          $region62: #{custom-call.6} parent=57 // loop_body
            %v84 = vld [vmem:[%s82] sm:$0xff]
            %85 = vst [vmem:[%s83] sm:$0xff] %v84
            %v86 = vld [vmem:[%s82 + $0x8] sm:$0xff]
            %87 = vst [vmem:[%s83 + $0x8] sm:$0xff] %v86
            %v88 = vld [vmem:[%s82 + $0x10] sm:$0xff]
            %89 = vst [vmem:[%s83 + $0x10] sm:$0xff] %v88
            %v90 = vld [vmem:[%s82 + $0x18] sm:$0xff]
            %91 = vst [vmem:[%s83 + $0x18] sm:$0xff] %v90
          $region63: #{custom-call.6} parent=57 // loop_footer
            %s81 = sadd.s32 1, %s77
          $region64: #{custom-call.6} parent=57 // loop_footer_branch
            %76 = sbr.rel target = $region60
          $region65: #{custom-call.6} parent=57 // loop_exit
            _
        $region58: #{custom-call.6} parent=42 // pred_fallthru
          _
        // Predicated region
        $region66: #{custom-call.6} parent=42 // pred_check
          _
        $region67: #{custom-call.6} parent=42 // pred_check_branch
          %93 = sbr.rel target = $region69
        $region68: #{custom-call.6} parent=42 // pred_region
          _
        $region69: #{custom-call.6} parent=42 // pred_fallthru
          _
      $region43: #{custom-call.6} parent=38 // pred_fallthru
        _
      // Predicated region
      $region44: #{custom-call.6} parent=38 // pred_check
        _
      $region45: #{custom-call.6} parent=38 // pred_check_branch
        %56 = sbr.rel target = $region47
      $region46: #{custom-call.6} parent=38 // pred_region
        loop: start=0, step=1, limit=1
        $region48: #{custom-call.6} parent=46 // loop_pre_header
          _
        $region49: #{custom-call.6} parent=46 // loop_header
          %s59 = sphi 0, %s63
          %p60 = scmp.ge.s32.totalorder %s59, 1
          %s64 = sphi %s1, %s1
          %s65 = sphi [#allocation1], [#allocation1]
        $region50: #{custom-call.6} parent=46 // loop_header_branch
          %62 = sbr.rel (%p60) target = $region54
        $region51: #{custom-call.6} parent=46 // loop_body
          %v66 = vld [vmem:[%s64] sm:$0xff]
          %67 = vst [vmem:[%s65] sm:$0xff] %v66
          %v68 = vld [vmem:[%s64 + $0x8] sm:$0xff]
          %69 = vst [vmem:[%s65 + $0x8] sm:$0xff] %v68
          %v70 = vld [vmem:[%s64 + $0x10] sm:$0xff]
          %71 = vst [vmem:[%s65 + $0x10] sm:$0xff] %v70
          %v72 = vld [vmem:[%s64 + $0x18] sm:$0xff]
          %73 = vst [vmem:[%s65 + $0x18] sm:$0xff] %v72
        $region52: #{custom-call.6} parent=46 // loop_footer
          %s63 = sadd.s32 1, %s59
        $region53: #{custom-call.6} parent=46 // loop_footer_branch
          %58 = sbr.rel target = $region49
        $region54: #{custom-call.6} parent=46 // loop_exit
          _
      $region47: #{custom-call.6} parent=38 // pred_fallthru
        _
    $region39: #{custom-call.6} parent=1 // pred_fallthru
      _
    %94 = vnop
    %v95 = vld [vmem:[#allocation0] sm:$0xff]
    %96 = vst [vmem:[#allocation2] sm:$0xff] %v95
    %s97 = scalar_lea.vmem [#allocation2], 8
    %s98 = scalar_lea.vmem [#allocation0], 8
    %v99 = vld [vmem:[%s98] sm:$0xff]
    %100 = vst [vmem:[%s97] sm:$0xff] %v99
    %s101 = scalar_lea.vmem [#allocation2], 16
    %s102 = scalar_lea.vmem [#allocation0], 16
    %v103 = vld [vmem:[%s102] sm:$0xff]
    %104 = vst [vmem:[%s101] sm:$0xff] %v103
    %s105 = scalar_lea.vmem [#allocation2], 24
    %s106 = scalar_lea.vmem [#allocation0], 24
    %v107 = vld [vmem:[%s106] sm:$0xff]
    %108 = vst [vmem:[%s105] sm:$0xff] %v107
    %v109 = vld [vmem:[#allocation1] sm:$0xff]
    %110 = vst [vmem:[#allocation3] sm:$0xff] %v109
    %s111 = scalar_lea.vmem [#allocation3], 8
    %s112 = scalar_lea.vmem [#allocation1], 8
    %v113 = vld [vmem:[%s112] sm:$0xff]
    %114 = vst [vmem:[%s111] sm:$0xff] %v113
    %s115 = scalar_lea.vmem [#allocation3], 16
    %s116 = scalar_lea.vmem [#allocation1], 16
    %v117 = vld [vmem:[%s116] sm:$0xff]
    %118 = vst [vmem:[%s115] sm:$0xff] %v117
    %s119 = scalar_lea.vmem [#allocation3], 24
    %s120 = scalar_lea.vmem [#allocation1], 24
    %v121 = vld [vmem:[%s120] sm:$0xff]
    %122 = vst [vmem:[%s119] sm:$0xff] %v121
    %123 = vst [vmem:[#allocation4] sm:$0x1] 0.0
    %124 = vst [vmem:[#allocation6] sm:$0x1] 0.0
    loop: start=0, step=1, limit=32
    $region70: #{custom-call.6} parent=1 // loop_pre_header
      _
    $region71: #{custom-call.6} parent=1 // loop_header
      %s126 = sphi 0, %s130
      %p127 = scmp.ge.s32.totalorder %s126, 32
    $region72: #{custom-call.6} parent=1 // loop_header_branch
      %129 = sbr.rel (%p127) target = $region76
    $region73: #{custom-call.6} parent=1 // loop_body
      %v131 = vld [vmem:[#allocation2] sm:$0xff]
      %v132 = vld [vmem:[#allocation3] sm:$0xff]
      %v133 = vlaneseq
      %v134 = vshrl.u32 %v133, 7
      %v136 = vstv %s126
      %vm137 = vcmp.gt.s32.totalorder %v134, %v136
      %v138 = vsel %vm137, %v131, 0.0
      %v139 = vsel %vm137, %v132, 0.0
      %v140 = vxor.u32 %v139, 2147483648
      %141 = xla_tuple %v138, %v139
      %142 = xla_tuple %v138, %v140
      %v143 = vmul.f32 %v138, %v138
      %v144 = vmul.f32 %v139, %v140
      %v145 = vsub.f32 %v143, %v144
      %v146 = vmul.f32 %v138, %v140
      %v147 = vmul.f32 %v139, %v138
      %v148 = vadd.f32 %v146, %v147
      %149 = xla_tuple %v145, %v148
      %s150 = scalar_lea.vmem [#allocation2], 8
      %s151 = scalar_lea.vmem [#allocation3], 8
      %v152 = vld [vmem:[%s150] sm:$0xff]
      %v153 = vld [vmem:[%s151] sm:$0xff]
      %v154 = vlaneseq
      %v155 = vshrl.u32 %v154, 7
      %v156 = vadd.s32 %v155, 8
      %v157 = vstv %s126
      %vm158 = vcmp.gt.s32.totalorder %v156, %v157
      %v159 = vsel %vm158, %v152, 0.0
      %v160 = vsel %vm158, %v153, 0.0
      %v161 = vxor.u32 %v160, 2147483648
      %162 = xla_tuple %v159, %v160
      %163 = xla_tuple %v159, %v161
      %v164 = vmul.f32 %v159, %v159
      %v165 = vmul.f32 %v160, %v161
      %v166 = vsub.f32 %v164, %v165
      %v167 = vmul.f32 %v159, %v161
      %v168 = vmul.f32 %v160, %v159
      %v169 = vadd.f32 %v167, %v168
      %170 = xla_tuple %v166, %v169
      %v171 = vadd.f32 %v145, %v166
      %s172 = scalar_lea.vmem [#allocation2], 16
      %s173 = scalar_lea.vmem [#allocation3], 16
      %v174 = vld [vmem:[%s172] sm:$0xff]
      %v175 = vld [vmem:[%s173] sm:$0xff]
      %v176 = vlaneseq
      %v177 = vshrl.u32 %v176, 7
      %v178 = vadd.s32 %v177, 16
      %v179 = vstv %s126
      %vm180 = vcmp.gt.s32.totalorder %v178, %v179
      %v181 = vsel %vm180, %v174, 0.0
      %v182 = vsel %vm180, %v175, 0.0
      %v183 = vxor.u32 %v182, 2147483648
      %184 = xla_tuple %v181, %v182
      %185 = xla_tuple %v181, %v183
      %v186 = vmul.f32 %v181, %v181
      %v187 = vmul.f32 %v182, %v183
      %v188 = vsub.f32 %v186, %v187
      %v189 = vmul.f32 %v181, %v183
      %v190 = vmul.f32 %v182, %v181
      %v191 = vadd.f32 %v189, %v190
      %192 = xla_tuple %v188, %v191
      %v193 = vadd.f32 %v171, %v188
      %s194 = scalar_lea.vmem [#allocation2], 24
      %s195 = scalar_lea.vmem [#allocation3], 24
      %v196 = vld [vmem:[%s194] sm:$0xff]
      %v197 = vld [vmem:[%s195] sm:$0xff]
      %v198 = vlaneseq
      %v199 = vshrl.u32 %v198, 7
      %v200 = vadd.s32 %v199, 24
      %v201 = vstv %s126
      %vm202 = vcmp.gt.s32.totalorder %v200, %v201
      %vm203 = vcmp.lt.s32.totalorder %v200, 32
      %vm204 = vmand %vm202, %vm203
      %v205 = vsel %vm204, %v196, 0.0
      %v206 = vsel %vm204, %v197, 0.0
      %v207 = vxor.u32 %v206, 2147483648
      %208 = xla_tuple %v205, %v206
      %209 = xla_tuple %v205, %v207
      %v210 = vmul.f32 %v205, %v205
      %v211 = vmul.f32 %v206, %v207
      %v212 = vsub.f32 %v210, %v211
      %v213 = vmul.f32 %v205, %v207
      %v214 = vmul.f32 %v206, %v205
      %v215 = vadd.f32 %v213, %v214
      %216 = xla_tuple %v212, %v215
      %v217 = vadd.f32 %v193, %v212
      %v218 = vrot.slane %v217, 4
      %v219 = vadd.f32 %v217, %v218
      %v220 = vrot.slane %v219, 2
      %v221 = vadd.f32 %v219, %v220
      %v222 = vrot.slane %v221, 1
      %v223 = vadd.f32 %v221, %v222
      %v224 = vrsqrt.pop %v223
      %v225 = vmul.f32 %v223, %v224
      %vm226 = vcmp.eq.f32.partialorder %v223, inf
      %v227 = vsel %vm226, %v223, %v225
      %vm228 = vcmp.eq.f32.partialorder %v223, 0.0
      %v229 = vand.u32 %v223, 2147483648
      %v230 = vsel %vm228, %v229, %v227
      %vm231 = vcmp.eq.f32.partialorder %v223, 0.0
      %s232 = sshrl.u32 %s126, 3
      %s233 = sand.u32 %s126, 7
      %s234 = smul.addr %s232, 8
      %s235 = sadd.s32 %s233, %s234
      %s236 = scalar_lea.vmem [#allocation2], %s235
      %s237 = scalar_lea.vmem [#allocation3], %s235
      %v238 = vld [vmem:[%s236] ss:$0 sm:$0xff]
      %v239 = vld [vmem:[%s237] ss:$0 sm:$0xff]
      %v240 = vand.u32 2147483647, %v238
      %v241 = vand.u32 2147483647, %v239
      %v242 = vmax.f32 %v240, %v241
      %v243 = vand.u32 2147483647, %v230
      %v244 = vmax.f32 %v242, %v243
      %v245 = vrcp.pop %v244
      %v246 = vmul.f32 %v240, %v245
      %v247 = vmul.f32 %v246, %v246
      %v248 = vrcp.pop %v244
      %v249 = vmul.f32 %v241, %v248
      %v250 = vmul.f32 %v249, %v249
      %v251 = vadd.f32 %v247, %v250
      %v252 = vrcp.pop %v244
      %v253 = vmul.f32 %v243, %v252
      %v254 = vmul.f32 %v253, %v253
      %v255 = vadd.f32 %v251, %v254
      %vm256 = vcmp.eq.f32.partialorder %v244, 0.0
      %v257 = vrsqrt.pop %v255
      %v258 = vmul.f32 %v255, %v257
      %vm259 = vcmp.eq.f32.partialorder %v255, inf
      %v260 = vsel %vm259, %v255, %v258
      %vm261 = vcmp.eq.f32.partialorder %v255, 0.0
      %v262 = vand.u32 %v255, 2147483648
      %v263 = vsel %vm261, %v262, %v260
      %v264 = vmul.f32 %v244, %v263
      %v265 = vsel %vm256, 0.0, %v264
      %vm266 = vcmp.lt.f32.partialorder %v238, 0.0
      %v267 = vxor.u32 %v265, 2147483648
      %v268 = vsel %vm266, %v265, %v267
      %v269 = vsub.f32 %v268, %v238
      %v270 = vrcp.pop %v268
      %v271 = vmul.f32 %v269, %v270
      %v272 = vxor.u32 %v239, 2147483648
      %v273 = vrcp.pop %v268
      %v274 = vmul.f32 %v272, %v273
      %vm275 = vcmp.eq.f32.partialorder %v239, 0.0
      %vm276 = vmand %vm231, %vm275
      %v277 = vsel %vm276, %v238, %v268
      %v278 = vsel %vm276, 0.0, %v271
      %v279 = vsel %vm276, 0.0, %v274
      %v280 = vsub.f32 %v238, %v277
      %s281 = smov [#allocation2]
      %s282 = smov [#allocation3]
      %v283 = vlaneseq
      %v284 = vshrl.u32 %v283, 7
      %v285 = vmov %v284
      %v286 = vld [vmem:[%s281] sm:$0xff]
      %v287 = vld [vmem:[%s282] sm:$0xff]
      %v289 = vstv %s126
      %vm290 = vcmp.gt.s32.totalorder %v285, %v289
      %v291 = vsel %vm290, %v286, 0.0
      %v292 = vsel %vm290, %v287, 0.0
      %293 = xla_tuple %v291, %v292
      %294 = xla_tuple %v280, %v239
      %v295 = vand.u32 2147483647, %v280
      %v296 = vand.u32 2147483647, %v239
      %vm297 = vcmp.lt.f32.partialorder %v295, %v296
      %v298 = vsel %vm297, %v280, %v239
      %v299 = vsel %vm297, %v239, %v280
      %v300 = vrcp.pop %v299
      %v301 = vmul.f32 %v298, %v300
      %v302 = vmul.f32 %v301, %v280
      %v303 = vadd.f32 %v239, %v302
      %v304 = vmul.f32 %v301, %v239
      %v305 = vadd.f32 %v280, %v304
      %v306 = vmul.f32 %v301, %v291
      %v307 = vadd.f32 %v306, %v292
      %v308 = vmul.f32 %v301, %v292
      %v309 = vadd.f32 %v308, %v291
      %v310 = vsel %vm297, %v307, %v309
      %v311 = vsel %vm297, %v303, %v305
      %v312 = vrcp.pop %v311
      %v313 = vmul.f32 %v310, %v312
      %v314 = vmul.f32 %v301, %v292
      %v315 = vsub.f32 %v314, %v291
      %v316 = vmul.f32 %v301, %v291
      %v317 = vsub.f32 %v292, %v316
      %v318 = vsel %vm297, %v315, %v317
      %v319 = vmul.f32 %v318, %v312
      %vm320 = vcmp.eq.f32.partialorder %v280, 0.0
      %vm321 = vcmp.eq.f32.partialorder %v239, 0.0
      %vm322 = vmand %vm320, %vm321
      %v323 = vand.u32 %v291, 2147483648
      %v324 = vor.u32 inf, %v323
      %v325 = vand.u32 %v292, 2147483648
      %v326 = vor.u32 inf, %v325
      %vm327 = vcmp.eq.f32.partialorder %v291, 0.0
      %v328 = vsel %vm327, nan, %v324
      %vm329 = vcmp.eq.f32.partialorder %v292, 0.0
      %v330 = vsel %vm329, nan, %v326
      %v331 = vsel %vm322, %v328, %v313
      %v332 = vsel %vm322, %v330, %v319
      %333 = xla_tuple %v331, %v332
      %v334 = vsel %vm276, 0.0, %v331
      %v335 = vsel %vm276, 0.0, %v332
      %v336 = vstv %s126
      %v337 = vlaneseq
      %v338 = vand.u32 %v337, 127
      %vm339 = vcmp.eq.s32.totalorder %v338, %v336
      %v340 = vsel %vm339, %v334, 0.0
      %v341 = vsel %vm339, %v335, 0.0
      %342 = vadd.xlane.f32.xlu0 %v340
      %v343 = vpop.xlane.xlu0 %342
      %344 = vadd.xlane.f32.xlu0 %v341
      %v345 = vpop.xlane.xlu0 %344
      %346 = vst [vmem:[#allocation8] sm:$0xff] %v343
      %347 = vst [vmem:[#allocation9] sm:$0xff] %v345
      %s348 = scalar_lea.vmem %s281, 8
      %s349 = scalar_lea.vmem %s282, 8
      %v350 = vld [vmem:[%s348] sm:$0xff]
      %v351 = vld [vmem:[%s349] sm:$0xff]
      %v352 = vadd.s32 %v285, 8
      %v353 = vstv %s126
      %vm354 = vcmp.gt.s32.totalorder %v352, %v353
      %v355 = vsel %vm354, %v350, 0.0
      %v356 = vsel %vm354, %v351, 0.0
      %357 = xla_tuple %v355, %v356
      %358 = xla_tuple %v280, %v239
      %v359 = vand.u32 2147483647, %v280
      %v360 = vand.u32 2147483647, %v239
      %vm361 = vcmp.lt.f32.partialorder %v359, %v360
      %v362 = vsel %vm361, %v280, %v239
      %v363 = vsel %vm361, %v239, %v280
      %v364 = vrcp.pop %v363
      %v365 = vmul.f32 %v362, %v364
      %v366 = vmul.f32 %v365, %v280
      %v367 = vadd.f32 %v239, %v366
      %v368 = vmul.f32 %v365, %v239
      %v369 = vadd.f32 %v280, %v368
      %v370 = vmul.f32 %v365, %v355
      %v371 = vadd.f32 %v370, %v356
      %v372 = vmul.f32 %v365, %v356
      %v373 = vadd.f32 %v372, %v355
      %v374 = vsel %vm361, %v371, %v373
      %v375 = vsel %vm361, %v367, %v369
      %v376 = vrcp.pop %v375
      %v377 = vmul.f32 %v374, %v376
      %v378 = vmul.f32 %v365, %v356
      %v379 = vsub.f32 %v378, %v355
      %v380 = vmul.f32 %v365, %v355
      %v381 = vsub.f32 %v356, %v380
      %v382 = vsel %vm361, %v379, %v381
      %v383 = vmul.f32 %v382, %v376
      %vm384 = vcmp.eq.f32.partialorder %v280, 0.0
      %vm385 = vcmp.eq.f32.partialorder %v239, 0.0
      %vm386 = vmand %vm384, %vm385
      %v387 = vand.u32 %v355, 2147483648
      %v388 = vor.u32 inf, %v387
      %v389 = vand.u32 %v356, 2147483648
      %v390 = vor.u32 inf, %v389
      %vm391 = vcmp.eq.f32.partialorder %v355, 0.0
      %v392 = vsel %vm391, nan, %v388
      %vm393 = vcmp.eq.f32.partialorder %v356, 0.0
      %v394 = vsel %vm393, nan, %v390
      %v395 = vsel %vm386, %v392, %v377
      %v396 = vsel %vm386, %v394, %v383
      %397 = xla_tuple %v395, %v396
      %v398 = vsel %vm276, 0.0, %v395
      %v399 = vsel %vm276, 0.0, %v396
      %v400 = vstv %s126
      %v401 = vlaneseq
      %v402 = vand.u32 %v401, 127
      %vm403 = vcmp.eq.s32.totalorder %v402, %v400
      %v404 = vsel %vm403, %v398, 0.0
      %v405 = vsel %vm403, %v399, 0.0
      %406 = vadd.xlane.f32.xlu0 %v404
      %v407 = vpop.xlane.xlu0 %406
      %408 = vadd.xlane.f32.xlu0 %v405
      %v409 = vpop.xlane.xlu0 %408
      %s410 = scalar_lea.vmem [#allocation8], 8
      %s411 = scalar_lea.vmem [#allocation9], 8
      %412 = vst [vmem:[%s410] sm:$0xff] %v407
      %413 = vst [vmem:[%s411] sm:$0xff] %v409
      %s414 = scalar_lea.vmem %s281, 16
      %s415 = scalar_lea.vmem %s282, 16
      %v416 = vld [vmem:[%s414] sm:$0xff]
      %v417 = vld [vmem:[%s415] sm:$0xff]
      %v418 = vadd.s32 %v285, 16
      %v419 = vstv %s126
      %vm420 = vcmp.gt.s32.totalorder %v418, %v419
      %v421 = vsel %vm420, %v416, 0.0
      %v422 = vsel %vm420, %v417, 0.0
      %423 = xla_tuple %v421, %v422
      %424 = xla_tuple %v280, %v239
      %v425 = vand.u32 2147483647, %v280
      %v426 = vand.u32 2147483647, %v239
      %vm427 = vcmp.lt.f32.partialorder %v425, %v426
      %v428 = vsel %vm427, %v280, %v239
      %v429 = vsel %vm427, %v239, %v280
      %v430 = vrcp.pop %v429
      %v431 = vmul.f32 %v428, %v430
      %v432 = vmul.f32 %v431, %v280
      %v433 = vadd.f32 %v239, %v432
      %v434 = vmul.f32 %v431, %v239
      %v435 = vadd.f32 %v280, %v434
      %v436 = vmul.f32 %v431, %v421
      %v437 = vadd.f32 %v436, %v422
      %v438 = vmul.f32 %v431, %v422
      %v439 = vadd.f32 %v438, %v421
      %v440 = vsel %vm427, %v437, %v439
      %v441 = vsel %vm427, %v433, %v435
      %v442 = vrcp.pop %v441
      %v443 = vmul.f32 %v440, %v442
      %v444 = vmul.f32 %v431, %v422
      %v445 = vsub.f32 %v444, %v421
      %v446 = vmul.f32 %v431, %v421
      %v447 = vsub.f32 %v422, %v446
      %v448 = vsel %vm427, %v445, %v447
      %v449 = vmul.f32 %v448, %v442
      %vm450 = vcmp.eq.f32.partialorder %v280, 0.0
      %vm451 = vcmp.eq.f32.partialorder %v239, 0.0
      %vm452 = vmand %vm450, %vm451
      %v453 = vand.u32 %v421, 2147483648
      %v454 = vor.u32 inf, %v453
      %v455 = vand.u32 %v422, 2147483648
      %v456 = vor.u32 inf, %v455
      %vm457 = vcmp.eq.f32.partialorder %v421, 0.0
      %v458 = vsel %vm457, nan, %v454
      %vm459 = vcmp.eq.f32.partialorder %v422, 0.0
      %v460 = vsel %vm459, nan, %v456
      %v461 = vsel %vm452, %v458, %v443
      %v462 = vsel %vm452, %v460, %v449
      %463 = xla_tuple %v461, %v462
      %v464 = vsel %vm276, 0.0, %v461
      %v465 = vsel %vm276, 0.0, %v462
      %v466 = vstv %s126
      %v467 = vlaneseq
      %v468 = vand.u32 %v467, 127
      %vm469 = vcmp.eq.s32.totalorder %v468, %v466
      %v470 = vsel %vm469, %v464, 0.0
      %v471 = vsel %vm469, %v465, 0.0
      %472 = vadd.xlane.f32.xlu0 %v470
      %v473 = vpop.xlane.xlu0 %472
      %474 = vadd.xlane.f32.xlu0 %v471
      %v475 = vpop.xlane.xlu0 %474
      %s476 = scalar_lea.vmem [#allocation8], 16
      %s477 = scalar_lea.vmem [#allocation9], 16
      %478 = vst [vmem:[%s476] sm:$0xff] %v473
      %479 = vst [vmem:[%s477] sm:$0xff] %v475
      %s480 = scalar_lea.vmem %s281, 24
      %s481 = scalar_lea.vmem %s282, 24
      %v482 = vld [vmem:[%s480] sm:$0xff]
      %v483 = vld [vmem:[%s481] sm:$0xff]
      %v484 = vadd.s32 %v285, 24
      %v485 = vstv %s126
      %vm486 = vcmp.gt.s32.totalorder %v484, %v485
      %vm487 = vcmp.lt.s32.totalorder %v484, 32
      %vm488 = vmand %vm486, %vm487
      %v489 = vsel %vm488, %v482, 0.0
      %v490 = vsel %vm488, %v483, 0.0
      %491 = xla_tuple %v489, %v490
      %492 = xla_tuple %v280, %v239
      %v493 = vand.u32 2147483647, %v280
      %v494 = vand.u32 2147483647, %v239
      %vm495 = vcmp.lt.f32.partialorder %v493, %v494
      %v496 = vsel %vm495, %v280, %v239
      %v497 = vsel %vm495, %v239, %v280
      %v498 = vrcp.pop %v497
      %v499 = vmul.f32 %v496, %v498
      %v500 = vmul.f32 %v499, %v280
      %v501 = vadd.f32 %v239, %v500
      %v502 = vmul.f32 %v499, %v239
      %v503 = vadd.f32 %v280, %v502
      %v504 = vmul.f32 %v499, %v489
      %v505 = vadd.f32 %v504, %v490
      %v506 = vmul.f32 %v499, %v490
      %v507 = vadd.f32 %v506, %v489
      %v508 = vsel %vm495, %v505, %v507
      %v509 = vsel %vm495, %v501, %v503
      %v510 = vrcp.pop %v509
      %v511 = vmul.f32 %v508, %v510
      %v512 = vmul.f32 %v499, %v490
      %v513 = vsub.f32 %v512, %v489
      %v514 = vmul.f32 %v499, %v489
      %v515 = vsub.f32 %v490, %v514
      %v516 = vsel %vm495, %v513, %v515
      %v517 = vmul.f32 %v516, %v510
      %vm518 = vcmp.eq.f32.partialorder %v280, 0.0
      %vm519 = vcmp.eq.f32.partialorder %v239, 0.0
      %vm520 = vmand %vm518, %vm519
      %v521 = vand.u32 %v489, 2147483648
      %v522 = vor.u32 inf, %v521
      %v523 = vand.u32 %v490, 2147483648
      %v524 = vor.u32 inf, %v523
      %vm525 = vcmp.eq.f32.partialorder %v489, 0.0
      %v526 = vsel %vm525, nan, %v522
      %vm527 = vcmp.eq.f32.partialorder %v490, 0.0
      %v528 = vsel %vm527, nan, %v524
      %v529 = vsel %vm520, %v526, %v511
      %v530 = vsel %vm520, %v528, %v517
      %531 = xla_tuple %v529, %v530
      %v532 = vsel %vm276, 0.0, %v529
      %v533 = vsel %vm276, 0.0, %v530
      %v534 = vstv %s126
      %v535 = vlaneseq
      %v536 = vand.u32 %v535, 127
      %vm537 = vcmp.eq.s32.totalorder %v536, %v534
      %v538 = vsel %vm537, %v532, 0.0
      %v539 = vsel %vm537, %v533, 0.0
      %540 = vadd.xlane.f32.xlu0 %v538
      %v541 = vpop.xlane.xlu0 %540
      %542 = vadd.xlane.f32.xlu0 %v539
      %v543 = vpop.xlane.xlu0 %542
      %s544 = scalar_lea.vmem [#allocation8], 24
      %s545 = scalar_lea.vmem [#allocation9], 24
      %546 = vst [vmem:[%s544] sm:$0xff] %v541
      %547 = vst [vmem:[%s545] sm:$0xff] %v543
      %s548 = scalar_lea.vmem [#allocation8], %s126
      %s549 = scalar_lea.vmem [#allocation9], %s126
      %550 = vst [vmem:[%s548] sm:$0x1] 1.0
      %551 = vst [vmem:[%s549] sm:$0x1] 0.0
      %v552 = vstv %s126
      %v553 = vlaneseq
      %v554 = vand.u32 %v553, 127
      %vm555 = vcmp.eq.s32.totalorder %v554, %v552
      %v556 = vsel %vm555, %v278, 0.0
      %v557 = vsel %vm555, %v279, 0.0
      %558 = vadd.xlane.f32.xlu0 %v556
      %v559 = vpop.xlane.xlu0 %558
      %560 = vadd.xlane.f32.xlu0 %v557
      %v561 = vpop.xlane.xlu0 %560
      %v562 = vstv %s126
      %v563 = vlaneseq
      %v564 = vand.u32 %v563, 127
      %vm565 = vcmp.eq.s32.totalorder %v564, %v562
      %v566 = vld [vmem:[#allocation4] ss:$0 sm:$0xff]
      %v567 = vld [vmem:[#allocation6] ss:$0 sm:$0xff]
      %v568 = vsel %vm565, %v559, %v566
      %v569 = vsel %vm565, %v561, %v567
      %570 = vst [vmem:[#allocation4] sm:$0x1] %v568
      %571 = vst [vmem:[#allocation6] sm:$0x1] %v569
      %s572 = smov [#allocation2]
      %s573 = smov [#allocation3]
      %s574 = smov [#allocation8]
      %s575 = smov [#allocation9]
      %v576 = vlaneseq
      %v577 = vshrl.u32 %v576, 7
      %v578 = vmov %v577
      %v580 = vld [vmem:[%s574] sm:$0xff]
      %v581 = vld [vmem:[%s575] sm:$0xff]
      %v582 = vld [vmem:[%s572] sm:$0xff]
      %v583 = vld [vmem:[%s573] sm:$0xff]
      %v584 = vxor.u32 %v581, 2147483648
      %585 = xla_tuple %v580, %v584
      %586 = xla_tuple %v582, %v583
      %v587 = vmul.f32 %v580, %v582
      %v588 = vmul.f32 %v584, %v583
      %v589 = vsub.f32 %v587, %v588
      %v590 = vmul.f32 %v580, %v583
      %v591 = vmul.f32 %v584, %v582
      %v592 = vadd.f32 %v590, %v591
      %593 = xla_tuple %v589, %v592
      %v594 = vadd.s32 %v578, 8
      %s595 = scalar_lea.vmem %s574, 8
      %s596 = scalar_lea.vmem %s575, 8
      %v597 = vld [vmem:[%s595] sm:$0xff]
      %v598 = vld [vmem:[%s596] sm:$0xff]
      %s599 = scalar_lea.vmem %s572, 8
      %s600 = scalar_lea.vmem %s573, 8
      %v601 = vld [vmem:[%s599] sm:$0xff]
      %v602 = vld [vmem:[%s600] sm:$0xff]
      %v603 = vxor.u32 %v598, 2147483648
      %604 = xla_tuple %v597, %v603
      %605 = xla_tuple %v601, %v602
      %v606 = vmul.f32 %v597, %v601
      %v607 = vmul.f32 %v603, %v602
      %v608 = vsub.f32 %v606, %v607
      %v609 = vmul.f32 %v597, %v602
      %v610 = vmul.f32 %v603, %v601
      %v611 = vadd.f32 %v609, %v610
      %612 = xla_tuple %v608, %v611
      %v613 = vadd.f32 %v589, %v608
      %v614 = vadd.f32 %v592, %v611
      %v615 = vadd.s32 %v578, 16
      %s616 = scalar_lea.vmem %s574, 16
      %s617 = scalar_lea.vmem %s575, 16
      %v618 = vld [vmem:[%s616] sm:$0xff]
      %v619 = vld [vmem:[%s617] sm:$0xff]
      %s620 = scalar_lea.vmem %s572, 16
      %s621 = scalar_lea.vmem %s573, 16
      %v622 = vld [vmem:[%s620] sm:$0xff]
      %v623 = vld [vmem:[%s621] sm:$0xff]
      %v624 = vxor.u32 %v619, 2147483648
      %625 = xla_tuple %v618, %v624
      %626 = xla_tuple %v622, %v623
      %v627 = vmul.f32 %v618, %v622
      %v628 = vmul.f32 %v624, %v623
      %v629 = vsub.f32 %v627, %v628
      %v630 = vmul.f32 %v618, %v623
      %v631 = vmul.f32 %v624, %v622
      %v632 = vadd.f32 %v630, %v631
      %633 = xla_tuple %v629, %v632
      %v634 = vadd.f32 %v613, %v629
      %v635 = vadd.f32 %v614, %v632
      %v636 = vadd.s32 %v578, 24
      %s637 = scalar_lea.vmem %s574, 24
      %s638 = scalar_lea.vmem %s575, 24
      %v639 = vld [vmem:[%s637] sm:$0xff]
      %v640 = vld [vmem:[%s638] sm:$0xff]
      %s641 = scalar_lea.vmem %s572, 24
      %s642 = scalar_lea.vmem %s573, 24
      %v643 = vld [vmem:[%s641] sm:$0xff]
      %v644 = vld [vmem:[%s642] sm:$0xff]
      %v645 = vxor.u32 %v640, 2147483648
      %646 = xla_tuple %v639, %v645
      %647 = xla_tuple %v643, %v644
      %v648 = vmul.f32 %v639, %v643
      %v649 = vmul.f32 %v645, %v644
      %v650 = vsub.f32 %v648, %v649
      %v651 = vmul.f32 %v639, %v644
      %v652 = vmul.f32 %v645, %v643
      %v653 = vadd.f32 %v651, %v652
      %654 = xla_tuple %v650, %v653
      %vm655 = vcmp.lt.s32.totalorder %v636, 32
      %v656 = vsel %vm655, %v650, 0.0
      %v657 = vsel %vm655, %v653, 0.0
      %v658 = vadd.f32 %v634, %v656
      %v659 = vadd.f32 %v635, %v657
      %v660 = vrot.slane %v658, 4
      %v661 = vadd.f32 %v658, %v660
      %v662 = vrot.slane %v661, 2
      %v663 = vadd.f32 %v661, %v662
      %v664 = vrot.slane %v663, 1
      %v665 = vadd.f32 %v663, %v664
      %v666 = vrot.slane %v659, 4
      %v667 = vadd.f32 %v659, %v666
      %v668 = vrot.slane %v667, 2
      %v669 = vadd.f32 %v667, %v668
      %v670 = vrot.slane %v669, 1
      %v671 = vadd.f32 %v669, %v670
      %s672 = smov %s572
      %s673 = smov %s573
      %s674 = smov %s574
      %s675 = smov %s575
      %v676 = vlaneseq
      %v677 = vshrl.u32 %v676, 7
      %v678 = vmov %v677
      %v679 = vxor.u32 %v561, 2147483648
      %680 = xla_tuple %v665, %v671
      %681 = xla_tuple %v559, %v679
      %v682 = vmul.f32 %v665, %v559
      %v683 = vmul.f32 %v671, %v679
      %v684 = vsub.f32 %v682, %v683
      %v685 = vmul.f32 %v665, %v679
      %v686 = vmul.f32 %v671, %v559
      %v687 = vadd.f32 %v685, %v686
      %688 = xla_tuple %v684, %v687
      %v690 = vlaneseq
      %v691 = vand.u32 %v690, 127
      %v692 = vld [vmem:[%s674] sm:$0xff]
      %v693 = vld [vmem:[%s675] sm:$0xff]
      %694 = xla_tuple %v692, %v693
      %695 = xla_tuple %v684, %v687
      %v696 = vmul.f32 %v692, %v684
      %v697 = vmul.f32 %v693, %v687
      %v698 = vsub.f32 %v696, %v697
      %v699 = vmul.f32 %v692, %v687
      %v700 = vmul.f32 %v693, %v684
      %v701 = vadd.f32 %v699, %v700
      %702 = xla_tuple %v698, %v701
      %v703 = vld [vmem:[%s672] sm:$0xff]
      %v704 = vld [vmem:[%s673] sm:$0xff]
      %v705 = vstv %s126
      %vm706 = vcmp.gt.s32.totalorder %v691, %v705
      %v707 = vsub.f32 %v703, %v698
      %v708 = vsub.f32 %v704, %v701
      %v709 = vsel %vm706, %v707, %v703
      %v710 = vsel %vm706, %v708, %v704
      %v711 = vstv %s126
      %v712 = vlaneseq
      %v713 = vand.u32 %v712, 127
      %vm714 = vcmp.eq.s32.totalorder %v713, %v711
      %v715 = vstv %s126
      %vm716 = vcmp.ge.s32.totalorder %v678, %v715
      %vm717 = vmand %vm714, %vm716
      %v718 = vsel %vm717, %v692, %v709
      %v719 = vsel %vm717, %v693, %v710
      %720 = vst [vmem:[%s672] sm:$0xff] %v718
      %721 = vst [vmem:[%s673] sm:$0xff] %v719
      %v722 = vadd.s32 %v678, 8
      %v723 = vlaneseq
      %v724 = vand.u32 %v723, 127
      %s725 = scalar_lea.vmem %s674, 8
      %s726 = scalar_lea.vmem %s675, 8
      %v727 = vld [vmem:[%s725] sm:$0xff]
      %v728 = vld [vmem:[%s726] sm:$0xff]
      %729 = xla_tuple %v727, %v728
      %730 = xla_tuple %v684, %v687
      %v731 = vmul.f32 %v727, %v684
      %v732 = vmul.f32 %v728, %v687
      %v733 = vsub.f32 %v731, %v732
      %v734 = vmul.f32 %v727, %v687
      %v735 = vmul.f32 %v728, %v684
      %v736 = vadd.f32 %v734, %v735
      %737 = xla_tuple %v733, %v736
      %s738 = scalar_lea.vmem %s672, 8
      %s739 = scalar_lea.vmem %s673, 8
      %v740 = vld [vmem:[%s738] sm:$0xff]
      %v741 = vld [vmem:[%s739] sm:$0xff]
      %v742 = vstv %s126
      %vm743 = vcmp.gt.s32.totalorder %v724, %v742
      %v744 = vsub.f32 %v740, %v733
      %v745 = vsub.f32 %v741, %v736
      %v746 = vsel %vm743, %v744, %v740
      %v747 = vsel %vm743, %v745, %v741
      %v748 = vstv %s126
      %v749 = vlaneseq
      %v750 = vand.u32 %v749, 127
      %vm751 = vcmp.eq.s32.totalorder %v750, %v748
      %v752 = vstv %s126
      %vm753 = vcmp.ge.s32.totalorder %v722, %v752
      %vm754 = vmand %vm751, %vm753
      %v755 = vsel %vm754, %v727, %v746
      %v756 = vsel %vm754, %v728, %v747
      %757 = vst [vmem:[%s738] sm:$0xff] %v755
      %758 = vst [vmem:[%s739] sm:$0xff] %v756
      %v759 = vadd.s32 %v678, 16
      %v760 = vlaneseq
      %v761 = vand.u32 %v760, 127
      %s762 = scalar_lea.vmem %s674, 16
      %s763 = scalar_lea.vmem %s675, 16
      %v764 = vld [vmem:[%s762] sm:$0xff]
      %v765 = vld [vmem:[%s763] sm:$0xff]
      %766 = xla_tuple %v764, %v765
      %767 = xla_tuple %v684, %v687
      %v768 = vmul.f32 %v764, %v684
      %v769 = vmul.f32 %v765, %v687
      %v770 = vsub.f32 %v768, %v769
      %v771 = vmul.f32 %v764, %v687
      %v772 = vmul.f32 %v765, %v684
      %v773 = vadd.f32 %v771, %v772
      %774 = xla_tuple %v770, %v773
      %s775 = scalar_lea.vmem %s672, 16
      %s776 = scalar_lea.vmem %s673, 16
      %v777 = vld [vmem:[%s775] sm:$0xff]
      %v778 = vld [vmem:[%s776] sm:$0xff]
      %v779 = vstv %s126
      %vm780 = vcmp.gt.s32.totalorder %v761, %v779
      %v781 = vsub.f32 %v777, %v770
      %v782 = vsub.f32 %v778, %v773
      %v783 = vsel %vm780, %v781, %v777
      %v784 = vsel %vm780, %v782, %v778
      %v785 = vstv %s126
      %v786 = vlaneseq
      %v787 = vand.u32 %v786, 127
      %vm788 = vcmp.eq.s32.totalorder %v787, %v785
      %v789 = vstv %s126
      %vm790 = vcmp.ge.s32.totalorder %v759, %v789
      %vm791 = vmand %vm788, %vm790
      %v792 = vsel %vm791, %v764, %v783
      %v793 = vsel %vm791, %v765, %v784
      %794 = vst [vmem:[%s775] sm:$0xff] %v792
      %795 = vst [vmem:[%s776] sm:$0xff] %v793
      %v796 = vadd.s32 %v678, 24
      %v797 = vlaneseq
      %v798 = vand.u32 %v797, 127
      %s799 = scalar_lea.vmem %s674, 24
      %s800 = scalar_lea.vmem %s675, 24
      %v801 = vld [vmem:[%s799] sm:$0xff]
      %v802 = vld [vmem:[%s800] sm:$0xff]
      %803 = xla_tuple %v801, %v802
      %804 = xla_tuple %v684, %v687
      %v805 = vmul.f32 %v801, %v684
      %v806 = vmul.f32 %v802, %v687
      %v807 = vsub.f32 %v805, %v806
      %v808 = vmul.f32 %v801, %v687
      %v809 = vmul.f32 %v802, %v684
      %v810 = vadd.f32 %v808, %v809
      %811 = xla_tuple %v807, %v810
      %s812 = scalar_lea.vmem %s672, 24
      %s813 = scalar_lea.vmem %s673, 24
      %v814 = vld [vmem:[%s812] sm:$0xff]
      %v815 = vld [vmem:[%s813] sm:$0xff]
      %v816 = vstv %s126
      %vm817 = vcmp.gt.s32.totalorder %v798, %v816
      %v818 = vsub.f32 %v814, %v807
      %v819 = vsub.f32 %v815, %v810
      %v820 = vsel %vm817, %v818, %v814
      %v821 = vsel %vm817, %v819, %v815
      %v822 = vstv %s126
      %v823 = vlaneseq
      %v824 = vand.u32 %v823, 127
      %vm825 = vcmp.eq.s32.totalorder %v824, %v822
      %v826 = vstv %s126
      %vm827 = vcmp.ge.s32.totalorder %v796, %v826
      %vm828 = vmand %vm825, %vm827
      %v829 = vsel %vm828, %v801, %v820
      %v830 = vsel %vm828, %v802, %v821
      %831 = vst [vmem:[%s812] sm:$0xff] %v829
      %832 = vst [vmem:[%s813] sm:$0xff] %v830
      %s833 = scalar_lea.vmem %s672, %s126
      %s834 = scalar_lea.vmem %s673, %s126
      %v835 = vld [vmem:[%s833] ss:$0 sm:$0xff]
      %v836 = vld [vmem:[%s834] ss:$0 sm:$0xff]
      %v837 = vstv %s126
      %v838 = vlaneseq
      %v839 = vand.u32 %v838, 127
      %vm840 = vcmp.eq.s32.totalorder %v839, %v837
      %v841 = vsel %vm840, %v277, %v835
      %v842 = vsel %vm840, 0.0, %v836
      %843 = vst [vmem:[%s833] sm:$0x1] %v841
      %844 = vst [vmem:[%s834] sm:$0x1] %v842
    $region74: #{custom-call.6} parent=1 // loop_footer
      %s130 = sadd.s32 1, %s126
    $region75: #{custom-call.6} parent=1 // loop_footer_branch
      %125 = sbr.rel target = $region71
    $region76: #{custom-call.6} parent=1 // loop_exit
      _
    %s846 = sshllo.u32 0, 1
    %v848 = vld [vmem:[#allocation4] sm:%s846]
    %s849 = sshllo.u32 0, 1
    %850 = vst [vmem:[#allocation5] sm:%s849] %v848
    %s852 = sshllo.u32 0, 1
    %v854 = vld [vmem:[#allocation6] sm:%s852]
    %s855 = sshllo.u32 0, 1
    %856 = vst [vmem:[#allocation7] sm:%s855] %v854
    // Predicated region
    $region77: #{custom-call.6} parent=1 // pred_check
      _
    $region78: #{custom-call.6} parent=1 // pred_check_branch
      %858 = sbr.rel (0) target = $region80
    $region79: #{custom-call.6} parent=1 // pred_region
      // Predicated region
      $region81: #{custom-call.6} parent=79 // pred_check
        _
      $region82: #{custom-call.6} parent=79 // pred_check_branch
        %860 = sbr.rel (0) target = $region84
      $region83: #{custom-call.6} parent=79 // pred_region
        // Predicated region
        $region96: #{custom-call.6} parent=83 // pred_check
          _
        $region97: #{custom-call.6} parent=83 // pred_check_branch
          %881 = sbr.rel (0) target = $region99
        $region98: #{custom-call.6} parent=83 // pred_region
          loop: start=0, step=1, limit=1
          $region100: #{custom-call.6} parent=98 // loop_pre_header
            _
          $region101: #{custom-call.6} parent=98 // loop_header
            %s883 = sphi 0, %s887
            %p884 = scmp.ge.s32.totalorder %s883, 1
            %s888 = sphi [#allocation2], [#allocation2]
            %s889 = sphi %s2, %s2
          $region102: #{custom-call.6} parent=98 // loop_header_branch
            %886 = sbr.rel (%p884) target = $region106
          $region103: #{custom-call.6} parent=98 // loop_body
            %v890 = vld [vmem:[%s888] sm:$0xff]
            %891 = vst [vmem:[%s889] sm:$0xff] %v890
            %v892 = vld [vmem:[%s888 + $0x8] sm:$0xff]
            %893 = vst [vmem:[%s889 + $0x8] sm:$0xff] %v892
            %v894 = vld [vmem:[%s888 + $0x10] sm:$0xff]
            %895 = vst [vmem:[%s889 + $0x10] sm:$0xff] %v894
            %v896 = vld [vmem:[%s888 + $0x18] sm:$0xff]
            %897 = vst [vmem:[%s889 + $0x18] sm:$0xff] %v896
          $region104: #{custom-call.6} parent=98 // loop_footer
            %s887 = sadd.s32 1, %s883
          $region105: #{custom-call.6} parent=98 // loop_footer_branch
            %882 = sbr.rel target = $region101
          $region106: #{custom-call.6} parent=98 // loop_exit
            _
        $region99: #{custom-call.6} parent=83 // pred_fallthru
          _
        // Predicated region
        $region107: #{custom-call.6} parent=83 // pred_check
          _
        $region108: #{custom-call.6} parent=83 // pred_check_branch
          %899 = sbr.rel target = $region110
        $region109: #{custom-call.6} parent=83 // pred_region
          _
        $region110: #{custom-call.6} parent=83 // pred_fallthru
          _
      $region84: #{custom-call.6} parent=79 // pred_fallthru
        _
      // Predicated region
      $region85: #{custom-call.6} parent=79 // pred_check
        _
      $region86: #{custom-call.6} parent=79 // pred_check_branch
        %862 = sbr.rel target = $region88
      $region87: #{custom-call.6} parent=79 // pred_region
        loop: start=0, step=1, limit=1
        $region89: #{custom-call.6} parent=87 // loop_pre_header
          _
        $region90: #{custom-call.6} parent=87 // loop_header
          %s865 = sphi 0, %s869
          %p866 = scmp.ge.s32.totalorder %s865, 1
          %s870 = sphi [#allocation2], [#allocation2]
          %s871 = sphi %s2, %s2
        $region91: #{custom-call.6} parent=87 // loop_header_branch
          %868 = sbr.rel (%p866) target = $region95
        $region92: #{custom-call.6} parent=87 // loop_body
          %v872 = vld [vmem:[%s870] sm:$0xff]
          %873 = vst [vmem:[%s871] sm:$0xff] %v872
          %v874 = vld [vmem:[%s870 + $0x8] sm:$0xff]
          %875 = vst [vmem:[%s871 + $0x8] sm:$0xff] %v874
          %v876 = vld [vmem:[%s870 + $0x10] sm:$0xff]
          %877 = vst [vmem:[%s871 + $0x10] sm:$0xff] %v876
          %v878 = vld [vmem:[%s870 + $0x18] sm:$0xff]
          %879 = vst [vmem:[%s871 + $0x18] sm:$0xff] %v878
        $region93: #{custom-call.6} parent=87 // loop_footer
          %s869 = sadd.s32 1, %s865
        $region94: #{custom-call.6} parent=87 // loop_footer_branch
          %864 = sbr.rel target = $region90
        $region95: #{custom-call.6} parent=87 // loop_exit
          _
      $region88: #{custom-call.6} parent=79 // pred_fallthru
        _
    $region80: #{custom-call.6} parent=1 // pred_fallthru
      _
    %900 = vnop
    // Predicated region
    $region111: #{custom-call.6} parent=1 // pred_check
      _
    $region112: #{custom-call.6} parent=1 // pred_check_branch
      %902 = sbr.rel (0) target = $region114
    $region113: #{custom-call.6} parent=1 // pred_region
      // Predicated region
      $region115: #{custom-call.6} parent=113 // pred_check
        _
      $region116: #{custom-call.6} parent=113 // pred_check_branch
        %904 = sbr.rel (0) target = $region118
      $region117: #{custom-call.6} parent=113 // pred_region
        // Predicated region
        $region130: #{custom-call.6} parent=117 // pred_check
          _
        $region131: #{custom-call.6} parent=117 // pred_check_branch
          %925 = sbr.rel (0) target = $region133
        $region132: #{custom-call.6} parent=117 // pred_region
          loop: start=0, step=1, limit=1
          $region134: #{custom-call.6} parent=132 // loop_pre_header
            _
          $region135: #{custom-call.6} parent=132 // loop_header
            %s927 = sphi 0, %s931
            %p928 = scmp.ge.s32.totalorder %s927, 1
            %s932 = sphi [#allocation3], [#allocation3]
            %s933 = sphi %s3, %s3
          $region136: #{custom-call.6} parent=132 // loop_header_branch
            %930 = sbr.rel (%p928) target = $region140
          $region137: #{custom-call.6} parent=132 // loop_body
            %v934 = vld [vmem:[%s932] sm:$0xff]
            %935 = vst [vmem:[%s933] sm:$0xff] %v934
            %v936 = vld [vmem:[%s932 + $0x8] sm:$0xff]
            %937 = vst [vmem:[%s933 + $0x8] sm:$0xff] %v936
            %v938 = vld [vmem:[%s932 + $0x10] sm:$0xff]
            %939 = vst [vmem:[%s933 + $0x10] sm:$0xff] %v938
            %v940 = vld [vmem:[%s932 + $0x18] sm:$0xff]
            %941 = vst [vmem:[%s933 + $0x18] sm:$0xff] %v940
          $region138: #{custom-call.6} parent=132 // loop_footer
            %s931 = sadd.s32 1, %s927
          $region139: #{custom-call.6} parent=132 // loop_footer_branch
            %926 = sbr.rel target = $region135
          $region140: #{custom-call.6} parent=132 // loop_exit
            _
        $region133: #{custom-call.6} parent=117 // pred_fallthru
          _
        // Predicated region
        $region141: #{custom-call.6} parent=117 // pred_check
          _
        $region142: #{custom-call.6} parent=117 // pred_check_branch
          %943 = sbr.rel target = $region144
        $region143: #{custom-call.6} parent=117 // pred_region
          _
        $region144: #{custom-call.6} parent=117 // pred_fallthru
          _
      $region118: #{custom-call.6} parent=113 // pred_fallthru
        _
      // Predicated region
      $region119: #{custom-call.6} parent=113 // pred_check
        _
      $region120: #{custom-call.6} parent=113 // pred_check_branch
        %906 = sbr.rel target = $region122
      $region121: #{custom-call.6} parent=113 // pred_region
        loop: start=0, step=1, limit=1
        $region123: #{custom-call.6} parent=121 // loop_pre_header
          _
        $region124: #{custom-call.6} parent=121 // loop_header
          %s909 = sphi 0, %s913
          %p910 = scmp.ge.s32.totalorder %s909, 1
          %s914 = sphi [#allocation3], [#allocation3]
          %s915 = sphi %s3, %s3
        $region125: #{custom-call.6} parent=121 // loop_header_branch
          %912 = sbr.rel (%p910) target = $region129
        $region126: #{custom-call.6} parent=121 // loop_body
          %v916 = vld [vmem:[%s914] sm:$0xff]
          %917 = vst [vmem:[%s915] sm:$0xff] %v916
          %v918 = vld [vmem:[%s914 + $0x8] sm:$0xff]
          %919 = vst [vmem:[%s915 + $0x8] sm:$0xff] %v918
          %v920 = vld [vmem:[%s914 + $0x10] sm:$0xff]
          %921 = vst [vmem:[%s915 + $0x10] sm:$0xff] %v920
          %v922 = vld [vmem:[%s914 + $0x18] sm:$0xff]
          %923 = vst [vmem:[%s915 + $0x18] sm:$0xff] %v922
        $region127: #{custom-call.6} parent=121 // loop_footer
          %s913 = sadd.s32 1, %s909
        $region128: #{custom-call.6} parent=121 // loop_footer_branch
          %908 = sbr.rel target = $region124
        $region129: #{custom-call.6} parent=121 // loop_exit
          _
      $region122: #{custom-call.6} parent=113 // pred_fallthru
        _
    $region114: #{custom-call.6} parent=1 // pred_fallthru
      _
    %944 = vnop
    // Predicated region
    $region145: #{custom-call.6} parent=1 // pred_check
      _
    $region146: #{custom-call.6} parent=1 // pred_check_branch
      %946 = sbr.rel (0) target = $region148
    $region147: #{custom-call.6} parent=1 // pred_region
      // Predicated region
      $region149: #{custom-call.6} parent=147 // pred_check
        _
      $region150: #{custom-call.6} parent=147 // pred_check_branch
        %948 = sbr.rel (0) target = $region152
      $region151: #{custom-call.6} parent=147 // pred_region
        // Predicated region
        $region153: #{custom-call.6} parent=151 // pred_check
          _
        $region154: #{custom-call.6} parent=151 // pred_check_branch
          %950 = sbr.rel target = $region156
        $region155: #{custom-call.6} parent=151 // pred_region
          // Predicated region
          $region168: #{custom-call.6} parent=155 // pred_check
            _
          $region169: #{custom-call.6} parent=155 // pred_check_branch
            %965 = sbr.rel (0) target = $region171
          $region170: #{custom-call.6} parent=155 // pred_region
            loop: start=0, step=1, limit=1
            $region172: #{custom-call.6} parent=170 // loop_pre_header
              _
            $region173: #{custom-call.6} parent=170 // loop_header
              %s968 = sphi 0, %s972
              %p969 = scmp.ge.s32.totalorder %s968, 1
              %s973 = sphi [#allocation5], [#allocation5]
              %s974 = sphi %s4, %s4
            $region174: #{custom-call.6} parent=170 // loop_header_branch
              %971 = sbr.rel (%p969) target = $region178
            $region175: #{custom-call.6} parent=170 // loop_body
              %v975 = vld [vmem:[%s973] sm:$0x1]
              %976 = vst [vmem:[%s974] sm:$0x1] %v975
            $region176: #{custom-call.6} parent=170 // loop_footer
              %s972 = sadd.s32 1, %s968
            $region177: #{custom-call.6} parent=170 // loop_footer_branch
              %967 = sbr.rel target = $region173
            $region178: #{custom-call.6} parent=170 // loop_exit
              _
          $region171: #{custom-call.6} parent=155 // pred_fallthru
            _
        $region156: #{custom-call.6} parent=151 // pred_fallthru
          _
        // Predicated region
        $region157: #{custom-call.6} parent=151 // pred_check
          _
        $region158: #{custom-call.6} parent=151 // pred_check_branch
          %952 = sbr.rel (0) target = $region160
        $region159: #{custom-call.6} parent=151 // pred_region
          loop: start=0, step=1, limit=1
          $region161: #{custom-call.6} parent=159 // loop_pre_header
            _
          $region162: #{custom-call.6} parent=159 // loop_header
            %s955 = sphi 0, %s959
            %p956 = scmp.ge.s32.totalorder %s955, 1
            %s960 = sphi [#allocation5], [#allocation5]
            %s961 = sphi %s4, %s4
          $region163: #{custom-call.6} parent=159 // loop_header_branch
            %958 = sbr.rel (%p956) target = $region167
          $region164: #{custom-call.6} parent=159 // loop_body
            %v962 = vld [vmem:[%s960] sm:$0x1]
            %963 = vst [vmem:[%s961] sm:$0x1] %v962
          $region165: #{custom-call.6} parent=159 // loop_footer
            %s959 = sadd.s32 1, %s955
          $region166: #{custom-call.6} parent=159 // loop_footer_branch
            %954 = sbr.rel target = $region162
          $region167: #{custom-call.6} parent=159 // loop_exit
            _
        $region160: #{custom-call.6} parent=151 // pred_fallthru
          _
      $region152: #{custom-call.6} parent=147 // pred_fallthru
        _
      %977 = vnop
    $region148: #{custom-call.6} parent=1 // pred_fallthru
      _
    // Predicated region
    $region179: #{custom-call.6} parent=1 // pred_check
      _
    $region180: #{custom-call.6} parent=1 // pred_check_branch
      %979 = sbr.rel (0) target = $region182
    $region181: #{custom-call.6} parent=1 // pred_region
      // Predicated region
      $region183: #{custom-call.6} parent=181 // pred_check
        _
      $region184: #{custom-call.6} parent=181 // pred_check_branch
        %981 = sbr.rel (0) target = $region186
      $region185: #{custom-call.6} parent=181 // pred_region
        // Predicated region
        $region187: #{custom-call.6} parent=185 // pred_check
          _
        $region188: #{custom-call.6} parent=185 // pred_check_branch
          %983 = sbr.rel target = $region190
        $region189: #{custom-call.6} parent=185 // pred_region
          // Predicated region
          $region202: #{custom-call.6} parent=189 // pred_check
            _
          $region203: #{custom-call.6} parent=189 // pred_check_branch
            %998 = sbr.rel (0) target = $region205
          $region204: #{custom-call.6} parent=189 // pred_region
            loop: start=0, step=1, limit=1
            $region206: #{custom-call.6} parent=204 // loop_pre_header
              _
            $region207: #{custom-call.6} parent=204 // loop_header
              %s1001 = sphi 0, %s1005
              %p1002 = scmp.ge.s32.totalorder %s1001, 1
              %s1006 = sphi [#allocation7], [#allocation7]
              %s1007 = sphi %s5, %s5
            $region208: #{custom-call.6} parent=204 // loop_header_branch
              %1004 = sbr.rel (%p1002) target = $region212
            $region209: #{custom-call.6} parent=204 // loop_body
              %v1008 = vld [vmem:[%s1006] sm:$0x1]
              %1009 = vst [vmem:[%s1007] sm:$0x1] %v1008
            $region210: #{custom-call.6} parent=204 // loop_footer
              %s1005 = sadd.s32 1, %s1001
            $region211: #{custom-call.6} parent=204 // loop_footer_branch
              %1000 = sbr.rel target = $region207
            $region212: #{custom-call.6} parent=204 // loop_exit
              _
          $region205: #{custom-call.6} parent=189 // pred_fallthru
            _
        $region190: #{custom-call.6} parent=185 // pred_fallthru
          _
        // Predicated region
        $region191: #{custom-call.6} parent=185 // pred_check
          _
        $region192: #{custom-call.6} parent=185 // pred_check_branch
          %985 = sbr.rel (0) target = $region194
        $region193: #{custom-call.6} parent=185 // pred_region
          loop: start=0, step=1, limit=1
          $region195: #{custom-call.6} parent=193 // loop_pre_header
            _
          $region196: #{custom-call.6} parent=193 // loop_header
            %s988 = sphi 0, %s992
            %p989 = scmp.ge.s32.totalorder %s988, 1
            %s993 = sphi [#allocation7], [#allocation7]
            %s994 = sphi %s5, %s5
          $region197: #{custom-call.6} parent=193 // loop_header_branch
            %991 = sbr.rel (%p989) target = $region201
          $region198: #{custom-call.6} parent=193 // loop_body
            %v995 = vld [vmem:[%s993] sm:$0x1]
            %996 = vst [vmem:[%s994] sm:$0x1] %v995
          $region199: #{custom-call.6} parent=193 // loop_footer
            %s992 = sadd.s32 1, %s988
          $region200: #{custom-call.6} parent=193 // loop_footer_branch
            %987 = sbr.rel target = $region196
          $region201: #{custom-call.6} parent=193 // loop_exit
            _
        $region194: #{custom-call.6} parent=185 // pred_fallthru
          _
      $region186: #{custom-call.6} parent=181 // pred_fallthru
        _
      %1010 = vnop
    $region182: #{custom-call.6} parent=1 // pred_fallthru
      _
    // Predicated region
    $region213: #{custom-call.6} parent=1 // pred_check
      _
    $region214: #{custom-call.6} parent=1 // pred_check_branch
      %1012 = sbr.rel (0) target = $region216
    $region215: #{custom-call.6} parent=1 // pred_region
      _
    $region216: #{custom-call.6} parent=1 // pred_fallthru
      _
    // Predicated region
    $region217: #{custom-call.6} parent=1 // pred_check
      _
    $region218: #{custom-call.6} parent=1 // pred_check_branch
      %1014 = sbr.rel (0) target = $region220
    $region219: #{custom-call.6} parent=1 // pred_region
      _
    $region220: #{custom-call.6} parent=1 // pred_fallthru
      _

// kernel: custom-call.8
$region0: #{custom-call.8}
  %s0 = inlined_call_operand.vmem [shape: f32[32,32], index: 0, kind: input, shape index: {}]
  %s1 = inlined_call_operand.vmem [shape: f32[32,32], index: 1, kind: input, shape index: {}]
  %s2 = inlined_call_operand.vmem [shape: f32[32,32], index: 2, kind: output, shape index: {0}]
  %s3 = inlined_call_operand.vmem [shape: f32[32,32], index: 3, kind: output, shape index: {1}]
  %4 = xla_tuple %s2, %s3
  $region1: #{custom-call.8} parent=0
    #allocation0 [shape = 'u8[16384]{0}', space=vmem, size = 0x4000, scoped, tag = 'operand span for operand 0']
    #allocation1 [shape = 'u8[16384]{0}', space=vmem, size = 0x4000, scoped, tag = 'operand span for operand 1']
    #allocation2 [shape = 'u8[16384]{0}', space=vmem, size = 0x4000, scoped, tag = 'operand span for operand 2']
    #allocation3 [shape = 'u8[16384]{0}', space=vmem, size = 0x4000, scoped, tag = 'operand span for operand 3']
    %p6 = scmp.gt.s32.totalorder 32, 0
    // Predicated region
    $region2: #{custom-call.8} parent=1 // pred_check
      %p7 = pneg %p6
    $region3: #{custom-call.8} parent=1 // pred_check_branch
      %9 = sbr.rel (%p7) target = $region5
    $region4: #{custom-call.8} parent=1 // pred_region
      %s10 = sshra.s32 32, 3
      %p11 = scmp.gt.s32.totalorder %s10, 0
      // Predicated region
      $region6: #{custom-call.8} parent=4 // pred_check
        %p12 = pneg %p11
      $region7: #{custom-call.8} parent=4 // pred_check_branch
        %14 = sbr.rel (%p12) target = $region9
      $region8: #{custom-call.8} parent=4 // pred_region
        %s15 = ssub.s32 %s10, 1
        %s16 = smul.u32 %s15, 128
        %s17 = sshra.s32 %s16, 4
        %s18 = scalar_lea.vmem %s0, %s17
        %v19 = vld [vmem:[%s0] sm:$0xff]
        // While loop
        $region10: #{custom-call.8} parent=8 // loop_pre_header
          _
        $region11: #{custom-call.8} parent=8 // loop_header
          %s20 = sphi %s0, %s42
          %s21 = sphi [#allocation0], %s43
          %v22 = vphi %v19, %v44
          %s23 = ssub.s32 %s18, 64
          %p24 = scmp.gt.s32.totalorder %s20, %s23
        $region12: #{custom-call.8} parent=8 // loop_header_branch
          %26 = sbr.rel (%p24) target = $region16
        $region13: #{custom-call.8} parent=8 // loop_body
          %27 = vst [vmem:[%s21] sm:$0xff] %v22
          %v28 = vld [vmem:[%s20 + $0x8] sm:$0xff]
          %29 = vst [vmem:[%s21 + $0x8] sm:$0xff] %v28
          %v30 = vld [vmem:[%s20 + $0x10] sm:$0xff]
          %31 = vst [vmem:[%s21 + $0x10] sm:$0xff] %v30
          %v32 = vld [vmem:[%s20 + $0x18] sm:$0xff]
          %33 = vst [vmem:[%s21 + $0x18] sm:$0xff] %v32
          %v34 = vld [vmem:[%s20 + $0x20] sm:$0xff]
          %35 = vst [vmem:[%s21 + $0x20] sm:$0xff] %v34
          %v36 = vld [vmem:[%s20 + $0x28] sm:$0xff]
          %37 = vst [vmem:[%s21 + $0x28] sm:$0xff] %v36
          %v38 = vld [vmem:[%s20 + $0x30] sm:$0xff]
          %39 = vst [vmem:[%s21 + $0x30] sm:$0xff] %v38
          %v40 = vld [vmem:[%s20 + $0x38] sm:$0xff]
          %41 = vst [vmem:[%s21 + $0x38] sm:$0xff] %v40
        $region14: #{custom-call.8} parent=8 // loop_footer
          %s42 = scalar_lea.vmem %s20, 64
          %s43 = scalar_lea.vmem %s21, 64
          %v44 = vld [vmem:[%s20 + $0x40] sm:$0xff]
        $region15: #{custom-call.8} parent=8 // loop_footer_branch
          %45 = sbr.rel target = $region11
        $region16: #{custom-call.8} parent=8 // loop_exit
          _
        // While loop
        $region17: #{custom-call.8} parent=8 // loop_pre_header
          _
        $region18: #{custom-call.8} parent=8 // loop_header
          %s46 = sphi %s20, %s54
          %s47 = sphi %s21, %s55
          %v48 = vphi %v22, %v48
          %p49 = scmp.gt.s32.totalorder %s46, %s18
        $region19: #{custom-call.8} parent=8 // loop_header_branch
          %51 = sbr.rel (%p49) target = $region23
        $region20: #{custom-call.8} parent=8 // loop_body
          %v52 = vld [vmem:[%s46] sm:$0xff]
          %53 = vst [vmem:[%s47] sm:$0xff] %v52
        $region21: #{custom-call.8} parent=8 // loop_footer
          %s54 = scalar_lea.vmem %s46, 8
          %s55 = scalar_lea.vmem %s47, 8
        $region22: #{custom-call.8} parent=8 // loop_footer_branch
          %56 = sbr.rel target = $region18
        $region23: #{custom-call.8} parent=8 // loop_exit
          _
      $region9: #{custom-call.8} parent=4 // pred_fallthru
        _
      %s57 = sand.u32 32, 7
      %s58 = sshllo.u32 0, %s57
      %s59 = smul.u32 %s10, 128
      %s60 = sshra.s32 %s59, 4
      %s61 = scalar_lea.vmem [#allocation0], %s60
      %s62 = smul.u32 %s10, 128
      %s63 = sshra.s32 %s62, 4
      %s64 = scalar_lea.vmem %s0, %s63
      %v65 = vld [vmem:[%s64] sm:%s58]
      %66 = vst [vmem:[%s61] sm:%s58] %v65
    $region5: #{custom-call.8} parent=1 // pred_fallthru
      _
    %p68 = scmp.gt.s32.totalorder 32, 0
    // Predicated region
    $region24: #{custom-call.8} parent=1 // pred_check
      %p69 = pneg %p68
    $region25: #{custom-call.8} parent=1 // pred_check_branch
      %71 = sbr.rel (%p69) target = $region27
    $region26: #{custom-call.8} parent=1 // pred_region
      %s72 = sshra.s32 32, 3
      %p73 = scmp.gt.s32.totalorder %s72, 0
      // Predicated region
      $region28: #{custom-call.8} parent=26 // pred_check
        %p74 = pneg %p73
      $region29: #{custom-call.8} parent=26 // pred_check_branch
        %76 = sbr.rel (%p74) target = $region31
      $region30: #{custom-call.8} parent=26 // pred_region
        %s77 = ssub.s32 %s72, 1
        %s78 = smul.u32 %s77, 128
        %s79 = sshra.s32 %s78, 4
        %s80 = scalar_lea.vmem %s1, %s79
        %v81 = vld [vmem:[%s1] sm:$0xff]
        // While loop
        $region32: #{custom-call.8} parent=30 // loop_pre_header
          _
        $region33: #{custom-call.8} parent=30 // loop_header
          %s82 = sphi %s1, %s104
          %s83 = sphi [#allocation1], %s105
          %v84 = vphi %v81, %v106
          %s85 = ssub.s32 %s80, 64
          %p86 = scmp.gt.s32.totalorder %s82, %s85
        $region34: #{custom-call.8} parent=30 // loop_header_branch
          %88 = sbr.rel (%p86) target = $region38
        $region35: #{custom-call.8} parent=30 // loop_body
          %89 = vst [vmem:[%s83] sm:$0xff] %v84
          %v90 = vld [vmem:[%s82 + $0x8] sm:$0xff]
          %91 = vst [vmem:[%s83 + $0x8] sm:$0xff] %v90
          %v92 = vld [vmem:[%s82 + $0x10] sm:$0xff]
          %93 = vst [vmem:[%s83 + $0x10] sm:$0xff] %v92
          %v94 = vld [vmem:[%s82 + $0x18] sm:$0xff]
          %95 = vst [vmem:[%s83 + $0x18] sm:$0xff] %v94
          %v96 = vld [vmem:[%s82 + $0x20] sm:$0xff]
          %97 = vst [vmem:[%s83 + $0x20] sm:$0xff] %v96
          %v98 = vld [vmem:[%s82 + $0x28] sm:$0xff]
          %99 = vst [vmem:[%s83 + $0x28] sm:$0xff] %v98
          %v100 = vld [vmem:[%s82 + $0x30] sm:$0xff]
          %101 = vst [vmem:[%s83 + $0x30] sm:$0xff] %v100
          %v102 = vld [vmem:[%s82 + $0x38] sm:$0xff]
          %103 = vst [vmem:[%s83 + $0x38] sm:$0xff] %v102
        $region36: #{custom-call.8} parent=30 // loop_footer
          %s104 = scalar_lea.vmem %s82, 64
          %s105 = scalar_lea.vmem %s83, 64
          %v106 = vld [vmem:[%s82 + $0x40] sm:$0xff]
        $region37: #{custom-call.8} parent=30 // loop_footer_branch
          %107 = sbr.rel target = $region33
        $region38: #{custom-call.8} parent=30 // loop_exit
          _
        // While loop
        $region39: #{custom-call.8} parent=30 // loop_pre_header
          _
        $region40: #{custom-call.8} parent=30 // loop_header
          %s108 = sphi %s82, %s116
          %s109 = sphi %s83, %s117
          %v110 = vphi %v84, %v110
          %p111 = scmp.gt.s32.totalorder %s108, %s80
        $region41: #{custom-call.8} parent=30 // loop_header_branch
          %113 = sbr.rel (%p111) target = $region45
        $region42: #{custom-call.8} parent=30 // loop_body
          %v114 = vld [vmem:[%s108] sm:$0xff]
          %115 = vst [vmem:[%s109] sm:$0xff] %v114
        $region43: #{custom-call.8} parent=30 // loop_footer
          %s116 = scalar_lea.vmem %s108, 8
          %s117 = scalar_lea.vmem %s109, 8
        $region44: #{custom-call.8} parent=30 // loop_footer_branch
          %118 = sbr.rel target = $region40
        $region45: #{custom-call.8} parent=30 // loop_exit
          _
      $region31: #{custom-call.8} parent=26 // pred_fallthru
        _
      %s119 = sand.u32 32, 7
      %s120 = sshllo.u32 0, %s119
      %s121 = smul.u32 %s72, 128
      %s122 = sshra.s32 %s121, 4
      %s123 = scalar_lea.vmem [#allocation1], %s122
      %s124 = smul.u32 %s72, 128
      %s125 = sshra.s32 %s124, 4
      %s126 = scalar_lea.vmem %s1, %s125
      %v127 = vld [vmem:[%s126] sm:%s120]
      %128 = vst [vmem:[%s123] sm:%s120] %v127
    $region27: #{custom-call.8} parent=1 // pred_fallthru
      _
    %v129 = vlaneseq
    %v130 = vand.u32 %v129, 127
    %v131 = vlaneseq
    %v132 = vshrl.u32 %v131, 7
    %vm134 = vcmp.eq.s32.totalorder %v130, %v132
    %v135 = vld [vmem:[#allocation0] sm:$0xff]
    %v136 = vld [vmem:[#allocation1] sm:$0xff]
    %v137 = vlaneseq
    %v138 = vand.u32 %v137, 127
    %vm139 = vcmp.eq.s32.totalorder %v138, 0
    %v140 = vsel %vm139, %v135, 1.0
    %v141 = vsel %vm139, %v136, 0.0
    %v142 = vsel %vm134, %v140, 0.0
    %v143 = vsel %vm134, %v141, 0.0
    %v144 = vlaneseq
    %v145 = vand.u32 %v144, 127
    %v146 = vlaneseq
    %v147 = vshrl.u32 %v146, 7
    %v148 = vadd.s32 %v147, 8
    %vm149 = vcmp.eq.s32.totalorder %v145, %v148
    %v150 = vsel %vm149, 1.0, 0.0
    %v151 = vlaneseq
    %v152 = vand.u32 %v151, 127
    %v153 = vlaneseq
    %v154 = vshrl.u32 %v153, 7
    %v155 = vadd.s32 %v154, 16
    %vm156 = vcmp.eq.s32.totalorder %v152, %v155
    %v157 = vsel %vm156, 1.0, 0.0
    %v158 = vlaneseq
    %v159 = vand.u32 %v158, 127
    %v160 = vlaneseq
    %v161 = vshrl.u32 %v160, 7
    %v162 = vadd.s32 %v161, 24
    %vm163 = vcmp.eq.s32.totalorder %v159, %v162
    %v164 = vsel %vm163, 1.0, 0.0
    %s165 = scalar_lea.vmem [#allocation0], 1
    %s166 = scalar_lea.vmem [#allocation1], 1
    %v167 = vld [vmem:[%s165] ss:$0 sm:$0xff]
    %v168 = vld [vmem:[%s166] ss:$0 sm:$0xff]
    %vm169 = vcmask 261120
    %v170 = vsel %vm169, %v167, 0.0
    %v171 = vsel %vm169, %v168, 0.0
    %v172 = vlaneseq
    %v173 = vand.u32 %v172, 127
    %vm174 = vcmp.eq.s32.totalorder %v173, 1
    %175 = xla_tuple %v170, %v171
    %176 = xla_tuple %v142, %v143
    %v177 = vmul.f32 %v170, %v142
    %v178 = vmul.f32 %v171, %v143
    %v179 = vsub.f32 %v177, %v178
    %v180 = vmul.f32 %v170, %v143
    %v181 = vmul.f32 %v171, %v142
    %v182 = vadd.f32 %v180, %v181
    %183 = xla_tuple %v179, %v182
    %184 = vadd.xlane.f32.xlu0 %v179
    %v185 = vpop.xlane.xlu0 %184
    %186 = vadd.xlane.f32.xlu0 %v182
    %v187 = vpop.xlane.xlu0 %186
    %v188 = vsel %vm174, %v185, %v142
    %v189 = vsel %vm174, %v187, %v143
    %s190 = scalar_lea.vmem [#allocation0], 2
    %s191 = scalar_lea.vmem [#allocation1], 2
    %v192 = vld [vmem:[%s190] ss:$0 sm:$0xff]
    %v193 = vld [vmem:[%s191] ss:$0 sm:$0xff]
    %vm194 = vcmask 261120
    %v195 = vsel %vm194, %v192, 0.0
    %v196 = vsel %vm194, %v193, 0.0
    %v197 = vlaneseq
    %v198 = vand.u32 %v197, 127
    %vm199 = vcmp.eq.s32.totalorder %v198, 2
    %200 = xla_tuple %v195, %v196
    %201 = xla_tuple %v188, %v189
    %v202 = vmul.f32 %v195, %v188
    %v203 = vmul.f32 %v196, %v189
    %v204 = vsub.f32 %v202, %v203
    %v205 = vmul.f32 %v195, %v189
    %v206 = vmul.f32 %v196, %v188
    %v207 = vadd.f32 %v205, %v206
    %208 = xla_tuple %v204, %v207
    %209 = vadd.xlane.f32.xlu0 %v204
    %v210 = vpop.xlane.xlu0 %209
    %211 = vadd.xlane.f32.xlu0 %v207
    %v212 = vpop.xlane.xlu0 %211
    %v213 = vsel %vm199, %v210, %v188
    %v214 = vsel %vm199, %v212, %v189
    %s215 = scalar_lea.vmem [#allocation0], 3
    %s216 = scalar_lea.vmem [#allocation1], 3
    %v217 = vld [vmem:[%s215] ss:$0 sm:$0xff]
    %v218 = vld [vmem:[%s216] ss:$0 sm:$0xff]
    %vm219 = vcmask 261120
    %v220 = vsel %vm219, %v217, 0.0
    %v221 = vsel %vm219, %v218, 0.0
    %v222 = vlaneseq
    %v223 = vand.u32 %v222, 127
    %vm224 = vcmp.eq.s32.totalorder %v223, 3
    %225 = xla_tuple %v220, %v221
    %226 = xla_tuple %v213, %v214
    %v227 = vmul.f32 %v220, %v213
    %v228 = vmul.f32 %v221, %v214
    %v229 = vsub.f32 %v227, %v228
    %v230 = vmul.f32 %v220, %v214
    %v231 = vmul.f32 %v221, %v213
    %v232 = vadd.f32 %v230, %v231
    %233 = xla_tuple %v229, %v232
    %234 = vadd.xlane.f32.xlu0 %v229
    %v235 = vpop.xlane.xlu0 %234
    %236 = vadd.xlane.f32.xlu0 %v232
    %v237 = vpop.xlane.xlu0 %236
    %v238 = vsel %vm224, %v235, %v213
    %v239 = vsel %vm224, %v237, %v214
    %s240 = scalar_lea.vmem [#allocation0], 4
    %s241 = scalar_lea.vmem [#allocation1], 4
    %v242 = vld [vmem:[%s240] ss:$0 sm:$0xff]
    %v243 = vld [vmem:[%s241] ss:$0 sm:$0xff]
    %vm244 = vcmask 261120
    %v245 = vsel %vm244, %v242, 0.0
    %v246 = vsel %vm244, %v243, 0.0
    %v247 = vlaneseq
    %v248 = vand.u32 %v247, 127
    %vm249 = vcmp.eq.s32.totalorder %v248, 4
    %250 = xla_tuple %v245, %v246
    %251 = xla_tuple %v238, %v239
    %v252 = vmul.f32 %v245, %v238
    %v253 = vmul.f32 %v246, %v239
    %v254 = vsub.f32 %v252, %v253
    %v255 = vmul.f32 %v245, %v239
    %v256 = vmul.f32 %v246, %v238
    %v257 = vadd.f32 %v255, %v256
    %258 = xla_tuple %v254, %v257
    %259 = vadd.xlane.f32.xlu0 %v254
    %v260 = vpop.xlane.xlu0 %259
    %261 = vadd.xlane.f32.xlu0 %v257
    %v262 = vpop.xlane.xlu0 %261
    %v263 = vsel %vm249, %v260, %v238
    %v264 = vsel %vm249, %v262, %v239
    %s265 = scalar_lea.vmem [#allocation0], 5
    %s266 = scalar_lea.vmem [#allocation1], 5
    %v267 = vld [vmem:[%s265] ss:$0 sm:$0xff]
    %v268 = vld [vmem:[%s266] ss:$0 sm:$0xff]
    %vm269 = vcmask 261120
    %v270 = vsel %vm269, %v267, 0.0
    %v271 = vsel %vm269, %v268, 0.0
    %v272 = vlaneseq
    %v273 = vand.u32 %v272, 127
    %vm274 = vcmp.eq.s32.totalorder %v273, 5
    %275 = xla_tuple %v270, %v271
    %276 = xla_tuple %v263, %v264
    %v277 = vmul.f32 %v270, %v263
    %v278 = vmul.f32 %v271, %v264
    %v279 = vsub.f32 %v277, %v278
    %v280 = vmul.f32 %v270, %v264
    %v281 = vmul.f32 %v271, %v263
    %v282 = vadd.f32 %v280, %v281
    %283 = xla_tuple %v279, %v282
    %284 = vadd.xlane.f32.xlu0 %v279
    %v285 = vpop.xlane.xlu0 %284
    %286 = vadd.xlane.f32.xlu0 %v282
    %v287 = vpop.xlane.xlu0 %286
    %v288 = vsel %vm274, %v285, %v263
    %v289 = vsel %vm274, %v287, %v264
    %s290 = scalar_lea.vmem [#allocation0], 6
    %s291 = scalar_lea.vmem [#allocation1], 6
    %v292 = vld [vmem:[%s290] ss:$0 sm:$0xff]
    %v293 = vld [vmem:[%s291] ss:$0 sm:$0xff]
    %vm294 = vcmask 261120
    %v295 = vsel %vm294, %v292, 0.0
    %v296 = vsel %vm294, %v293, 0.0
    %v297 = vlaneseq
    %v298 = vand.u32 %v297, 127
    %vm299 = vcmp.eq.s32.totalorder %v298, 6
    %300 = xla_tuple %v295, %v296
    %301 = xla_tuple %v288, %v289
    %v302 = vmul.f32 %v295, %v288
    %v303 = vmul.f32 %v296, %v289
    %v304 = vsub.f32 %v302, %v303
    %v305 = vmul.f32 %v295, %v289
    %v306 = vmul.f32 %v296, %v288
    %v307 = vadd.f32 %v305, %v306
    %308 = xla_tuple %v304, %v307
    %309 = vadd.xlane.f32.xlu0 %v304
    %v310 = vpop.xlane.xlu0 %309
    %311 = vadd.xlane.f32.xlu0 %v307
    %v312 = vpop.xlane.xlu0 %311
    %v313 = vsel %vm299, %v310, %v288
    %v314 = vsel %vm299, %v312, %v289
    %s315 = scalar_lea.vmem [#allocation0], 7
    %s316 = scalar_lea.vmem [#allocation1], 7
    %v317 = vld [vmem:[%s315] ss:$0 sm:$0xff]
    %v318 = vld [vmem:[%s316] ss:$0 sm:$0xff]
    %vm319 = vcmask 261120
    %v320 = vsel %vm319, %v317, 0.0
    %v321 = vsel %vm319, %v318, 0.0
    %v322 = vlaneseq
    %v323 = vand.u32 %v322, 127
    %vm324 = vcmp.eq.s32.totalorder %v323, 7
    %325 = xla_tuple %v320, %v321
    %326 = xla_tuple %v313, %v314
    %v327 = vmul.f32 %v320, %v313
    %v328 = vmul.f32 %v321, %v314
    %v329 = vsub.f32 %v327, %v328
    %v330 = vmul.f32 %v320, %v314
    %v331 = vmul.f32 %v321, %v313
    %v332 = vadd.f32 %v330, %v331
    %333 = xla_tuple %v329, %v332
    %334 = vadd.xlane.f32.xlu0 %v329
    %v335 = vpop.xlane.xlu0 %334
    %336 = vadd.xlane.f32.xlu0 %v332
    %v337 = vpop.xlane.xlu0 %336
    %v338 = vsel %vm324, %v335, %v313
    %v339 = vsel %vm324, %v337, %v314
    %s340 = scalar_lea.vmem [#allocation0], 8
    %s341 = scalar_lea.vmem [#allocation1], 8
    %v342 = vld [vmem:[%s340] ss:$0 sm:$0xff]
    %v343 = vld [vmem:[%s341] ss:$0 sm:$0xff]
    %vm344 = vcmask 261120
    %v345 = vsel %vm344, %v342, 0.0
    %v346 = vsel %vm344, %v343, 0.0
    %v347 = vlaneseq
    %v348 = vand.u32 %v347, 127
    %vm349 = vcmp.eq.s32.totalorder %v348, 8
    %350 = xla_tuple %v345, %v346
    %351 = xla_tuple %v338, %v339
    %v352 = vmul.f32 %v345, %v338
    %v353 = vmul.f32 %v346, %v339
    %v354 = vsub.f32 %v352, %v353
    %v355 = vmul.f32 %v345, %v339
    %v356 = vmul.f32 %v346, %v338
    %v357 = vadd.f32 %v355, %v356
    %358 = xla_tuple %v354, %v357
    %359 = vadd.xlane.f32.xlu0 %v354
    %v360 = vpop.xlane.xlu0 %359
    %361 = vadd.xlane.f32.xlu0 %v357
    %v362 = vpop.xlane.xlu0 %361
    %v363 = vsel %vm349, %v360, %v338
    %v364 = vsel %vm349, %v362, %v339
    %365 = xla_tuple %v345, %v346
    %366 = xla_tuple %v150, 0.0
    %v367 = vmul.f32 %v345, %v150
    %v368 = vmul.f32 %v346, 0.0
    %v369 = vsub.f32 %v367, %v368
    %v370 = vmul.f32 %v345, 0.0
    %v371 = vmul.f32 %v346, %v150
    %v372 = vadd.f32 %v370, %v371
    %373 = xla_tuple %v369, %v372
    %374 = vadd.xlane.f32.xlu0 %v369
    %v375 = vpop.xlane.xlu0 %374
    %376 = vadd.xlane.f32.xlu0 %v372
    %v377 = vpop.xlane.xlu0 %376
    %v378 = vsel %vm349, %v375, %v150
    %v379 = vsel %vm349, %v377, 0.0
    %s380 = scalar_lea.vmem [#allocation0], 9
    %s381 = scalar_lea.vmem [#allocation1], 9
    %v382 = vld [vmem:[%s380] ss:$0 sm:$0xff]
    %v383 = vld [vmem:[%s381] ss:$0 sm:$0xff]
    %vm384 = vcmask 261120
    %v385 = vsel %vm384, %v382, 0.0
    %v386 = vsel %vm384, %v383, 0.0
    %v387 = vlaneseq
    %v388 = vand.u32 %v387, 127
    %vm389 = vcmp.eq.s32.totalorder %v388, 9
    %390 = xla_tuple %v385, %v386
    %391 = xla_tuple %v363, %v364
    %v392 = vmul.f32 %v385, %v363
    %v393 = vmul.f32 %v386, %v364
    %v394 = vsub.f32 %v392, %v393
    %v395 = vmul.f32 %v385, %v364
    %v396 = vmul.f32 %v386, %v363
    %v397 = vadd.f32 %v395, %v396
    %398 = xla_tuple %v394, %v397
    %399 = vadd.xlane.f32.xlu0 %v394
    %v400 = vpop.xlane.xlu0 %399
    %401 = vadd.xlane.f32.xlu0 %v397
    %v402 = vpop.xlane.xlu0 %401
    %v403 = vsel %vm389, %v400, %v363
    %v404 = vsel %vm389, %v402, %v364
    %405 = xla_tuple %v385, %v386
    %406 = xla_tuple %v378, %v379
    %v407 = vmul.f32 %v385, %v378
    %v408 = vmul.f32 %v386, %v379
    %v409 = vsub.f32 %v407, %v408
    %v410 = vmul.f32 %v385, %v379
    %v411 = vmul.f32 %v386, %v378
    %v412 = vadd.f32 %v410, %v411
    %413 = xla_tuple %v409, %v412
    %414 = vadd.xlane.f32.xlu0 %v409
    %v415 = vpop.xlane.xlu0 %414
    %416 = vadd.xlane.f32.xlu0 %v412
    %v417 = vpop.xlane.xlu0 %416
    %v418 = vsel %vm389, %v415, %v378
    %v419 = vsel %vm389, %v417, %v379
    %s420 = scalar_lea.vmem [#allocation0], 10
    %s421 = scalar_lea.vmem [#allocation1], 10
    %v422 = vld [vmem:[%s420] ss:$0 sm:$0xff]
    %v423 = vld [vmem:[%s421] ss:$0 sm:$0xff]
    %vm424 = vcmask 261120
    %v425 = vsel %vm424, %v422, 0.0
    %v426 = vsel %vm424, %v423, 0.0
    %v427 = vlaneseq
    %v428 = vand.u32 %v427, 127
    %vm429 = vcmp.eq.s32.totalorder %v428, 10
    %430 = xla_tuple %v425, %v426
    %431 = xla_tuple %v403, %v404
    %v432 = vmul.f32 %v425, %v403
    %v433 = vmul.f32 %v426, %v404
    %v434 = vsub.f32 %v432, %v433
    %v435 = vmul.f32 %v425, %v404
    %v436 = vmul.f32 %v426, %v403
    %v437 = vadd.f32 %v435, %v436
    %438 = xla_tuple %v434, %v437
    %439 = vadd.xlane.f32.xlu0 %v434
    %v440 = vpop.xlane.xlu0 %439
    %441 = vadd.xlane.f32.xlu0 %v437
    %v442 = vpop.xlane.xlu0 %441
    %v443 = vsel %vm429, %v440, %v403
    %v444 = vsel %vm429, %v442, %v404
    %445 = xla_tuple %v425, %v426
    %446 = xla_tuple %v418, %v419
    %v447 = vmul.f32 %v425, %v418
    %v448 = vmul.f32 %v426, %v419
    %v449 = vsub.f32 %v447, %v448
    %v450 = vmul.f32 %v425, %v419
    %v451 = vmul.f32 %v426, %v418
    %v452 = vadd.f32 %v450, %v451
    %453 = xla_tuple %v449, %v452
    %454 = vadd.xlane.f32.xlu0 %v449
    %v455 = vpop.xlane.xlu0 %454
    %456 = vadd.xlane.f32.xlu0 %v452
    %v457 = vpop.xlane.xlu0 %456
    %v458 = vsel %vm429, %v455, %v418
    %v459 = vsel %vm429, %v457, %v419
    %s460 = scalar_lea.vmem [#allocation0], 11
    %s461 = scalar_lea.vmem [#allocation1], 11
    %v462 = vld [vmem:[%s460] ss:$0 sm:$0xff]
    %v463 = vld [vmem:[%s461] ss:$0 sm:$0xff]
    %vm464 = vcmask 261120
    %v465 = vsel %vm464, %v462, 0.0
    %v466 = vsel %vm464, %v463, 0.0
    %v467 = vlaneseq
    %v468 = vand.u32 %v467, 127
    %vm469 = vcmp.eq.s32.totalorder %v468, 11
    %470 = xla_tuple %v465, %v466
    %471 = xla_tuple %v443, %v444
    %v472 = vmul.f32 %v465, %v443
    %v473 = vmul.f32 %v466, %v444
    %v474 = vsub.f32 %v472, %v473
    %v475 = vmul.f32 %v465, %v444
    %v476 = vmul.f32 %v466, %v443
    %v477 = vadd.f32 %v475, %v476
    %478 = xla_tuple %v474, %v477
    %479 = vadd.xlane.f32.xlu0 %v474
    %v480 = vpop.xlane.xlu0 %479
    %481 = vadd.xlane.f32.xlu0 %v477
    %v482 = vpop.xlane.xlu0 %481
    %v483 = vsel %vm469, %v480, %v443
    %v484 = vsel %vm469, %v482, %v444
    %485 = xla_tuple %v465, %v466
    %486 = xla_tuple %v458, %v459
    %v487 = vmul.f32 %v465, %v458
    %v488 = vmul.f32 %v466, %v459
    %v489 = vsub.f32 %v487, %v488
    %v490 = vmul.f32 %v465, %v459
    %v491 = vmul.f32 %v466, %v458
    %v492 = vadd.f32 %v490, %v491
    %493 = xla_tuple %v489, %v492
    %494 = vadd.xlane.f32.xlu0 %v489
    %v495 = vpop.xlane.xlu0 %494
    %496 = vadd.xlane.f32.xlu0 %v492
    %v497 = vpop.xlane.xlu0 %496
    %v498 = vsel %vm469, %v495, %v458
    %v499 = vsel %vm469, %v497, %v459
    %s500 = scalar_lea.vmem [#allocation0], 12
    %s501 = scalar_lea.vmem [#allocation1], 12
    %v502 = vld [vmem:[%s500] ss:$0 sm:$0xff]
    %v503 = vld [vmem:[%s501] ss:$0 sm:$0xff]
    %vm504 = vcmask 261120
    %v505 = vsel %vm504, %v502, 0.0
    %v506 = vsel %vm504, %v503, 0.0
    %v507 = vlaneseq
    %v508 = vand.u32 %v507, 127
    %vm509 = vcmp.eq.s32.totalorder %v508, 12
    %510 = xla_tuple %v505, %v506
    %511 = xla_tuple %v483, %v484
    %v512 = vmul.f32 %v505, %v483
    %v513 = vmul.f32 %v506, %v484
    %v514 = vsub.f32 %v512, %v513
    %v515 = vmul.f32 %v505, %v484
    %v516 = vmul.f32 %v506, %v483
    %v517 = vadd.f32 %v515, %v516
    %518 = xla_tuple %v514, %v517
    %519 = vadd.xlane.f32.xlu0 %v514
    %v520 = vpop.xlane.xlu0 %519
    %521 = vadd.xlane.f32.xlu0 %v517
    %v522 = vpop.xlane.xlu0 %521
    %v523 = vsel %vm509, %v520, %v483
    %v524 = vsel %vm509, %v522, %v484
    %525 = xla_tuple %v505, %v506
    %526 = xla_tuple %v498, %v499
    %v527 = vmul.f32 %v505, %v498
    %v528 = vmul.f32 %v506, %v499
    %v529 = vsub.f32 %v527, %v528
    %v530 = vmul.f32 %v505, %v499
    %v531 = vmul.f32 %v506, %v498
    %v532 = vadd.f32 %v530, %v531
    %533 = xla_tuple %v529, %v532
    %534 = vadd.xlane.f32.xlu0 %v529
    %v535 = vpop.xlane.xlu0 %534
    %536 = vadd.xlane.f32.xlu0 %v532
    %v537 = vpop.xlane.xlu0 %536
    %v538 = vsel %vm509, %v535, %v498
    %v539 = vsel %vm509, %v537, %v499
    %s540 = scalar_lea.vmem [#allocation0], 13
    %s541 = scalar_lea.vmem [#allocation1], 13
    %v542 = vld [vmem:[%s540] ss:$0 sm:$0xff]
    %v543 = vld [vmem:[%s541] ss:$0 sm:$0xff]
    %vm544 = vcmask 261120
    %v545 = vsel %vm544, %v542, 0.0
    %v546 = vsel %vm544, %v543, 0.0
    %v547 = vlaneseq
    %v548 = vand.u32 %v547, 127
    %vm549 = vcmp.eq.s32.totalorder %v548, 13
    %550 = xla_tuple %v545, %v546
    %551 = xla_tuple %v523, %v524
    %v552 = vmul.f32 %v545, %v523
    %v553 = vmul.f32 %v546, %v524
    %v554 = vsub.f32 %v552, %v553
    %v555 = vmul.f32 %v545, %v524
    %v556 = vmul.f32 %v546, %v523
    %v557 = vadd.f32 %v555, %v556
    %558 = xla_tuple %v554, %v557
    %559 = vadd.xlane.f32.xlu0 %v554
    %v560 = vpop.xlane.xlu0 %559
    %561 = vadd.xlane.f32.xlu0 %v557
    %v562 = vpop.xlane.xlu0 %561
    %v563 = vsel %vm549, %v560, %v523
    %v564 = vsel %vm549, %v562, %v524
    %565 = xla_tuple %v545, %v546
    %566 = xla_tuple %v538, %v539
    %v567 = vmul.f32 %v545, %v538
    %v568 = vmul.f32 %v546, %v539
    %v569 = vsub.f32 %v567, %v568
    %v570 = vmul.f32 %v545, %v539
    %v571 = vmul.f32 %v546, %v538
    %v572 = vadd.f32 %v570, %v571
    %573 = xla_tuple %v569, %v572
    %574 = vadd.xlane.f32.xlu0 %v569
    %v575 = vpop.xlane.xlu0 %574
    %576 = vadd.xlane.f32.xlu0 %v572
    %v577 = vpop.xlane.xlu0 %576
    %v578 = vsel %vm549, %v575, %v538
    %v579 = vsel %vm549, %v577, %v539
    %s580 = scalar_lea.vmem [#allocation0], 14
    %s581 = scalar_lea.vmem [#allocation1], 14
    %v582 = vld [vmem:[%s580] ss:$0 sm:$0xff]
    %v583 = vld [vmem:[%s581] ss:$0 sm:$0xff]
    %vm584 = vcmask 261120
    %v585 = vsel %vm584, %v582, 0.0
    %v586 = vsel %vm584, %v583, 0.0
    %v587 = vlaneseq
    %v588 = vand.u32 %v587, 127
    %vm589 = vcmp.eq.s32.totalorder %v588, 14
    %590 = xla_tuple %v585, %v586
    %591 = xla_tuple %v563, %v564
    %v592 = vmul.f32 %v585, %v563
    %v593 = vmul.f32 %v586, %v564
    %v594 = vsub.f32 %v592, %v593
    %v595 = vmul.f32 %v585, %v564
    %v596 = vmul.f32 %v586, %v563
    %v597 = vadd.f32 %v595, %v596
    %598 = xla_tuple %v594, %v597
    %599 = vadd.xlane.f32.xlu0 %v594
    %v600 = vpop.xlane.xlu0 %599
    %601 = vadd.xlane.f32.xlu0 %v597
    %v602 = vpop.xlane.xlu0 %601
    %v603 = vsel %vm589, %v600, %v563
    %v604 = vsel %vm589, %v602, %v564
    %605 = xla_tuple %v585, %v586
    %606 = xla_tuple %v578, %v579
    %v607 = vmul.f32 %v585, %v578
    %v608 = vmul.f32 %v586, %v579
    %v609 = vsub.f32 %v607, %v608
    %v610 = vmul.f32 %v585, %v579
    %v611 = vmul.f32 %v586, %v578
    %v612 = vadd.f32 %v610, %v611
    %613 = xla_tuple %v609, %v612
    %614 = vadd.xlane.f32.xlu0 %v609
    %v615 = vpop.xlane.xlu0 %614
    %616 = vadd.xlane.f32.xlu0 %v612
    %v617 = vpop.xlane.xlu0 %616
    %v618 = vsel %vm589, %v615, %v578
    %v619 = vsel %vm589, %v617, %v579
    %s620 = scalar_lea.vmem [#allocation0], 15
    %s621 = scalar_lea.vmem [#allocation1], 15
    %v622 = vld [vmem:[%s620] ss:$0 sm:$0xff]
    %v623 = vld [vmem:[%s621] ss:$0 sm:$0xff]
    %vm624 = vcmask 261120
    %v625 = vsel %vm624, %v622, 0.0
    %v626 = vsel %vm624, %v623, 0.0
    %v627 = vlaneseq
    %v628 = vand.u32 %v627, 127
    %vm629 = vcmp.eq.s32.totalorder %v628, 15
    %630 = xla_tuple %v625, %v626
    %631 = xla_tuple %v603, %v604
    %v632 = vmul.f32 %v625, %v603
    %v633 = vmul.f32 %v626, %v604
    %v634 = vsub.f32 %v632, %v633
    %v635 = vmul.f32 %v625, %v604
    %v636 = vmul.f32 %v626, %v603
    %v637 = vadd.f32 %v635, %v636
    %638 = xla_tuple %v634, %v637
    %639 = vadd.xlane.f32.xlu0 %v634
    %v640 = vpop.xlane.xlu0 %639
    %641 = vadd.xlane.f32.xlu0 %v637
    %v642 = vpop.xlane.xlu0 %641
    %v643 = vsel %vm629, %v640, %v603
    %v644 = vsel %vm629, %v642, %v604
    %645 = xla_tuple %v625, %v626
    %646 = xla_tuple %v618, %v619
    %v647 = vmul.f32 %v625, %v618
    %v648 = vmul.f32 %v626, %v619
    %v649 = vsub.f32 %v647, %v648
    %v650 = vmul.f32 %v625, %v619
    %v651 = vmul.f32 %v626, %v618
    %v652 = vadd.f32 %v650, %v651
    %653 = xla_tuple %v649, %v652
    %654 = vadd.xlane.f32.xlu0 %v649
    %v655 = vpop.xlane.xlu0 %654
    %656 = vadd.xlane.f32.xlu0 %v652
    %v657 = vpop.xlane.xlu0 %656
    %v658 = vsel %vm629, %v655, %v618
    %v659 = vsel %vm629, %v657, %v619
    %s660 = scalar_lea.vmem [#allocation0], 16
    %s661 = scalar_lea.vmem [#allocation1], 16
    %v662 = vld [vmem:[%s660] ss:$0 sm:$0xff]
    %v663 = vld [vmem:[%s661] ss:$0 sm:$0xff]
    %vm664 = vcmask 261120
    %v665 = vsel %vm664, %v662, 0.0
    %v666 = vsel %vm664, %v663, 0.0
    %v667 = vlaneseq
    %v668 = vand.u32 %v667, 127
    %vm669 = vcmp.eq.s32.totalorder %v668, 16
    %670 = xla_tuple %v665, %v666
    %671 = xla_tuple %v643, %v644
    %v672 = vmul.f32 %v665, %v643
    %v673 = vmul.f32 %v666, %v644
    %v674 = vsub.f32 %v672, %v673
    %v675 = vmul.f32 %v665, %v644
    %v676 = vmul.f32 %v666, %v643
    %v677 = vadd.f32 %v675, %v676
    %678 = xla_tuple %v674, %v677
    %679 = vadd.xlane.f32.xlu0 %v674
    %v680 = vpop.xlane.xlu0 %679
    %681 = vadd.xlane.f32.xlu0 %v677
    %v682 = vpop.xlane.xlu0 %681
    %v683 = vsel %vm669, %v680, %v643
    %v684 = vsel %vm669, %v682, %v644
    %685 = xla_tuple %v665, %v666
    %686 = xla_tuple %v658, %v659
    %v687 = vmul.f32 %v665, %v658
    %v688 = vmul.f32 %v666, %v659
    %v689 = vsub.f32 %v687, %v688
    %v690 = vmul.f32 %v665, %v659
    %v691 = vmul.f32 %v666, %v658
    %v692 = vadd.f32 %v690, %v691
    %693 = xla_tuple %v689, %v692
    %694 = vadd.xlane.f32.xlu0 %v689
    %v695 = vpop.xlane.xlu0 %694
    %696 = vadd.xlane.f32.xlu0 %v692
    %v697 = vpop.xlane.xlu0 %696
    %v698 = vsel %vm669, %v695, %v658
    %v699 = vsel %vm669, %v697, %v659
    %700 = xla_tuple %v665, %v666
    %701 = xla_tuple %v157, 0.0
    %v702 = vmul.f32 %v665, %v157
    %v703 = vmul.f32 %v666, 0.0
    %v704 = vsub.f32 %v702, %v703
    %v705 = vmul.f32 %v665, 0.0
    %v706 = vmul.f32 %v666, %v157
    %v707 = vadd.f32 %v705, %v706
    %708 = xla_tuple %v704, %v707
    %709 = vadd.xlane.f32.xlu0 %v704
    %v710 = vpop.xlane.xlu0 %709
    %711 = vadd.xlane.f32.xlu0 %v707
    %v712 = vpop.xlane.xlu0 %711
    %v713 = vsel %vm669, %v710, %v157
    %v714 = vsel %vm669, %v712, 0.0
    %s715 = scalar_lea.vmem [#allocation0], 17
    %s716 = scalar_lea.vmem [#allocation1], 17
    %v717 = vld [vmem:[%s715] ss:$0 sm:$0xff]
    %v718 = vld [vmem:[%s716] ss:$0 sm:$0xff]
    %vm719 = vcmask 261120
    %v720 = vsel %vm719, %v717, 0.0
    %v721 = vsel %vm719, %v718, 0.0
    %v722 = vlaneseq
    %v723 = vand.u32 %v722, 127
    %vm724 = vcmp.eq.s32.totalorder %v723, 17
    %725 = xla_tuple %v720, %v721
    %726 = xla_tuple %v683, %v684
    %v727 = vmul.f32 %v720, %v683
    %v728 = vmul.f32 %v721, %v684
    %v729 = vsub.f32 %v727, %v728
    %v730 = vmul.f32 %v720, %v684
    %v731 = vmul.f32 %v721, %v683
    %v732 = vadd.f32 %v730, %v731
    %733 = xla_tuple %v729, %v732
    %734 = vadd.xlane.f32.xlu0 %v729
    %v735 = vpop.xlane.xlu0 %734
    %736 = vadd.xlane.f32.xlu0 %v732
    %v737 = vpop.xlane.xlu0 %736
    %v738 = vsel %vm724, %v735, %v683
    %v739 = vsel %vm724, %v737, %v684
    %740 = xla_tuple %v720, %v721
    %741 = xla_tuple %v698, %v699
    %v742 = vmul.f32 %v720, %v698
    %v743 = vmul.f32 %v721, %v699
    %v744 = vsub.f32 %v742, %v743
    %v745 = vmul.f32 %v720, %v699
    %v746 = vmul.f32 %v721, %v698
    %v747 = vadd.f32 %v745, %v746
    %748 = xla_tuple %v744, %v747
    %749 = vadd.xlane.f32.xlu0 %v744
    %v750 = vpop.xlane.xlu0 %749
    %751 = vadd.xlane.f32.xlu0 %v747
    %v752 = vpop.xlane.xlu0 %751
    %v753 = vsel %vm724, %v750, %v698
    %v754 = vsel %vm724, %v752, %v699
    %755 = xla_tuple %v720, %v721
    %756 = xla_tuple %v713, %v714
    %v757 = vmul.f32 %v720, %v713
    %v758 = vmul.f32 %v721, %v714
    %v759 = vsub.f32 %v757, %v758
    %v760 = vmul.f32 %v720, %v714
    %v761 = vmul.f32 %v721, %v713
    %v762 = vadd.f32 %v760, %v761
    %763 = xla_tuple %v759, %v762
    %764 = vadd.xlane.f32.xlu0 %v759
    %v765 = vpop.xlane.xlu0 %764
    %766 = vadd.xlane.f32.xlu0 %v762
    %v767 = vpop.xlane.xlu0 %766
    %v768 = vsel %vm724, %v765, %v713
    %v769 = vsel %vm724, %v767, %v714
    %s770 = scalar_lea.vmem [#allocation0], 18
    %s771 = scalar_lea.vmem [#allocation1], 18
    %v772 = vld [vmem:[%s770] ss:$0 sm:$0xff]
    %v773 = vld [vmem:[%s771] ss:$0 sm:$0xff]
    %vm774 = vcmask 261120
    %v775 = vsel %vm774, %v772, 0.0
    %v776 = vsel %vm774, %v773, 0.0
    %v777 = vlaneseq
    %v778 = vand.u32 %v777, 127
    %vm779 = vcmp.eq.s32.totalorder %v778, 18
    %780 = xla_tuple %v775, %v776
    %781 = xla_tuple %v738, %v739
    %v782 = vmul.f32 %v775, %v738
    %v783 = vmul.f32 %v776, %v739
    %v784 = vsub.f32 %v782, %v783
    %v785 = vmul.f32 %v775, %v739
    %v786 = vmul.f32 %v776, %v738
    %v787 = vadd.f32 %v785, %v786
    %788 = xla_tuple %v784, %v787
    %789 = vadd.xlane.f32.xlu0 %v784
    %v790 = vpop.xlane.xlu0 %789
    %791 = vadd.xlane.f32.xlu0 %v787
    %v792 = vpop.xlane.xlu0 %791
    %v793 = vsel %vm779, %v790, %v738
    %v794 = vsel %vm779, %v792, %v739
    %795 = xla_tuple %v775, %v776
    %796 = xla_tuple %v753, %v754
    %v797 = vmul.f32 %v775, %v753
    %v798 = vmul.f32 %v776, %v754
    %v799 = vsub.f32 %v797, %v798
    %v800 = vmul.f32 %v775, %v754
    %v801 = vmul.f32 %v776, %v753
    %v802 = vadd.f32 %v800, %v801
    %803 = xla_tuple %v799, %v802
    %804 = vadd.xlane.f32.xlu0 %v799
    %v805 = vpop.xlane.xlu0 %804
    %806 = vadd.xlane.f32.xlu0 %v802
    %v807 = vpop.xlane.xlu0 %806
    %v808 = vsel %vm779, %v805, %v753
    %v809 = vsel %vm779, %v807, %v754
    %810 = xla_tuple %v775, %v776
    %811 = xla_tuple %v768, %v769
    %v812 = vmul.f32 %v775, %v768
    %v813 = vmul.f32 %v776, %v769
    %v814 = vsub.f32 %v812, %v813
    %v815 = vmul.f32 %v775, %v769
    %v816 = vmul.f32 %v776, %v768
    %v817 = vadd.f32 %v815, %v816
    %818 = xla_tuple %v814, %v817
    %819 = vadd.xlane.f32.xlu0 %v814
    %v820 = vpop.xlane.xlu0 %819
    %821 = vadd.xlane.f32.xlu0 %v817
    %v822 = vpop.xlane.xlu0 %821
    %v823 = vsel %vm779, %v820, %v768
    %v824 = vsel %vm779, %v822, %v769
    %s825 = scalar_lea.vmem [#allocation0], 19
    %s826 = scalar_lea.vmem [#allocation1], 19
    %v827 = vld [vmem:[%s825] ss:$0 sm:$0xff]
    %v828 = vld [vmem:[%s826] ss:$0 sm:$0xff]
    %vm829 = vcmask 261120
    %v830 = vsel %vm829, %v827, 0.0
    %v831 = vsel %vm829, %v828, 0.0
    %v832 = vlaneseq
    %v833 = vand.u32 %v832, 127
    %vm834 = vcmp.eq.s32.totalorder %v833, 19
    %835 = xla_tuple %v830, %v831
    %836 = xla_tuple %v793, %v794
    %v837 = vmul.f32 %v830, %v793
    %v838 = vmul.f32 %v831, %v794
    %v839 = vsub.f32 %v837, %v838
    %v840 = vmul.f32 %v830, %v794
    %v841 = vmul.f32 %v831, %v793
    %v842 = vadd.f32 %v840, %v841
    %843 = xla_tuple %v839, %v842
    %844 = vadd.xlane.f32.xlu0 %v839
    %v845 = vpop.xlane.xlu0 %844
    %846 = vadd.xlane.f32.xlu0 %v842
    %v847 = vpop.xlane.xlu0 %846
    %v848 = vsel %vm834, %v845, %v793
    %v849 = vsel %vm834, %v847, %v794
    %850 = xla_tuple %v830, %v831
    %851 = xla_tuple %v808, %v809
    %v852 = vmul.f32 %v830, %v808
    %v853 = vmul.f32 %v831, %v809
    %v854 = vsub.f32 %v852, %v853
    %v855 = vmul.f32 %v830, %v809
    %v856 = vmul.f32 %v831, %v808
    %v857 = vadd.f32 %v855, %v856
    %858 = xla_tuple %v854, %v857
    %859 = vadd.xlane.f32.xlu0 %v854
    %v860 = vpop.xlane.xlu0 %859
    %861 = vadd.xlane.f32.xlu0 %v857
    %v862 = vpop.xlane.xlu0 %861
    %v863 = vsel %vm834, %v860, %v808
    %v864 = vsel %vm834, %v862, %v809
    %865 = xla_tuple %v830, %v831
    %866 = xla_tuple %v823, %v824
    %v867 = vmul.f32 %v830, %v823
    %v868 = vmul.f32 %v831, %v824
    %v869 = vsub.f32 %v867, %v868
    %v870 = vmul.f32 %v830, %v824
    %v871 = vmul.f32 %v831, %v823
    %v872 = vadd.f32 %v870, %v871
    %873 = xla_tuple %v869, %v872
    %874 = vadd.xlane.f32.xlu0 %v869
    %v875 = vpop.xlane.xlu0 %874
    %876 = vadd.xlane.f32.xlu0 %v872
    %v877 = vpop.xlane.xlu0 %876
    %v878 = vsel %vm834, %v875, %v823
    %v879 = vsel %vm834, %v877, %v824
    %s880 = scalar_lea.vmem [#allocation0], 20
    %s881 = scalar_lea.vmem [#allocation1], 20
    %v882 = vld [vmem:[%s880] ss:$0 sm:$0xff]
    %v883 = vld [vmem:[%s881] ss:$0 sm:$0xff]
    %vm884 = vcmask 261120
    %v885 = vsel %vm884, %v882, 0.0
    %v886 = vsel %vm884, %v883, 0.0
    %v887 = vlaneseq
    %v888 = vand.u32 %v887, 127
    %vm889 = vcmp.eq.s32.totalorder %v888, 20
    %890 = xla_tuple %v885, %v886
    %891 = xla_tuple %v848, %v849
    %v892 = vmul.f32 %v885, %v848
    %v893 = vmul.f32 %v886, %v849
    %v894 = vsub.f32 %v892, %v893
    %v895 = vmul.f32 %v885, %v849
    %v896 = vmul.f32 %v886, %v848
    %v897 = vadd.f32 %v895, %v896
    %898 = xla_tuple %v894, %v897
    %899 = vadd.xlane.f32.xlu0 %v894
    %v900 = vpop.xlane.xlu0 %899
    %901 = vadd.xlane.f32.xlu0 %v897
    %v902 = vpop.xlane.xlu0 %901
    %v903 = vsel %vm889, %v900, %v848
    %v904 = vsel %vm889, %v902, %v849
    %905 = xla_tuple %v885, %v886
    %906 = xla_tuple %v863, %v864
    %v907 = vmul.f32 %v885, %v863
    %v908 = vmul.f32 %v886, %v864
    %v909 = vsub.f32 %v907, %v908
    %v910 = vmul.f32 %v885, %v864
    %v911 = vmul.f32 %v886, %v863
    %v912 = vadd.f32 %v910, %v911
    %913 = xla_tuple %v909, %v912
    %914 = vadd.xlane.f32.xlu0 %v909
    %v915 = vpop.xlane.xlu0 %914
    %916 = vadd.xlane.f32.xlu0 %v912
    %v917 = vpop.xlane.xlu0 %916
    %v918 = vsel %vm889, %v915, %v863
    %v919 = vsel %vm889, %v917, %v864
    %920 = xla_tuple %v885, %v886
    %921 = xla_tuple %v878, %v879
    %v922 = vmul.f32 %v885, %v878
    %v923 = vmul.f32 %v886, %v879
    %v924 = vsub.f32 %v922, %v923
    %v925 = vmul.f32 %v885, %v879
    %v926 = vmul.f32 %v886, %v878
    %v927 = vadd.f32 %v925, %v926
    %928 = xla_tuple %v924, %v927
    %929 = vadd.xlane.f32.xlu0 %v924
    %v930 = vpop.xlane.xlu0 %929
    %931 = vadd.xlane.f32.xlu0 %v927
    %v932 = vpop.xlane.xlu0 %931
    %v933 = vsel %vm889, %v930, %v878
    %v934 = vsel %vm889, %v932, %v879
    %s935 = scalar_lea.vmem [#allocation0], 21
    %s936 = scalar_lea.vmem [#allocation1], 21
    %v937 = vld [vmem:[%s935] ss:$0 sm:$0xff]
    %v938 = vld [vmem:[%s936] ss:$0 sm:$0xff]
    %vm939 = vcmask 261120
    %v940 = vsel %vm939, %v937, 0.0
    %v941 = vsel %vm939, %v938, 0.0
    %v942 = vlaneseq
    %v943 = vand.u32 %v942, 127
    %vm944 = vcmp.eq.s32.totalorder %v943, 21
    %945 = xla_tuple %v940, %v941
    %946 = xla_tuple %v903, %v904
    %v947 = vmul.f32 %v940, %v903
    %v948 = vmul.f32 %v941, %v904
    %v949 = vsub.f32 %v947, %v948
    %v950 = vmul.f32 %v940, %v904
    %v951 = vmul.f32 %v941, %v903
    %v952 = vadd.f32 %v950, %v951
    %953 = xla_tuple %v949, %v952
    %954 = vadd.xlane.f32.xlu0 %v949
    %v955 = vpop.xlane.xlu0 %954
    %956 = vadd.xlane.f32.xlu0 %v952
    %v957 = vpop.xlane.xlu0 %956
    %v958 = vsel %vm944, %v955, %v903
    %v959 = vsel %vm944, %v957, %v904
    %960 = xla_tuple %v940, %v941
    %961 = xla_tuple %v918, %v919
    %v962 = vmul.f32 %v940, %v918
    %v963 = vmul.f32 %v941, %v919
    %v964 = vsub.f32 %v962, %v963
    %v965 = vmul.f32 %v940, %v919
    %v966 = vmul.f32 %v941, %v918
    %v967 = vadd.f32 %v965, %v966
    %968 = xla_tuple %v964, %v967
    %969 = vadd.xlane.f32.xlu0 %v964
    %v970 = vpop.xlane.xlu0 %969
    %971 = vadd.xlane.f32.xlu0 %v967
    %v972 = vpop.xlane.xlu0 %971
    %v973 = vsel %vm944, %v970, %v918
    %v974 = vsel %vm944, %v972, %v919
    %975 = xla_tuple %v940, %v941
    %976 = xla_tuple %v933, %v934
    %v977 = vmul.f32 %v940, %v933
    %v978 = vmul.f32 %v941, %v934
    %v979 = vsub.f32 %v977, %v978
    %v980 = vmul.f32 %v940, %v934
    %v981 = vmul.f32 %v941, %v933
    %v982 = vadd.f32 %v980, %v981
    %983 = xla_tuple %v979, %v982
    %984 = vadd.xlane.f32.xlu0 %v979
    %v985 = vpop.xlane.xlu0 %984
    %986 = vadd.xlane.f32.xlu0 %v982
    %v987 = vpop.xlane.xlu0 %986
    %v988 = vsel %vm944, %v985, %v933
    %v989 = vsel %vm944, %v987, %v934
    %s990 = scalar_lea.vmem [#allocation0], 22
    %s991 = scalar_lea.vmem [#allocation1], 22
    %v992 = vld [vmem:[%s990] ss:$0 sm:$0xff]
    %v993 = vld [vmem:[%s991] ss:$0 sm:$0xff]
    %vm994 = vcmask 261120
    %v995 = vsel %vm994, %v992, 0.0
    %v996 = vsel %vm994, %v993, 0.0
    %v997 = vlaneseq
    %v998 = vand.u32 %v997, 127
    %vm999 = vcmp.eq.s32.totalorder %v998, 22
    %1000 = xla_tuple %v995, %v996
    %1001 = xla_tuple %v958, %v959
    %v1002 = vmul.f32 %v995, %v958
    %v1003 = vmul.f32 %v996, %v959
    %v1004 = vsub.f32 %v1002, %v1003
    %v1005 = vmul.f32 %v995, %v959
    %v1006 = vmul.f32 %v996, %v958
    %v1007 = vadd.f32 %v1005, %v1006
    %1008 = xla_tuple %v1004, %v1007
    %1009 = vadd.xlane.f32.xlu0 %v1004
    %v1010 = vpop.xlane.xlu0 %1009
    %1011 = vadd.xlane.f32.xlu0 %v1007
    %v1012 = vpop.xlane.xlu0 %1011
    %v1013 = vsel %vm999, %v1010, %v958
    %v1014 = vsel %vm999, %v1012, %v959
    %1015 = xla_tuple %v995, %v996
    %1016 = xla_tuple %v973, %v974
    %v1017 = vmul.f32 %v995, %v973
    %v1018 = vmul.f32 %v996, %v974
    %v1019 = vsub.f32 %v1017, %v1018
    %v1020 = vmul.f32 %v995, %v974
    %v1021 = vmul.f32 %v996, %v973
    %v1022 = vadd.f32 %v1020, %v1021
    %1023 = xla_tuple %v1019, %v1022
    %1024 = vadd.xlane.f32.xlu0 %v1019
    %v1025 = vpop.xlane.xlu0 %1024
    %1026 = vadd.xlane.f32.xlu0 %v1022
    %v1027 = vpop.xlane.xlu0 %1026
    %v1028 = vsel %vm999, %v1025, %v973
    %v1029 = vsel %vm999, %v1027, %v974
    %1030 = xla_tuple %v995, %v996
    %1031 = xla_tuple %v988, %v989
    %v1032 = vmul.f32 %v995, %v988
    %v1033 = vmul.f32 %v996, %v989
    %v1034 = vsub.f32 %v1032, %v1033
    %v1035 = vmul.f32 %v995, %v989
    %v1036 = vmul.f32 %v996, %v988
    %v1037 = vadd.f32 %v1035, %v1036
    %1038 = xla_tuple %v1034, %v1037
    %1039 = vadd.xlane.f32.xlu0 %v1034
    %v1040 = vpop.xlane.xlu0 %1039
    %1041 = vadd.xlane.f32.xlu0 %v1037
    %v1042 = vpop.xlane.xlu0 %1041
    %v1043 = vsel %vm999, %v1040, %v988
    %v1044 = vsel %vm999, %v1042, %v989
    %s1045 = scalar_lea.vmem [#allocation0], 23
    %s1046 = scalar_lea.vmem [#allocation1], 23
    %v1047 = vld [vmem:[%s1045] ss:$0 sm:$0xff]
    %v1048 = vld [vmem:[%s1046] ss:$0 sm:$0xff]
    %vm1049 = vcmask 261120
    %v1050 = vsel %vm1049, %v1047, 0.0
    %v1051 = vsel %vm1049, %v1048, 0.0
    %v1052 = vlaneseq
    %v1053 = vand.u32 %v1052, 127
    %vm1054 = vcmp.eq.s32.totalorder %v1053, 23
    %1055 = xla_tuple %v1050, %v1051
    %1056 = xla_tuple %v1013, %v1014
    %v1057 = vmul.f32 %v1050, %v1013
    %v1058 = vmul.f32 %v1051, %v1014
    %v1059 = vsub.f32 %v1057, %v1058
    %v1060 = vmul.f32 %v1050, %v1014
    %v1061 = vmul.f32 %v1051, %v1013
    %v1062 = vadd.f32 %v1060, %v1061
    %1063 = xla_tuple %v1059, %v1062
    %1064 = vadd.xlane.f32.xlu0 %v1059
    %v1065 = vpop.xlane.xlu0 %1064
    %1066 = vadd.xlane.f32.xlu0 %v1062
    %v1067 = vpop.xlane.xlu0 %1066
    %v1068 = vsel %vm1054, %v1065, %v1013
    %v1069 = vsel %vm1054, %v1067, %v1014
    %1070 = xla_tuple %v1050, %v1051
    %1071 = xla_tuple %v1028, %v1029
    %v1072 = vmul.f32 %v1050, %v1028
    %v1073 = vmul.f32 %v1051, %v1029
    %v1074 = vsub.f32 %v1072, %v1073
    %v1075 = vmul.f32 %v1050, %v1029
    %v1076 = vmul.f32 %v1051, %v1028
    %v1077 = vadd.f32 %v1075, %v1076
    %1078 = xla_tuple %v1074, %v1077
    %1079 = vadd.xlane.f32.xlu0 %v1074
    %v1080 = vpop.xlane.xlu0 %1079
    %1081 = vadd.xlane.f32.xlu0 %v1077
    %v1082 = vpop.xlane.xlu0 %1081
    %v1083 = vsel %vm1054, %v1080, %v1028
    %v1084 = vsel %vm1054, %v1082, %v1029
    %1085 = xla_tuple %v1050, %v1051
    %1086 = xla_tuple %v1043, %v1044
    %v1087 = vmul.f32 %v1050, %v1043
    %v1088 = vmul.f32 %v1051, %v1044
    %v1089 = vsub.f32 %v1087, %v1088
    %v1090 = vmul.f32 %v1050, %v1044
    %v1091 = vmul.f32 %v1051, %v1043
    %v1092 = vadd.f32 %v1090, %v1091
    %1093 = xla_tuple %v1089, %v1092
    %1094 = vadd.xlane.f32.xlu0 %v1089
    %v1095 = vpop.xlane.xlu0 %1094
    %1096 = vadd.xlane.f32.xlu0 %v1092
    %v1097 = vpop.xlane.xlu0 %1096
    %v1098 = vsel %vm1054, %v1095, %v1043
    %v1099 = vsel %vm1054, %v1097, %v1044
    %s1100 = scalar_lea.vmem [#allocation0], 24
    %s1101 = scalar_lea.vmem [#allocation1], 24
    %v1102 = vld [vmem:[%s1100] ss:$0 sm:$0xff]
    %v1103 = vld [vmem:[%s1101] ss:$0 sm:$0xff]
    %vm1104 = vcmask 261120
    %v1105 = vsel %vm1104, %v1102, 0.0
    %v1106 = vsel %vm1104, %v1103, 0.0
    %v1107 = vlaneseq
    %v1108 = vand.u32 %v1107, 127
    %vm1109 = vcmp.eq.s32.totalorder %v1108, 24
    %1110 = xla_tuple %v1105, %v1106
    %1111 = xla_tuple %v1068, %v1069
    %v1112 = vmul.f32 %v1105, %v1068
    %v1113 = vmul.f32 %v1106, %v1069
    %v1114 = vsub.f32 %v1112, %v1113
    %v1115 = vmul.f32 %v1105, %v1069
    %v1116 = vmul.f32 %v1106, %v1068
    %v1117 = vadd.f32 %v1115, %v1116
    %1118 = xla_tuple %v1114, %v1117
    %1119 = vadd.xlane.f32.xlu0 %v1114
    %v1120 = vpop.xlane.xlu0 %1119
    %1121 = vadd.xlane.f32.xlu0 %v1117
    %v1122 = vpop.xlane.xlu0 %1121
    %v1123 = vsel %vm1109, %v1120, %v1068
    %v1124 = vsel %vm1109, %v1122, %v1069
    %1125 = xla_tuple %v1105, %v1106
    %1126 = xla_tuple %v1083, %v1084
    %v1127 = vmul.f32 %v1105, %v1083
    %v1128 = vmul.f32 %v1106, %v1084
    %v1129 = vsub.f32 %v1127, %v1128
    %v1130 = vmul.f32 %v1105, %v1084
    %v1131 = vmul.f32 %v1106, %v1083
    %v1132 = vadd.f32 %v1130, %v1131
    %1133 = xla_tuple %v1129, %v1132
    %1134 = vadd.xlane.f32.xlu0 %v1129
    %v1135 = vpop.xlane.xlu0 %1134
    %1136 = vadd.xlane.f32.xlu0 %v1132
    %v1137 = vpop.xlane.xlu0 %1136
    %v1138 = vsel %vm1109, %v1135, %v1083
    %v1139 = vsel %vm1109, %v1137, %v1084
    %1140 = xla_tuple %v1105, %v1106
    %1141 = xla_tuple %v1098, %v1099
    %v1142 = vmul.f32 %v1105, %v1098
    %v1143 = vmul.f32 %v1106, %v1099
    %v1144 = vsub.f32 %v1142, %v1143
    %v1145 = vmul.f32 %v1105, %v1099
    %v1146 = vmul.f32 %v1106, %v1098
    %v1147 = vadd.f32 %v1145, %v1146
    %1148 = xla_tuple %v1144, %v1147
    %1149 = vadd.xlane.f32.xlu0 %v1144
    %v1150 = vpop.xlane.xlu0 %1149
    %1151 = vadd.xlane.f32.xlu0 %v1147
    %v1152 = vpop.xlane.xlu0 %1151
    %v1153 = vsel %vm1109, %v1150, %v1098
    %v1154 = vsel %vm1109, %v1152, %v1099
    %1155 = xla_tuple %v1105, %v1106
    %1156 = xla_tuple %v164, 0.0
    %v1157 = vmul.f32 %v1105, %v164
    %v1158 = vmul.f32 %v1106, 0.0
    %v1159 = vsub.f32 %v1157, %v1158
    %v1160 = vmul.f32 %v1105, 0.0
    %v1161 = vmul.f32 %v1106, %v164
    %v1162 = vadd.f32 %v1160, %v1161
    %1163 = xla_tuple %v1159, %v1162
    %1164 = vadd.xlane.f32.xlu0 %v1159
    %v1165 = vpop.xlane.xlu0 %1164
    %1166 = vadd.xlane.f32.xlu0 %v1162
    %v1167 = vpop.xlane.xlu0 %1166
    %v1168 = vsel %vm1109, %v1165, %v164
    %v1169 = vsel %vm1109, %v1167, 0.0
    %s1170 = scalar_lea.vmem [#allocation0], 25
    %s1171 = scalar_lea.vmem [#allocation1], 25
    %v1172 = vld [vmem:[%s1170] ss:$0 sm:$0xff]
    %v1173 = vld [vmem:[%s1171] ss:$0 sm:$0xff]
    %vm1174 = vcmask 261120
    %v1175 = vsel %vm1174, %v1172, 0.0
    %v1176 = vsel %vm1174, %v1173, 0.0
    %v1177 = vlaneseq
    %v1178 = vand.u32 %v1177, 127
    %vm1179 = vcmp.eq.s32.totalorder %v1178, 25
    %1180 = xla_tuple %v1175, %v1176
    %1181 = xla_tuple %v1123, %v1124
    %v1182 = vmul.f32 %v1175, %v1123
    %v1183 = vmul.f32 %v1176, %v1124
    %v1184 = vsub.f32 %v1182, %v1183
    %v1185 = vmul.f32 %v1175, %v1124
    %v1186 = vmul.f32 %v1176, %v1123
    %v1187 = vadd.f32 %v1185, %v1186
    %1188 = xla_tuple %v1184, %v1187
    %1189 = vadd.xlane.f32.xlu0 %v1184
    %v1190 = vpop.xlane.xlu0 %1189
    %1191 = vadd.xlane.f32.xlu0 %v1187
    %v1192 = vpop.xlane.xlu0 %1191
    %v1193 = vsel %vm1179, %v1190, %v1123
    %v1194 = vsel %vm1179, %v1192, %v1124
    %1195 = xla_tuple %v1175, %v1176
    %1196 = xla_tuple %v1138, %v1139
    %v1197 = vmul.f32 %v1175, %v1138
    %v1198 = vmul.f32 %v1176, %v1139
    %v1199 = vsub.f32 %v1197, %v1198
    %v1200 = vmul.f32 %v1175, %v1139
    %v1201 = vmul.f32 %v1176, %v1138
    %v1202 = vadd.f32 %v1200, %v1201
    %1203 = xla_tuple %v1199, %v1202
    %1204 = vadd.xlane.f32.xlu0 %v1199
    %v1205 = vpop.xlane.xlu0 %1204
    %1206 = vadd.xlane.f32.xlu0 %v1202
    %v1207 = vpop.xlane.xlu0 %1206
    %v1208 = vsel %vm1179, %v1205, %v1138
    %v1209 = vsel %vm1179, %v1207, %v1139
    %1210 = xla_tuple %v1175, %v1176
    %1211 = xla_tuple %v1153, %v1154
    %v1212 = vmul.f32 %v1175, %v1153
    %v1213 = vmul.f32 %v1176, %v1154
    %v1214 = vsub.f32 %v1212, %v1213
    %v1215 = vmul.f32 %v1175, %v1154
    %v1216 = vmul.f32 %v1176, %v1153
    %v1217 = vadd.f32 %v1215, %v1216
    %1218 = xla_tuple %v1214, %v1217
    %1219 = vadd.xlane.f32.xlu0 %v1214
    %v1220 = vpop.xlane.xlu0 %1219
    %1221 = vadd.xlane.f32.xlu0 %v1217
    %v1222 = vpop.xlane.xlu0 %1221
    %v1223 = vsel %vm1179, %v1220, %v1153
    %v1224 = vsel %vm1179, %v1222, %v1154
    %1225 = xla_tuple %v1175, %v1176
    %1226 = xla_tuple %v1168, %v1169
    %v1227 = vmul.f32 %v1175, %v1168
    %v1228 = vmul.f32 %v1176, %v1169
    %v1229 = vsub.f32 %v1227, %v1228
    %v1230 = vmul.f32 %v1175, %v1169
    %v1231 = vmul.f32 %v1176, %v1168
    %v1232 = vadd.f32 %v1230, %v1231
    %1233 = xla_tuple %v1229, %v1232
    %1234 = vadd.xlane.f32.xlu0 %v1229
    %v1235 = vpop.xlane.xlu0 %1234
    %1236 = vadd.xlane.f32.xlu0 %v1232
    %v1237 = vpop.xlane.xlu0 %1236
    %v1238 = vsel %vm1179, %v1235, %v1168
    %v1239 = vsel %vm1179, %v1237, %v1169
    %s1240 = scalar_lea.vmem [#allocation0], 26
    %s1241 = scalar_lea.vmem [#allocation1], 26
    %v1242 = vld [vmem:[%s1240] ss:$0 sm:$0xff]
    %v1243 = vld [vmem:[%s1241] ss:$0 sm:$0xff]
    %vm1244 = vcmask 261120
    %v1245 = vsel %vm1244, %v1242, 0.0
    %v1246 = vsel %vm1244, %v1243, 0.0
    %v1247 = vlaneseq
    %v1248 = vand.u32 %v1247, 127
    %vm1249 = vcmp.eq.s32.totalorder %v1248, 26
    %1250 = xla_tuple %v1245, %v1246
    %1251 = xla_tuple %v1193, %v1194
    %v1252 = vmul.f32 %v1245, %v1193
    %v1253 = vmul.f32 %v1246, %v1194
    %v1254 = vsub.f32 %v1252, %v1253
    %v1255 = vmul.f32 %v1245, %v1194
    %v1256 = vmul.f32 %v1246, %v1193
    %v1257 = vadd.f32 %v1255, %v1256
    %1258 = xla_tuple %v1254, %v1257
    %1259 = vadd.xlane.f32.xlu0 %v1254
    %v1260 = vpop.xlane.xlu0 %1259
    %1261 = vadd.xlane.f32.xlu0 %v1257
    %v1262 = vpop.xlane.xlu0 %1261
    %v1263 = vsel %vm1249, %v1260, %v1193
    %v1264 = vsel %vm1249, %v1262, %v1194
    %1265 = xla_tuple %v1245, %v1246
    %1266 = xla_tuple %v1208, %v1209
    %v1267 = vmul.f32 %v1245, %v1208
    %v1268 = vmul.f32 %v1246, %v1209
    %v1269 = vsub.f32 %v1267, %v1268
    %v1270 = vmul.f32 %v1245, %v1209
    %v1271 = vmul.f32 %v1246, %v1208
    %v1272 = vadd.f32 %v1270, %v1271
    %1273 = xla_tuple %v1269, %v1272
    %1274 = vadd.xlane.f32.xlu0 %v1269
    %v1275 = vpop.xlane.xlu0 %1274
    %1276 = vadd.xlane.f32.xlu0 %v1272
    %v1277 = vpop.xlane.xlu0 %1276
    %v1278 = vsel %vm1249, %v1275, %v1208
    %v1279 = vsel %vm1249, %v1277, %v1209
    %1280 = xla_tuple %v1245, %v1246
    %1281 = xla_tuple %v1223, %v1224
    %v1282 = vmul.f32 %v1245, %v1223
    %v1283 = vmul.f32 %v1246, %v1224
    %v1284 = vsub.f32 %v1282, %v1283
    %v1285 = vmul.f32 %v1245, %v1224
    %v1286 = vmul.f32 %v1246, %v1223
    %v1287 = vadd.f32 %v1285, %v1286
    %1288 = xla_tuple %v1284, %v1287
    %1289 = vadd.xlane.f32.xlu0 %v1284
    %v1290 = vpop.xlane.xlu0 %1289
    %1291 = vadd.xlane.f32.xlu0 %v1287
    %v1292 = vpop.xlane.xlu0 %1291
    %v1293 = vsel %vm1249, %v1290, %v1223
    %v1294 = vsel %vm1249, %v1292, %v1224
    %1295 = xla_tuple %v1245, %v1246
    %1296 = xla_tuple %v1238, %v1239
    %v1297 = vmul.f32 %v1245, %v1238
    %v1298 = vmul.f32 %v1246, %v1239
    %v1299 = vsub.f32 %v1297, %v1298
    %v1300 = vmul.f32 %v1245, %v1239
    %v1301 = vmul.f32 %v1246, %v1238
    %v1302 = vadd.f32 %v1300, %v1301
    %1303 = xla_tuple %v1299, %v1302
    %1304 = vadd.xlane.f32.xlu0 %v1299
    %v1305 = vpop.xlane.xlu0 %1304
    %1306 = vadd.xlane.f32.xlu0 %v1302
    %v1307 = vpop.xlane.xlu0 %1306
    %v1308 = vsel %vm1249, %v1305, %v1238
    %v1309 = vsel %vm1249, %v1307, %v1239
    %s1310 = scalar_lea.vmem [#allocation0], 27
    %s1311 = scalar_lea.vmem [#allocation1], 27
    %v1312 = vld [vmem:[%s1310] ss:$0 sm:$0xff]
    %v1313 = vld [vmem:[%s1311] ss:$0 sm:$0xff]
    %vm1314 = vcmask 261120
    %v1315 = vsel %vm1314, %v1312, 0.0
    %v1316 = vsel %vm1314, %v1313, 0.0
    %v1317 = vlaneseq
    %v1318 = vand.u32 %v1317, 127
    %vm1319 = vcmp.eq.s32.totalorder %v1318, 27
    %1320 = xla_tuple %v1315, %v1316
    %1321 = xla_tuple %v1263, %v1264
    %v1322 = vmul.f32 %v1315, %v1263
    %v1323 = vmul.f32 %v1316, %v1264
    %v1324 = vsub.f32 %v1322, %v1323
    %v1325 = vmul.f32 %v1315, %v1264
    %v1326 = vmul.f32 %v1316, %v1263
    %v1327 = vadd.f32 %v1325, %v1326
    %1328 = xla_tuple %v1324, %v1327
    %1329 = vadd.xlane.f32.xlu0 %v1324
    %v1330 = vpop.xlane.xlu0 %1329
    %1331 = vadd.xlane.f32.xlu0 %v1327
    %v1332 = vpop.xlane.xlu0 %1331
    %v1333 = vsel %vm1319, %v1330, %v1263
    %v1334 = vsel %vm1319, %v1332, %v1264
    %1335 = xla_tuple %v1315, %v1316
    %1336 = xla_tuple %v1278, %v1279
    %v1337 = vmul.f32 %v1315, %v1278
    %v1338 = vmul.f32 %v1316, %v1279
    %v1339 = vsub.f32 %v1337, %v1338
    %v1340 = vmul.f32 %v1315, %v1279
    %v1341 = vmul.f32 %v1316, %v1278
    %v1342 = vadd.f32 %v1340, %v1341
    %1343 = xla_tuple %v1339, %v1342
    %1344 = vadd.xlane.f32.xlu0 %v1339
    %v1345 = vpop.xlane.xlu0 %1344
    %1346 = vadd.xlane.f32.xlu0 %v1342
    %v1347 = vpop.xlane.xlu0 %1346
    %v1348 = vsel %vm1319, %v1345, %v1278
    %v1349 = vsel %vm1319, %v1347, %v1279
    %1350 = xla_tuple %v1315, %v1316
    %1351 = xla_tuple %v1293, %v1294
    %v1352 = vmul.f32 %v1315, %v1293
    %v1353 = vmul.f32 %v1316, %v1294
    %v1354 = vsub.f32 %v1352, %v1353
    %v1355 = vmul.f32 %v1315, %v1294
    %v1356 = vmul.f32 %v1316, %v1293
    %v1357 = vadd.f32 %v1355, %v1356
    %1358 = xla_tuple %v1354, %v1357
    %1359 = vadd.xlane.f32.xlu0 %v1354
    %v1360 = vpop.xlane.xlu0 %1359
    %1361 = vadd.xlane.f32.xlu0 %v1357
    %v1362 = vpop.xlane.xlu0 %1361
    %v1363 = vsel %vm1319, %v1360, %v1293
    %v1364 = vsel %vm1319, %v1362, %v1294
    %1365 = xla_tuple %v1315, %v1316
    %1366 = xla_tuple %v1308, %v1309
    %v1367 = vmul.f32 %v1315, %v1308
    %v1368 = vmul.f32 %v1316, %v1309
    %v1369 = vsub.f32 %v1367, %v1368
    %v1370 = vmul.f32 %v1315, %v1309
    %v1371 = vmul.f32 %v1316, %v1308
    %v1372 = vadd.f32 %v1370, %v1371
    %1373 = xla_tuple %v1369, %v1372
    %1374 = vadd.xlane.f32.xlu0 %v1369
    %v1375 = vpop.xlane.xlu0 %1374
    %1376 = vadd.xlane.f32.xlu0 %v1372
    %v1377 = vpop.xlane.xlu0 %1376
    %v1378 = vsel %vm1319, %v1375, %v1308
    %v1379 = vsel %vm1319, %v1377, %v1309
    %s1380 = scalar_lea.vmem [#allocation0], 28
    %s1381 = scalar_lea.vmem [#allocation1], 28
    %v1382 = vld [vmem:[%s1380] ss:$0 sm:$0xff]
    %v1383 = vld [vmem:[%s1381] ss:$0 sm:$0xff]
    %vm1384 = vcmask 261120
    %v1385 = vsel %vm1384, %v1382, 0.0
    %v1386 = vsel %vm1384, %v1383, 0.0
    %v1387 = vlaneseq
    %v1388 = vand.u32 %v1387, 127
    %vm1389 = vcmp.eq.s32.totalorder %v1388, 28
    %1390 = xla_tuple %v1385, %v1386
    %1391 = xla_tuple %v1333, %v1334
    %v1392 = vmul.f32 %v1385, %v1333
    %v1393 = vmul.f32 %v1386, %v1334
    %v1394 = vsub.f32 %v1392, %v1393
    %v1395 = vmul.f32 %v1385, %v1334
    %v1396 = vmul.f32 %v1386, %v1333
    %v1397 = vadd.f32 %v1395, %v1396
    %1398 = xla_tuple %v1394, %v1397
    %1399 = vadd.xlane.f32.xlu0 %v1394
    %v1400 = vpop.xlane.xlu0 %1399
    %1401 = vadd.xlane.f32.xlu0 %v1397
    %v1402 = vpop.xlane.xlu0 %1401
    %v1403 = vsel %vm1389, %v1400, %v1333
    %v1404 = vsel %vm1389, %v1402, %v1334
    %1405 = xla_tuple %v1385, %v1386
    %1406 = xla_tuple %v1348, %v1349
    %v1407 = vmul.f32 %v1385, %v1348
    %v1408 = vmul.f32 %v1386, %v1349
    %v1409 = vsub.f32 %v1407, %v1408
    %v1410 = vmul.f32 %v1385, %v1349
    %v1411 = vmul.f32 %v1386, %v1348
    %v1412 = vadd.f32 %v1410, %v1411
    %1413 = xla_tuple %v1409, %v1412
    %1414 = vadd.xlane.f32.xlu0 %v1409
    %v1415 = vpop.xlane.xlu0 %1414
    %1416 = vadd.xlane.f32.xlu0 %v1412
    %v1417 = vpop.xlane.xlu0 %1416
    %v1418 = vsel %vm1389, %v1415, %v1348
    %v1419 = vsel %vm1389, %v1417, %v1349
    %1420 = xla_tuple %v1385, %v1386
    %1421 = xla_tuple %v1363, %v1364
    %v1422 = vmul.f32 %v1385, %v1363
    %v1423 = vmul.f32 %v1386, %v1364
    %v1424 = vsub.f32 %v1422, %v1423
    %v1425 = vmul.f32 %v1385, %v1364
    %v1426 = vmul.f32 %v1386, %v1363
    %v1427 = vadd.f32 %v1425, %v1426
    %1428 = xla_tuple %v1424, %v1427
    %1429 = vadd.xlane.f32.xlu0 %v1424
    %v1430 = vpop.xlane.xlu0 %1429
    %1431 = vadd.xlane.f32.xlu0 %v1427
    %v1432 = vpop.xlane.xlu0 %1431
    %v1433 = vsel %vm1389, %v1430, %v1363
    %v1434 = vsel %vm1389, %v1432, %v1364
    %1435 = xla_tuple %v1385, %v1386
    %1436 = xla_tuple %v1378, %v1379
    %v1437 = vmul.f32 %v1385, %v1378
    %v1438 = vmul.f32 %v1386, %v1379
    %v1439 = vsub.f32 %v1437, %v1438
    %v1440 = vmul.f32 %v1385, %v1379
    %v1441 = vmul.f32 %v1386, %v1378
    %v1442 = vadd.f32 %v1440, %v1441
    %1443 = xla_tuple %v1439, %v1442
    %1444 = vadd.xlane.f32.xlu0 %v1439
    %v1445 = vpop.xlane.xlu0 %1444
    %1446 = vadd.xlane.f32.xlu0 %v1442
    %v1447 = vpop.xlane.xlu0 %1446
    %v1448 = vsel %vm1389, %v1445, %v1378
    %v1449 = vsel %vm1389, %v1447, %v1379
    %s1450 = scalar_lea.vmem [#allocation0], 29
    %s1451 = scalar_lea.vmem [#allocation1], 29
    %v1452 = vld [vmem:[%s1450] ss:$0 sm:$0xff]
    %v1453 = vld [vmem:[%s1451] ss:$0 sm:$0xff]
    %vm1454 = vcmask 261120
    %v1455 = vsel %vm1454, %v1452, 0.0
    %v1456 = vsel %vm1454, %v1453, 0.0
    %v1457 = vlaneseq
    %v1458 = vand.u32 %v1457, 127
    %vm1459 = vcmp.eq.s32.totalorder %v1458, 29
    %1460 = xla_tuple %v1455, %v1456
    %1461 = xla_tuple %v1403, %v1404
    %v1462 = vmul.f32 %v1455, %v1403
    %v1463 = vmul.f32 %v1456, %v1404
    %v1464 = vsub.f32 %v1462, %v1463
    %v1465 = vmul.f32 %v1455, %v1404
    %v1466 = vmul.f32 %v1456, %v1403
    %v1467 = vadd.f32 %v1465, %v1466
    %1468 = xla_tuple %v1464, %v1467
    %1469 = vadd.xlane.f32.xlu0 %v1464
    %v1470 = vpop.xlane.xlu0 %1469
    %1471 = vadd.xlane.f32.xlu0 %v1467
    %v1472 = vpop.xlane.xlu0 %1471
    %v1473 = vsel %vm1459, %v1470, %v1403
    %v1474 = vsel %vm1459, %v1472, %v1404
    %1475 = xla_tuple %v1455, %v1456
    %1476 = xla_tuple %v1418, %v1419
    %v1477 = vmul.f32 %v1455, %v1418
    %v1478 = vmul.f32 %v1456, %v1419
    %v1479 = vsub.f32 %v1477, %v1478
    %v1480 = vmul.f32 %v1455, %v1419
    %v1481 = vmul.f32 %v1456, %v1418
    %v1482 = vadd.f32 %v1480, %v1481
    %1483 = xla_tuple %v1479, %v1482
    %1484 = vadd.xlane.f32.xlu0 %v1479
    %v1485 = vpop.xlane.xlu0 %1484
    %1486 = vadd.xlane.f32.xlu0 %v1482
    %v1487 = vpop.xlane.xlu0 %1486
    %v1488 = vsel %vm1459, %v1485, %v1418
    %v1489 = vsel %vm1459, %v1487, %v1419
    %1490 = xla_tuple %v1455, %v1456
    %1491 = xla_tuple %v1433, %v1434
    %v1492 = vmul.f32 %v1455, %v1433
    %v1493 = vmul.f32 %v1456, %v1434
    %v1494 = vsub.f32 %v1492, %v1493
    %v1495 = vmul.f32 %v1455, %v1434
    %v1496 = vmul.f32 %v1456, %v1433
    %v1497 = vadd.f32 %v1495, %v1496
    %1498 = xla_tuple %v1494, %v1497
    %1499 = vadd.xlane.f32.xlu0 %v1494
    %v1500 = vpop.xlane.xlu0 %1499
    %1501 = vadd.xlane.f32.xlu0 %v1497
    %v1502 = vpop.xlane.xlu0 %1501
    %v1503 = vsel %vm1459, %v1500, %v1433
    %v1504 = vsel %vm1459, %v1502, %v1434
    %1505 = xla_tuple %v1455, %v1456
    %1506 = xla_tuple %v1448, %v1449
    %v1507 = vmul.f32 %v1455, %v1448
    %v1508 = vmul.f32 %v1456, %v1449
    %v1509 = vsub.f32 %v1507, %v1508
    %v1510 = vmul.f32 %v1455, %v1449
    %v1511 = vmul.f32 %v1456, %v1448
    %v1512 = vadd.f32 %v1510, %v1511
    %1513 = xla_tuple %v1509, %v1512
    %1514 = vadd.xlane.f32.xlu0 %v1509
    %v1515 = vpop.xlane.xlu0 %1514
    %1516 = vadd.xlane.f32.xlu0 %v1512
    %v1517 = vpop.xlane.xlu0 %1516
    %v1518 = vsel %vm1459, %v1515, %v1448
    %v1519 = vsel %vm1459, %v1517, %v1449
    %s1520 = scalar_lea.vmem [#allocation0], 30
    %s1521 = scalar_lea.vmem [#allocation1], 30
    %v1522 = vld [vmem:[%s1520] ss:$0 sm:$0xff]
    %v1523 = vld [vmem:[%s1521] ss:$0 sm:$0xff]
    %vm1524 = vcmask 261120
    %v1525 = vsel %vm1524, %v1522, 0.0
    %v1526 = vsel %vm1524, %v1523, 0.0
    %v1527 = vlaneseq
    %v1528 = vand.u32 %v1527, 127
    %vm1529 = vcmp.eq.s32.totalorder %v1528, 30
    %1530 = xla_tuple %v1525, %v1526
    %1531 = xla_tuple %v1473, %v1474
    %v1532 = vmul.f32 %v1525, %v1473
    %v1533 = vmul.f32 %v1526, %v1474
    %v1534 = vsub.f32 %v1532, %v1533
    %v1535 = vmul.f32 %v1525, %v1474
    %v1536 = vmul.f32 %v1526, %v1473
    %v1537 = vadd.f32 %v1535, %v1536
    %1538 = xla_tuple %v1534, %v1537
    %1539 = vadd.xlane.f32.xlu0 %v1534
    %v1540 = vpop.xlane.xlu0 %1539
    %1541 = vadd.xlane.f32.xlu0 %v1537
    %v1542 = vpop.xlane.xlu0 %1541
    %v1543 = vsel %vm1529, %v1540, %v1473
    %v1544 = vsel %vm1529, %v1542, %v1474
    %1545 = xla_tuple %v1525, %v1526
    %1546 = xla_tuple %v1488, %v1489
    %v1547 = vmul.f32 %v1525, %v1488
    %v1548 = vmul.f32 %v1526, %v1489
    %v1549 = vsub.f32 %v1547, %v1548
    %v1550 = vmul.f32 %v1525, %v1489
    %v1551 = vmul.f32 %v1526, %v1488
    %v1552 = vadd.f32 %v1550, %v1551
    %1553 = xla_tuple %v1549, %v1552
    %1554 = vadd.xlane.f32.xlu0 %v1549
    %v1555 = vpop.xlane.xlu0 %1554
    %1556 = vadd.xlane.f32.xlu0 %v1552
    %v1557 = vpop.xlane.xlu0 %1556
    %v1558 = vsel %vm1529, %v1555, %v1488
    %v1559 = vsel %vm1529, %v1557, %v1489
    %1560 = xla_tuple %v1525, %v1526
    %1561 = xla_tuple %v1503, %v1504
    %v1562 = vmul.f32 %v1525, %v1503
    %v1563 = vmul.f32 %v1526, %v1504
    %v1564 = vsub.f32 %v1562, %v1563
    %v1565 = vmul.f32 %v1525, %v1504
    %v1566 = vmul.f32 %v1526, %v1503
    %v1567 = vadd.f32 %v1565, %v1566
    %1568 = xla_tuple %v1564, %v1567
    %1569 = vadd.xlane.f32.xlu0 %v1564
    %v1570 = vpop.xlane.xlu0 %1569
    %1571 = vadd.xlane.f32.xlu0 %v1567
    %v1572 = vpop.xlane.xlu0 %1571
    %v1573 = vsel %vm1529, %v1570, %v1503
    %v1574 = vsel %vm1529, %v1572, %v1504
    %1575 = xla_tuple %v1525, %v1526
    %1576 = xla_tuple %v1518, %v1519
    %v1577 = vmul.f32 %v1525, %v1518
    %v1578 = vmul.f32 %v1526, %v1519
    %v1579 = vsub.f32 %v1577, %v1578
    %v1580 = vmul.f32 %v1525, %v1519
    %v1581 = vmul.f32 %v1526, %v1518
    %v1582 = vadd.f32 %v1580, %v1581
    %1583 = xla_tuple %v1579, %v1582
    %1584 = vadd.xlane.f32.xlu0 %v1579
    %v1585 = vpop.xlane.xlu0 %1584
    %1586 = vadd.xlane.f32.xlu0 %v1582
    %v1587 = vpop.xlane.xlu0 %1586
    %v1588 = vsel %vm1529, %v1585, %v1518
    %v1589 = vsel %vm1529, %v1587, %v1519
    %s1590 = scalar_lea.vmem [#allocation0], 31
    %s1591 = scalar_lea.vmem [#allocation1], 31
    %v1592 = vld [vmem:[%s1590] ss:$0 sm:$0xff]
    %v1593 = vld [vmem:[%s1591] ss:$0 sm:$0xff]
    %vm1594 = vcmask 261120
    %v1595 = vsel %vm1594, %v1592, 0.0
    %v1596 = vsel %vm1594, %v1593, 0.0
    %v1597 = vlaneseq
    %v1598 = vand.u32 %v1597, 127
    %vm1599 = vcmp.eq.s32.totalorder %v1598, 31
    %1600 = xla_tuple %v1595, %v1596
    %1601 = xla_tuple %v1543, %v1544
    %v1602 = vmul.f32 %v1595, %v1543
    %v1603 = vmul.f32 %v1596, %v1544
    %v1604 = vsub.f32 %v1602, %v1603
    %v1605 = vmul.f32 %v1595, %v1544
    %v1606 = vmul.f32 %v1596, %v1543
    %v1607 = vadd.f32 %v1605, %v1606
    %1608 = xla_tuple %v1604, %v1607
    %1609 = vadd.xlane.f32.xlu0 %v1604
    %v1610 = vpop.xlane.xlu0 %1609
    %1611 = vadd.xlane.f32.xlu0 %v1607
    %v1612 = vpop.xlane.xlu0 %1611
    %v1613 = vsel %vm1599, %v1610, %v1543
    %v1614 = vsel %vm1599, %v1612, %v1544
    %1615 = xla_tuple %v1595, %v1596
    %1616 = xla_tuple %v1558, %v1559
    %v1617 = vmul.f32 %v1595, %v1558
    %v1618 = vmul.f32 %v1596, %v1559
    %v1619 = vsub.f32 %v1617, %v1618
    %v1620 = vmul.f32 %v1595, %v1559
    %v1621 = vmul.f32 %v1596, %v1558
    %v1622 = vadd.f32 %v1620, %v1621
    %1623 = xla_tuple %v1619, %v1622
    %1624 = vadd.xlane.f32.xlu0 %v1619
    %v1625 = vpop.xlane.xlu0 %1624
    %1626 = vadd.xlane.f32.xlu0 %v1622
    %v1627 = vpop.xlane.xlu0 %1626
    %v1628 = vsel %vm1599, %v1625, %v1558
    %v1629 = vsel %vm1599, %v1627, %v1559
    %1630 = xla_tuple %v1595, %v1596
    %1631 = xla_tuple %v1573, %v1574
    %v1632 = vmul.f32 %v1595, %v1573
    %v1633 = vmul.f32 %v1596, %v1574
    %v1634 = vsub.f32 %v1632, %v1633
    %v1635 = vmul.f32 %v1595, %v1574
    %v1636 = vmul.f32 %v1596, %v1573
    %v1637 = vadd.f32 %v1635, %v1636
    %1638 = xla_tuple %v1634, %v1637
    %1639 = vadd.xlane.f32.xlu0 %v1634
    %v1640 = vpop.xlane.xlu0 %1639
    %1641 = vadd.xlane.f32.xlu0 %v1637
    %v1642 = vpop.xlane.xlu0 %1641
    %v1643 = vsel %vm1599, %v1640, %v1573
    %v1644 = vsel %vm1599, %v1642, %v1574
    %1645 = xla_tuple %v1595, %v1596
    %1646 = xla_tuple %v1588, %v1589
    %v1647 = vmul.f32 %v1595, %v1588
    %v1648 = vmul.f32 %v1596, %v1589
    %v1649 = vsub.f32 %v1647, %v1648
    %v1650 = vmul.f32 %v1595, %v1589
    %v1651 = vmul.f32 %v1596, %v1588
    %v1652 = vadd.f32 %v1650, %v1651
    %1653 = xla_tuple %v1649, %v1652
    %1654 = vadd.xlane.f32.xlu0 %v1649
    %v1655 = vpop.xlane.xlu0 %1654
    %1656 = vadd.xlane.f32.xlu0 %v1652
    %v1657 = vpop.xlane.xlu0 %1656
    %v1658 = vsel %vm1599, %v1655, %v1588
    %v1659 = vsel %vm1599, %v1657, %v1589
    %1660 = vst [vmem:[#allocation2] sm:$0xff] %v1613
    %1661 = vst [vmem:[#allocation3] sm:$0xff] %v1614
    %s1662 = scalar_lea.vmem [#allocation2], 8
    %s1663 = scalar_lea.vmem [#allocation3], 8
    %1664 = vst [vmem:[%s1662] sm:$0xff] %v1628
    %1665 = vst [vmem:[%s1663] sm:$0xff] %v1629
    %s1666 = scalar_lea.vmem [#allocation2], 16
    %s1667 = scalar_lea.vmem [#allocation3], 16
    %1668 = vst [vmem:[%s1666] sm:$0xff] %v1643
    %1669 = vst [vmem:[%s1667] sm:$0xff] %v1644
    %s1670 = scalar_lea.vmem [#allocation2], 24
    %s1671 = scalar_lea.vmem [#allocation3], 24
    %1672 = vst [vmem:[%s1670] sm:$0xff] %v1658
    %1673 = vst [vmem:[%s1671] sm:$0xff] %v1659
    %p1675 = scmp.gt.s32.totalorder 32, 0
    // Predicated region
    $region46: #{custom-call.8} parent=1 // pred_check
      %p1676 = pneg %p1675
    $region47: #{custom-call.8} parent=1 // pred_check_branch
      %1678 = sbr.rel (%p1676) target = $region49
    $region48: #{custom-call.8} parent=1 // pred_region
      %s1679 = sshra.s32 32, 3
      %p1680 = scmp.gt.s32.totalorder %s1679, 0
      // Predicated region
      $region50: #{custom-call.8} parent=48 // pred_check
        %p1681 = pneg %p1680
      $region51: #{custom-call.8} parent=48 // pred_check_branch
        %1683 = sbr.rel (%p1681) target = $region53
      $region52: #{custom-call.8} parent=48 // pred_region
        %s1684 = ssub.s32 %s1679, 1
        %s1685 = smul.u32 %s1684, 128
        %s1686 = sshra.s32 %s1685, 4
        %s1687 = scalar_lea.vmem [#allocation2], %s1686
        %v1688 = vld [vmem:[#allocation2] sm:$0xff]
        // While loop
        $region54: #{custom-call.8} parent=52 // loop_pre_header
          _
        $region55: #{custom-call.8} parent=52 // loop_header
          %s1689 = sphi [#allocation2], %s1711
          %s1690 = sphi %s2, %s1712
          %v1691 = vphi %v1688, %v1713
          %s1692 = ssub.s32 %s1687, 64
          %p1693 = scmp.gt.s32.totalorder %s1689, %s1692
        $region56: #{custom-call.8} parent=52 // loop_header_branch
          %1695 = sbr.rel (%p1693) target = $region60
        $region57: #{custom-call.8} parent=52 // loop_body
          %1696 = vst [vmem:[%s1690] sm:$0xff] %v1691
          %v1697 = vld [vmem:[%s1689 + $0x8] sm:$0xff]
          %1698 = vst [vmem:[%s1690 + $0x8] sm:$0xff] %v1697
          %v1699 = vld [vmem:[%s1689 + $0x10] sm:$0xff]
          %1700 = vst [vmem:[%s1690 + $0x10] sm:$0xff] %v1699
          %v1701 = vld [vmem:[%s1689 + $0x18] sm:$0xff]
          %1702 = vst [vmem:[%s1690 + $0x18] sm:$0xff] %v1701
          %v1703 = vld [vmem:[%s1689 + $0x20] sm:$0xff]
          %1704 = vst [vmem:[%s1690 + $0x20] sm:$0xff] %v1703
          %v1705 = vld [vmem:[%s1689 + $0x28] sm:$0xff]
          %1706 = vst [vmem:[%s1690 + $0x28] sm:$0xff] %v1705
          %v1707 = vld [vmem:[%s1689 + $0x30] sm:$0xff]
          %1708 = vst [vmem:[%s1690 + $0x30] sm:$0xff] %v1707
          %v1709 = vld [vmem:[%s1689 + $0x38] sm:$0xff]
          %1710 = vst [vmem:[%s1690 + $0x38] sm:$0xff] %v1709
        $region58: #{custom-call.8} parent=52 // loop_footer
          %s1711 = scalar_lea.vmem %s1689, 64
          %s1712 = scalar_lea.vmem %s1690, 64
          %v1713 = vld [vmem:[%s1689 + $0x40] sm:$0xff]
        $region59: #{custom-call.8} parent=52 // loop_footer_branch
          %1714 = sbr.rel target = $region55
        $region60: #{custom-call.8} parent=52 // loop_exit
          _
        // While loop
        $region61: #{custom-call.8} parent=52 // loop_pre_header
          _
        $region62: #{custom-call.8} parent=52 // loop_header
          %s1715 = sphi %s1689, %s1723
          %s1716 = sphi %s1690, %s1724
          %v1717 = vphi %v1691, %v1717
          %p1718 = scmp.gt.s32.totalorder %s1715, %s1687
        $region63: #{custom-call.8} parent=52 // loop_header_branch
          %1720 = sbr.rel (%p1718) target = $region67
        $region64: #{custom-call.8} parent=52 // loop_body
          %v1721 = vld [vmem:[%s1715] sm:$0xff]
          %1722 = vst [vmem:[%s1716] sm:$0xff] %v1721
        $region65: #{custom-call.8} parent=52 // loop_footer
          %s1723 = scalar_lea.vmem %s1715, 8
          %s1724 = scalar_lea.vmem %s1716, 8
        $region66: #{custom-call.8} parent=52 // loop_footer_branch
          %1725 = sbr.rel target = $region62
        $region67: #{custom-call.8} parent=52 // loop_exit
          _
      $region53: #{custom-call.8} parent=48 // pred_fallthru
        _
      %s1726 = sand.u32 32, 7
      %s1727 = sshllo.u32 0, %s1726
      %s1728 = smul.u32 %s1679, 128
      %s1729 = sshra.s32 %s1728, 4
      %s1730 = scalar_lea.vmem %s2, %s1729
      %s1731 = smul.u32 %s1679, 128
      %s1732 = sshra.s32 %s1731, 4
      %s1733 = scalar_lea.vmem [#allocation2], %s1732
      %v1734 = vld [vmem:[%s1733] sm:%s1727]
      %1735 = vst [vmem:[%s1730] sm:%s1727] %v1734
    $region49: #{custom-call.8} parent=1 // pred_fallthru
      _
    %p1737 = scmp.gt.s32.totalorder 32, 0
    // Predicated region
    $region68: #{custom-call.8} parent=1 // pred_check
      %p1738 = pneg %p1737
    $region69: #{custom-call.8} parent=1 // pred_check_branch
      %1740 = sbr.rel (%p1738) target = $region71
    $region70: #{custom-call.8} parent=1 // pred_region
      %s1741 = sshra.s32 32, 3
      %p1742 = scmp.gt.s32.totalorder %s1741, 0
      // Predicated region
      $region72: #{custom-call.8} parent=70 // pred_check
        %p1743 = pneg %p1742
      $region73: #{custom-call.8} parent=70 // pred_check_branch
        %1745 = sbr.rel (%p1743) target = $region75
      $region74: #{custom-call.8} parent=70 // pred_region
        %s1746 = ssub.s32 %s1741, 1
        %s1747 = smul.u32 %s1746, 128
        %s1748 = sshra.s32 %s1747, 4
        %s1749 = scalar_lea.vmem [#allocation3], %s1748
        %v1750 = vld [vmem:[#allocation3] sm:$0xff]
        // While loop
        $region76: #{custom-call.8} parent=74 // loop_pre_header
          _
        $region77: #{custom-call.8} parent=74 // loop_header
          %s1751 = sphi [#allocation3], %s1773
          %s1752 = sphi %s3, %s1774
          %v1753 = vphi %v1750, %v1775
          %s1754 = ssub.s32 %s1749, 64
          %p1755 = scmp.gt.s32.totalorder %s1751, %s1754
        $region78: #{custom-call.8} parent=74 // loop_header_branch
          %1757 = sbr.rel (%p1755) target = $region82
        $region79: #{custom-call.8} parent=74 // loop_body
          %1758 = vst [vmem:[%s1752] sm:$0xff] %v1753
          %v1759 = vld [vmem:[%s1751 + $0x8] sm:$0xff]
          %1760 = vst [vmem:[%s1752 + $0x8] sm:$0xff] %v1759
          %v1761 = vld [vmem:[%s1751 + $0x10] sm:$0xff]
          %1762 = vst [vmem:[%s1752 + $0x10] sm:$0xff] %v1761
          %v1763 = vld [vmem:[%s1751 + $0x18] sm:$0xff]
          %1764 = vst [vmem:[%s1752 + $0x18] sm:$0xff] %v1763
          %v1765 = vld [vmem:[%s1751 + $0x20] sm:$0xff]
          %1766 = vst [vmem:[%s1752 + $0x20] sm:$0xff] %v1765
          %v1767 = vld [vmem:[%s1751 + $0x28] sm:$0xff]
          %1768 = vst [vmem:[%s1752 + $0x28] sm:$0xff] %v1767
          %v1769 = vld [vmem:[%s1751 + $0x30] sm:$0xff]
          %1770 = vst [vmem:[%s1752 + $0x30] sm:$0xff] %v1769
          %v1771 = vld [vmem:[%s1751 + $0x38] sm:$0xff]
          %1772 = vst [vmem:[%s1752 + $0x38] sm:$0xff] %v1771
        $region80: #{custom-call.8} parent=74 // loop_footer
          %s1773 = scalar_lea.vmem %s1751, 64
          %s1774 = scalar_lea.vmem %s1752, 64
          %v1775 = vld [vmem:[%s1751 + $0x40] sm:$0xff]
        $region81: #{custom-call.8} parent=74 // loop_footer_branch
          %1776 = sbr.rel target = $region77
        $region82: #{custom-call.8} parent=74 // loop_exit
          _
        // While loop
        $region83: #{custom-call.8} parent=74 // loop_pre_header
          _
        $region84: #{custom-call.8} parent=74 // loop_header
          %s1777 = sphi %s1751, %s1785
          %s1778 = sphi %s1752, %s1786
          %v1779 = vphi %v1753, %v1779
          %p1780 = scmp.gt.s32.totalorder %s1777, %s1749
        $region85: #{custom-call.8} parent=74 // loop_header_branch
          %1782 = sbr.rel (%p1780) target = $region89
        $region86: #{custom-call.8} parent=74 // loop_body
          %v1783 = vld [vmem:[%s1777] sm:$0xff]
          %1784 = vst [vmem:[%s1778] sm:$0xff] %v1783
        $region87: #{custom-call.8} parent=74 // loop_footer
          %s1785 = scalar_lea.vmem %s1777, 8
          %s1786 = scalar_lea.vmem %s1778, 8
        $region88: #{custom-call.8} parent=74 // loop_footer_branch
          %1787 = sbr.rel target = $region84
        $region89: #{custom-call.8} parent=74 // loop_exit
          _
      $region75: #{custom-call.8} parent=70 // pred_fallthru
        _
      %s1788 = sand.u32 32, 7
      %s1789 = sshllo.u32 0, %s1788
      %s1790 = smul.u32 %s1741, 128
      %s1791 = sshra.s32 %s1790, 4
      %s1792 = scalar_lea.vmem %s3, %s1791
      %s1793 = smul.u32 %s1741, 128
      %s1794 = sshra.s32 %s1793, 4
      %s1795 = scalar_lea.vmem [#allocation3], %s1794
      %v1796 = vld [vmem:[%s1795] sm:%s1789]
      %1797 = vst [vmem:[%s1792] sm:%s1789] %v1796
    $region71: #{custom-call.8} parent=1 // pred_fallthru
      _

// kernel: custom-call.2
$region0: #{custom-call.2}
  %s0 = inlined_call_operand.vmem [shape: f32[8,32], index: 0, kind: input, shape index: {}]
  %s1 = inlined_call_operand.vmem [shape: f32[8,32], index: 1, kind: input, shape index: {}]
  %s2 = inlined_call_operand.hbm [shape: c64[8,32], index: 2, kind: output, shape index: {}]
  %s3 = scalar_lea.hbm %s2, 128
  $region1: #{custom-call.2} parent=0
    #allocation0 [shape = 's32[1]{0}', space=sflag, size = 0x4, scoped, tag = 'scoped memory for custom-call.2']
    %4 = vsyncpa [#allocation0], 0
    %s5 = sshll.u32 %s0, 4
    %s6 = int_to_ptr.vmem [resolvable:$true] %s5
    %8 = dma.vmem_to_hbm [thread:$0]  %s6, 128, %s2, [#allocation0]
    %9 = dma.done [#allocation0], 128
    %10 = vsyncpa [#allocation0], 1
  $region2: #{custom-call.2} parent=0
    #allocation1 [shape = 's32[1]{0}', space=sflag, size = 0x4, scoped, tag = 'scoped memory for custom-call.2']
    %11 = vsyncpa [#allocation1], 0
    %s12 = sshll.u32 %s1, 4
    %s13 = int_to_ptr.vmem [resolvable:$true] %s12
    %15 = dma.vmem_to_hbm [thread:$0]  %s13, 128, %s3, [#allocation1]
    %16 = dma.done [#allocation1], 128
    %17 = vsyncpa [#allocation1], 1

// kernel: unitary_complex_linear.1
$region0: #{unitary_complex_linear.1}
  #allocation0 [shape = 'u32[]', space=smem, size = 0x4, offset = 0x4, fixed_abs, tag = 'smem constant byte address 0x4 - core index']
  #allocation1 [shape = 'u32[144,128]{1,0:T(1,128)}', space=vmem, size = 0x12000, scoped, tag = 'internal scratch']
  #allocation2 [shape = 'f32[256,128]{1,0:T(8,128)}', space=vmem, size = 0x20000, scoped, tag = 'scratch operand']
  #allocation3 [shape = 'f32[256,128]{1,0:T(8,128)}', space=vmem, size = 0x20000, scoped, tag = 'scratch operand']
  %s0 = inlined_call_operand.vmem [shape: bf16[2,256,128], index: 0, kind: input, shape index: {}]
  %s1 = inlined_call_operand.vmem [shape: bf16[2,128,128], index: 1, kind: input, shape index: {}]
  %s2 = inlined_call_operand.vmem [shape: f32[2,256,128], index: 2, kind: output, shape index: {}]
  %s3 = sld [smem:[#allocation0]]
  $region26: #{unitary_complex_linear.1} parent=0
    _
  %s5 = ssub.s32 1, %s3
  %s6 = scalar_select 0, %s5, %s3
  // Predicated region
  $region2: #{unitary_complex_linear.1} parent=0 // pred_check
    _
  $region3: #{unitary_complex_linear.1} parent=0 // pred_check_branch
    %8 = sbr.rel (0) target = $region5
  $region4: #{unitary_complex_linear.1} parent=0 // pred_region
    _
  $region5: #{unitary_complex_linear.1} parent=0 // pred_fallthru
    _
  // Predicated region
  $region6: #{unitary_complex_linear.1} parent=0 // pred_check
    _
  $region7: #{unitary_complex_linear.1} parent=0 // pred_check_branch
    %10 = sbr.rel (0) target = $region9
  $region8: #{unitary_complex_linear.1} parent=0 // pred_region
    _
  $region9: #{unitary_complex_linear.1} parent=0 // pred_fallthru
    _
  %p12 = scmp.eq.s32.totalorder 0, 0
  // Predicated region
  $region10: #{unitary_complex_linear.1} parent=0 // pred_check
    %p13 = pneg %p12
  $region11: #{unitary_complex_linear.1} parent=0 // pred_check_branch
    %15 = sbr.rel (%p13) target = $region13
  $region12: #{unitary_complex_linear.1} parent=0 // pred_region
    %16 = vst [vmem:[#allocation2] sm:$0xff] 0.0
    %17 = vst [vmem:[#allocation2 + $0x8] sm:$0xff] 0.0
    %18 = vst [vmem:[#allocation2 + $0x10] sm:$0xff] 0.0
    %19 = vst [vmem:[#allocation2 + $0x18] sm:$0xff] 0.0
    %20 = vst [vmem:[#allocation2 + $0x20] sm:$0xff] 0.0
    %21 = vst [vmem:[#allocation2 + $0x28] sm:$0xff] 0.0
    %22 = vst [vmem:[#allocation2 + $0x30] sm:$0xff] 0.0
    %23 = vst [vmem:[#allocation2 + $0x38] sm:$0xff] 0.0
    %24 = vst [vmem:[#allocation2 + $0x40] sm:$0xff] 0.0
    %25 = vst [vmem:[#allocation2 + $0x48] sm:$0xff] 0.0
    %26 = vst [vmem:[#allocation2 + $0x50] sm:$0xff] 0.0
    %27 = vst [vmem:[#allocation2 + $0x58] sm:$0xff] 0.0
    %28 = vst [vmem:[#allocation2 + $0x60] sm:$0xff] 0.0
    %29 = vst [vmem:[#allocation2 + $0x68] sm:$0xff] 0.0
    %30 = vst [vmem:[#allocation2 + $0x70] sm:$0xff] 0.0
    %31 = vst [vmem:[#allocation2 + $0x78] sm:$0xff] 0.0
    %32 = vst [vmem:[#allocation2 + $0x80] sm:$0xff] 0.0
    %33 = vst [vmem:[#allocation2 + $0x88] sm:$0xff] 0.0
    %34 = vst [vmem:[#allocation2 + $0x90] sm:$0xff] 0.0
    %35 = vst [vmem:[#allocation2 + $0x98] sm:$0xff] 0.0
    %36 = vst [vmem:[#allocation2 + $0xa0] sm:$0xff] 0.0
    %37 = vst [vmem:[#allocation2 + $0xa8] sm:$0xff] 0.0
    %38 = vst [vmem:[#allocation2 + $0xb0] sm:$0xff] 0.0
    %39 = vst [vmem:[#allocation2 + $0xb8] sm:$0xff] 0.0
    %40 = vst [vmem:[#allocation2 + $0xc0] sm:$0xff] 0.0
    %41 = vst [vmem:[#allocation2 + $0xc8] sm:$0xff] 0.0
    %42 = vst [vmem:[#allocation2 + $0xd0] sm:$0xff] 0.0
    %43 = vst [vmem:[#allocation2 + $0xd8] sm:$0xff] 0.0
    %44 = vst [vmem:[#allocation2 + $0xe0] sm:$0xff] 0.0
    %45 = vst [vmem:[#allocation2 + $0xe8] sm:$0xff] 0.0
    %46 = vst [vmem:[#allocation2 + $0xf0] sm:$0xff] 0.0
    %47 = vst [vmem:[#allocation2 + $0xf8] sm:$0xff] 0.0
    %48 = vst [vmem:[#allocation3] sm:$0xff] 0.0
    %49 = vst [vmem:[#allocation3 + $0x8] sm:$0xff] 0.0
    %50 = vst [vmem:[#allocation3 + $0x10] sm:$0xff] 0.0
    %51 = vst [vmem:[#allocation3 + $0x18] sm:$0xff] 0.0
    %52 = vst [vmem:[#allocation3 + $0x20] sm:$0xff] 0.0
    %53 = vst [vmem:[#allocation3 + $0x28] sm:$0xff] 0.0
    %54 = vst [vmem:[#allocation3 + $0x30] sm:$0xff] 0.0
    %55 = vst [vmem:[#allocation3 + $0x38] sm:$0xff] 0.0
    %56 = vst [vmem:[#allocation3 + $0x40] sm:$0xff] 0.0
    %57 = vst [vmem:[#allocation3 + $0x48] sm:$0xff] 0.0
    %58 = vst [vmem:[#allocation3 + $0x50] sm:$0xff] 0.0
    %59 = vst [vmem:[#allocation3 + $0x58] sm:$0xff] 0.0
    %60 = vst [vmem:[#allocation3 + $0x60] sm:$0xff] 0.0
    %61 = vst [vmem:[#allocation3 + $0x68] sm:$0xff] 0.0
    %62 = vst [vmem:[#allocation3 + $0x70] sm:$0xff] 0.0
    %63 = vst [vmem:[#allocation3 + $0x78] sm:$0xff] 0.0
    %64 = vst [vmem:[#allocation3 + $0x80] sm:$0xff] 0.0
    %65 = vst [vmem:[#allocation3 + $0x88] sm:$0xff] 0.0
    %66 = vst [vmem:[#allocation3 + $0x90] sm:$0xff] 0.0
    %67 = vst [vmem:[#allocation3 + $0x98] sm:$0xff] 0.0
    %68 = vst [vmem:[#allocation3 + $0xa0] sm:$0xff] 0.0
    %69 = vst [vmem:[#allocation3 + $0xa8] sm:$0xff] 0.0
    %70 = vst [vmem:[#allocation3 + $0xb0] sm:$0xff] 0.0
    %71 = vst [vmem:[#allocation3 + $0xb8] sm:$0xff] 0.0
    %72 = vst [vmem:[#allocation3 + $0xc0] sm:$0xff] 0.0
    %73 = vst [vmem:[#allocation3 + $0xc8] sm:$0xff] 0.0
    %74 = vst [vmem:[#allocation3 + $0xd0] sm:$0xff] 0.0
    %75 = vst [vmem:[#allocation3 + $0xd8] sm:$0xff] 0.0
    %76 = vst [vmem:[#allocation3 + $0xe0] sm:$0xff] 0.0
    %77 = vst [vmem:[#allocation3 + $0xe8] sm:$0xff] 0.0
    %78 = vst [vmem:[#allocation3 + $0xf0] sm:$0xff] 0.0
    %79 = vst [vmem:[#allocation3 + $0xf8] sm:$0xff] 0.0
  $region13: #{unitary_complex_linear.1} parent=0 // pred_fallthru
    _
  %v80 = vld [vmem:[%s0] sm:$0xf]
  %v81 = vld [vmem:[%s0 + $0x4] sm:$0xf]
  %v82 = vld [vmem:[%s0 + $0x8] sm:$0xf]
  %v83 = vld [vmem:[%s0 + $0xc] sm:$0xf]
  %v84 = vld [vmem:[%s0 + $0x10] sm:$0xf]
  %v85 = vld [vmem:[%s0 + $0x14] sm:$0xf]
  %v86 = vld [vmem:[%s0 + $0x18] sm:$0xf]
  %v87 = vld [vmem:[%s0 + $0x1c] sm:$0xf]
  %v88 = vld [vmem:[%s0 + $0x20] sm:$0xf]
  %v89 = vld [vmem:[%s0 + $0x24] sm:$0xf]
  %v90 = vld [vmem:[%s0 + $0x28] sm:$0xf]
  %v91 = vld [vmem:[%s0 + $0x2c] sm:$0xf]
  %v92 = vld [vmem:[%s0 + $0x30] sm:$0xf]
  %v93 = vld [vmem:[%s0 + $0x34] sm:$0xf]
  %v94 = vld [vmem:[%s0 + $0x38] sm:$0xf]
  %v95 = vld [vmem:[%s0 + $0x3c] sm:$0xf]
  %v96 = vld [vmem:[%s0 + $0x40] sm:$0xf]
  %v97 = vld [vmem:[%s0 + $0x44] sm:$0xf]
  %v98 = vld [vmem:[%s0 + $0x48] sm:$0xf]
  %v99 = vld [vmem:[%s0 + $0x4c] sm:$0xf]
  %v100 = vld [vmem:[%s0 + $0x50] sm:$0xf]
  %v101 = vld [vmem:[%s0 + $0x54] sm:$0xf]
  %v102 = vld [vmem:[%s0 + $0x58] sm:$0xf]
  %v103 = vld [vmem:[%s0 + $0x5c] sm:$0xf]
  %v104 = vld [vmem:[%s0 + $0x60] sm:$0xf]
  %v105 = vld [vmem:[%s0 + $0x64] sm:$0xf]
  %v106 = vld [vmem:[%s0 + $0x68] sm:$0xf]
  %v107 = vld [vmem:[%s0 + $0x6c] sm:$0xf]
  %v108 = vld [vmem:[%s0 + $0x70] sm:$0xf]
  %v109 = vld [vmem:[%s0 + $0x74] sm:$0xf]
  %v110 = vld [vmem:[%s0 + $0x78] sm:$0xf]
  %v111 = vld [vmem:[%s0 + $0x7c] sm:$0xf]
  %s112 = scalar_lea.vmem %s0, 128
  %v113 = vld [vmem:[%s112] sm:$0xf]
  %v114 = vld [vmem:[%s112 + $0x4] sm:$0xf]
  %v115 = vld [vmem:[%s112 + $0x8] sm:$0xf]
  %v116 = vld [vmem:[%s112 + $0xc] sm:$0xf]
  %v117 = vld [vmem:[%s112 + $0x10] sm:$0xf]
  %v118 = vld [vmem:[%s112 + $0x14] sm:$0xf]
  %v119 = vld [vmem:[%s112 + $0x18] sm:$0xf]
  %v120 = vld [vmem:[%s112 + $0x1c] sm:$0xf]
  %v121 = vld [vmem:[%s112 + $0x20] sm:$0xf]
  %v122 = vld [vmem:[%s112 + $0x24] sm:$0xf]
  %v123 = vld [vmem:[%s112 + $0x28] sm:$0xf]
  %v124 = vld [vmem:[%s112 + $0x2c] sm:$0xf]
  %v125 = vld [vmem:[%s112 + $0x30] sm:$0xf]
  %v126 = vld [vmem:[%s112 + $0x34] sm:$0xf]
  %v127 = vld [vmem:[%s112 + $0x38] sm:$0xf]
  %v128 = vld [vmem:[%s112 + $0x3c] sm:$0xf]
  %v129 = vld [vmem:[%s112 + $0x40] sm:$0xf]
  %v130 = vld [vmem:[%s112 + $0x44] sm:$0xf]
  %v131 = vld [vmem:[%s112 + $0x48] sm:$0xf]
  %v132 = vld [vmem:[%s112 + $0x4c] sm:$0xf]
  %v133 = vld [vmem:[%s112 + $0x50] sm:$0xf]
  %v134 = vld [vmem:[%s112 + $0x54] sm:$0xf]
  %v135 = vld [vmem:[%s112 + $0x58] sm:$0xf]
  %v136 = vld [vmem:[%s112 + $0x5c] sm:$0xf]
  %v137 = vld [vmem:[%s112 + $0x60] sm:$0xf]
  %v138 = vld [vmem:[%s112 + $0x64] sm:$0xf]
  %v139 = vld [vmem:[%s112 + $0x68] sm:$0xf]
  %v140 = vld [vmem:[%s112 + $0x6c] sm:$0xf]
  %v141 = vld [vmem:[%s112 + $0x70] sm:$0xf]
  %v142 = vld [vmem:[%s112 + $0x74] sm:$0xf]
  %v143 = vld [vmem:[%s112 + $0x78] sm:$0xf]
  %v144 = vld [vmem:[%s112 + $0x7c] sm:$0xf]
  %v145 = vld [vmem:[%s1] sm:$0xf]
  %v146 = vld [vmem:[%s1 + $0x4] sm:$0xf]
  %v147 = vld [vmem:[%s1 + $0x8] sm:$0xf]
  %v148 = vld [vmem:[%s1 + $0xc] sm:$0xf]
  %v149 = vld [vmem:[%s1 + $0x10] sm:$0xf]
  %v150 = vld [vmem:[%s1 + $0x14] sm:$0xf]
  %v151 = vld [vmem:[%s1 + $0x18] sm:$0xf]
  %v152 = vld [vmem:[%s1 + $0x1c] sm:$0xf]
  %v153 = vld [vmem:[%s1 + $0x20] sm:$0xf]
  %v154 = vld [vmem:[%s1 + $0x24] sm:$0xf]
  %v155 = vld [vmem:[%s1 + $0x28] sm:$0xf]
  %v156 = vld [vmem:[%s1 + $0x2c] sm:$0xf]
  %v157 = vld [vmem:[%s1 + $0x30] sm:$0xf]
  %v158 = vld [vmem:[%s1 + $0x34] sm:$0xf]
  %v159 = vld [vmem:[%s1 + $0x38] sm:$0xf]
  %v160 = vld [vmem:[%s1 + $0x3c] sm:$0xf]
  %s161 = scalar_lea.vmem %s1, 64
  %v162 = vld [vmem:[%s161] sm:$0xf]
  %v163 = vld [vmem:[%s161 + $0x4] sm:$0xf]
  %v164 = vld [vmem:[%s161 + $0x8] sm:$0xf]
  %v165 = vld [vmem:[%s161 + $0xc] sm:$0xf]
  %v166 = vld [vmem:[%s161 + $0x10] sm:$0xf]
  %v167 = vld [vmem:[%s161 + $0x14] sm:$0xf]
  %v168 = vld [vmem:[%s161 + $0x18] sm:$0xf]
  %v169 = vld [vmem:[%s161 + $0x1c] sm:$0xf]
  %v170 = vld [vmem:[%s161 + $0x20] sm:$0xf]
  %v171 = vld [vmem:[%s161 + $0x24] sm:$0xf]
  %v172 = vld [vmem:[%s161 + $0x28] sm:$0xf]
  %v173 = vld [vmem:[%s161 + $0x2c] sm:$0xf]
  %v174 = vld [vmem:[%s161 + $0x30] sm:$0xf]
  %v175 = vld [vmem:[%s161 + $0x34] sm:$0xf]
  %v176 = vld [vmem:[%s161 + $0x38] sm:$0xf]
  %v177 = vld [vmem:[%s161 + $0x3c] sm:$0xf]
  %v210 = vunpack.c.l.b16 %v80
  %v211 = vunpack.c.l.b16 %v81
  %v212 = vunpack.c.l.b16 %v82
  %v213 = vunpack.c.l.b16 %v83
  %v214 = vunpack.c.l.b16 %v84
  %v215 = vunpack.c.l.b16 %v85
  %v216 = vunpack.c.l.b16 %v86
  %v217 = vunpack.c.l.b16 %v87
  %v218 = vunpack.c.l.b16 %v88
  %v219 = vunpack.c.l.b16 %v89
  %v220 = vunpack.c.l.b16 %v90
  %v221 = vunpack.c.l.b16 %v91
  %v222 = vunpack.c.l.b16 %v92
  %v223 = vunpack.c.l.b16 %v93
  %v224 = vunpack.c.l.b16 %v94
  %v225 = vunpack.c.l.b16 %v95
  %v226 = vunpack.c.l.b16 %v96
  %v227 = vunpack.c.l.b16 %v97
  %v228 = vunpack.c.l.b16 %v98
  %v229 = vunpack.c.l.b16 %v99
  %v230 = vunpack.c.l.b16 %v100
  %v231 = vunpack.c.l.b16 %v101
  %v232 = vunpack.c.l.b16 %v102
  %v233 = vunpack.c.l.b16 %v103
  %v234 = vunpack.c.l.b16 %v104
  %v235 = vunpack.c.l.b16 %v105
  %v236 = vunpack.c.l.b16 %v106
  %v237 = vunpack.c.l.b16 %v107
  %v238 = vunpack.c.l.b16 %v108
  %v239 = vunpack.c.l.b16 %v109
  %v240 = vunpack.c.l.b16 %v110
  %v241 = vunpack.c.l.b16 %v111
  %v242 = vpack.c.b16 %v211, %v210
  %v243 = vpack.c.b16 %v213, %v212
  %v244 = vpack.c.b16 %v215, %v214
  %v245 = vpack.c.b16 %v217, %v216
  %v246 = vpack.c.b16 %v219, %v218
  %v247 = vpack.c.b16 %v221, %v220
  %v248 = vpack.c.b16 %v223, %v222
  %v249 = vpack.c.b16 %v225, %v224
  %v250 = vpack.c.b16 %v227, %v226
  %v251 = vpack.c.b16 %v229, %v228
  %v252 = vpack.c.b16 %v231, %v230
  %v253 = vpack.c.b16 %v233, %v232
  %v254 = vpack.c.b16 %v235, %v234
  %v255 = vpack.c.b16 %v237, %v236
  %v256 = vpack.c.b16 %v239, %v238
  %v257 = vpack.c.b16 %v241, %v240
  %v290 = vunpack.c.l.b16 %v145
  %v291 = vunpack.c.l.b16 %v146
  %v292 = vunpack.c.l.b16 %v147
  %v293 = vunpack.c.l.b16 %v148
  %v294 = vunpack.c.l.b16 %v149
  %v295 = vunpack.c.l.b16 %v150
  %v296 = vunpack.c.l.b16 %v151
  %v297 = vunpack.c.l.b16 %v152
  %v298 = vunpack.c.l.b16 %v153
  %v299 = vunpack.c.l.b16 %v154
  %v300 = vunpack.c.l.b16 %v155
  %v301 = vunpack.c.l.b16 %v156
  %v302 = vunpack.c.l.b16 %v157
  %v303 = vunpack.c.l.b16 %v158
  %v304 = vunpack.c.l.b16 %v159
  %v305 = vunpack.c.l.b16 %v160
  %v306 = vpack.c.b16 %v291, %v290
  %v307 = vpack.c.b16 %v293, %v292
  %v308 = vpack.c.b16 %v295, %v294
  %v309 = vpack.c.b16 %v297, %v296
  %v310 = vpack.c.b16 %v299, %v298
  %v311 = vpack.c.b16 %v301, %v300
  %v312 = vpack.c.b16 %v303, %v302
  %v313 = vpack.c.b16 %v305, %v304
  %322 = vmatprep.subr.bf16.mxu0 0
  %323 = vmatpush1.bf16.msra.mxu0 %v306
  %324 = vmatprep.subr.bf16.mxu0 0
  %325 = vmatpush1.bf16.msra.mxu0 %v307
  %326 = vmatprep.subr.bf16.mxu0 0
  %327 = vmatpush1.bf16.msra.mxu0 %v308
  %328 = vmatprep.subr.bf16.mxu0 0
  %329 = vmatpush1.bf16.msra.mxu0 %v309
  %330 = vmatprep.subr.bf16.mxu0 0
  %331 = vmatpush1.bf16.msra.mxu0 %v310
  %332 = vmatprep.subr.bf16.mxu0 0
  %333 = vmatpush1.bf16.msra.mxu0 %v311
  %334 = vmatprep.subr.bf16.mxu0 0
  %335 = vmatpush1.bf16.msra.mxu0 %v312
  %336 = vmatprep.subr.bf16.mxu0 0
  %337 = vmatpush1.bf16.msra.mxu0 %v313
  %338 = vmatprep.subr.bf16.mxu0 0
  %339 = vmatpush1.bf16.msra.mxu0 0
  %340 = vmatprep.subr.bf16.mxu0 0
  %341 = vmatpush1.bf16.msra.mxu0 0
  %342 = vmatprep.subr.bf16.mxu0 0
  %343 = vmatpush1.bf16.msra.mxu0 0
  %344 = vmatprep.subr.bf16.mxu0 0
  %345 = vmatpush1.bf16.msra.mxu0 0
  %346 = vmatprep.subr.bf16.mxu0 0
  %347 = vmatpush1.bf16.msra.mxu0 0
  %348 = vmatprep.subr.bf16.mxu0 0
  %349 = vmatpush1.bf16.msra.mxu0 0
  %350 = vmatprep.subr.bf16.mxu0 0
  %351 = vmatpush1.bf16.msra.mxu0 0
  %352 = vmatprep.subr.bf16.mxu0 0
  %353 = vmatpush1.bf16.msra.mxu0 0
  %354 = vmatprep.mubr.bf16.mxu0 0
  %355 = vmatmul.mubr.bf16.gmra.mrb[0].mxu0 %v242
  %v356 = vpop.f32.mrb[0].mxu0
  %v357 = vadd.f32 0.0, %v356
  %v358 = vpop.f32.mrb[0].mxu0
  %v359 = vpop.f32.mrb[0].mxu0
  %v360 = vadd.f32 0.0, %v359
  %v361 = vpop.f32.mrb[0].mxu0
  %362 = vmatprep.mubr.bf16.mxu0 0
  %363 = vmatmul.mubr.bf16.gmra.mrb[0].mxu0 %v243
  %v364 = vpop.f32.mrb[0].mxu0
  %v365 = vadd.f32 0.0, %v364
  %v366 = vpop.f32.mrb[0].mxu0
  %v367 = vpop.f32.mrb[0].mxu0
  %v368 = vadd.f32 0.0, %v367
  %v369 = vpop.f32.mrb[0].mxu0
  %370 = vmatprep.mubr.bf16.mxu0 0
  %371 = vmatmul.mubr.bf16.gmra.mrb[0].mxu0 %v244
  %v372 = vpop.f32.mrb[0].mxu0
  %v373 = vadd.f32 0.0, %v372
  %v374 = vpop.f32.mrb[0].mxu0
  %v375 = vpop.f32.mrb[0].mxu0
  %v376 = vadd.f32 0.0, %v375
  %v377 = vpop.f32.mrb[0].mxu0
  %378 = vmatprep.mubr.bf16.mxu0 0
  %379 = vmatmul.mubr.bf16.gmra.mrb[0].mxu0 %v245
  %v380 = vpop.f32.mrb[0].mxu0
  %v381 = vadd.f32 0.0, %v380
  %v382 = vpop.f32.mrb[0].mxu0
  %v383 = vpop.f32.mrb[0].mxu0
  %v384 = vadd.f32 0.0, %v383
  %v385 = vpop.f32.mrb[0].mxu0
  %386 = vmatprep.mubr.bf16.mxu0 0
  %387 = vmatmul.mubr.bf16.gmra.mrb[0].mxu0 %v246
  %v388 = vpop.f32.mrb[0].mxu0
  %v389 = vadd.f32 0.0, %v388
  %v390 = vpop.f32.mrb[0].mxu0
  %v391 = vpop.f32.mrb[0].mxu0
  %v392 = vadd.f32 0.0, %v391
  %v393 = vpop.f32.mrb[0].mxu0
  %394 = vmatprep.mubr.bf16.mxu0 0
  %395 = vmatmul.mubr.bf16.gmra.mrb[0].mxu0 %v247
  %v396 = vpop.f32.mrb[0].mxu0
  %v397 = vadd.f32 0.0, %v396
  %v398 = vpop.f32.mrb[0].mxu0
  %v399 = vpop.f32.mrb[0].mxu0
  %v400 = vadd.f32 0.0, %v399
  %v401 = vpop.f32.mrb[0].mxu0
  %402 = vmatprep.mubr.bf16.mxu0 0
  %403 = vmatmul.mubr.bf16.gmra.mrb[0].mxu0 %v248
  %v404 = vpop.f32.mrb[0].mxu0
  %v405 = vadd.f32 0.0, %v404
  %v406 = vpop.f32.mrb[0].mxu0
  %v407 = vpop.f32.mrb[0].mxu0
  %v408 = vadd.f32 0.0, %v407
  %v409 = vpop.f32.mrb[0].mxu0
  %410 = vmatprep.mubr.bf16.mxu0 0
  %411 = vmatmul.mubr.bf16.gmra.mrb[0].mxu0 %v249
  %v412 = vpop.f32.mrb[0].mxu0
  %v413 = vadd.f32 0.0, %v412
  %v414 = vpop.f32.mrb[0].mxu0
  %v415 = vpop.f32.mrb[0].mxu0
  %v416 = vadd.f32 0.0, %v415
  %v417 = vpop.f32.mrb[0].mxu0
  %418 = vmatprep.mubr.bf16.mxu0 0
  %419 = vmatmul.mubr.bf16.gmra.mrb[0].mxu0 %v250
  %v420 = vpop.f32.mrb[0].mxu0
  %v421 = vadd.f32 0.0, %v420
  %v422 = vpop.f32.mrb[0].mxu0
  %v423 = vpop.f32.mrb[0].mxu0
  %v424 = vadd.f32 0.0, %v423
  %v425 = vpop.f32.mrb[0].mxu0
  %426 = vmatprep.mubr.bf16.mxu0 0
  %427 = vmatmul.mubr.bf16.gmra.mrb[0].mxu0 %v251
  %v428 = vpop.f32.mrb[0].mxu0
  %v429 = vadd.f32 0.0, %v428
  %v430 = vpop.f32.mrb[0].mxu0
  %v431 = vpop.f32.mrb[0].mxu0
  %v432 = vadd.f32 0.0, %v431
  %v433 = vpop.f32.mrb[0].mxu0
  %434 = vmatprep.mubr.bf16.mxu0 0
  %435 = vmatmul.mubr.bf16.gmra.mrb[0].mxu0 %v252
  %v436 = vpop.f32.mrb[0].mxu0
  %v437 = vadd.f32 0.0, %v436
  %v438 = vpop.f32.mrb[0].mxu0
  %v439 = vpop.f32.mrb[0].mxu0
  %v440 = vadd.f32 0.0, %v439
  %v441 = vpop.f32.mrb[0].mxu0
  %442 = vmatprep.mubr.bf16.mxu0 0
  %443 = vmatmul.mubr.bf16.gmra.mrb[0].mxu0 %v253
  %v444 = vpop.f32.mrb[0].mxu0
  %v445 = vadd.f32 0.0, %v444
  %v446 = vpop.f32.mrb[0].mxu0
  %v447 = vpop.f32.mrb[0].mxu0
  %v448 = vadd.f32 0.0, %v447
  %v449 = vpop.f32.mrb[0].mxu0
  %450 = vmatprep.mubr.bf16.mxu0 0
  %451 = vmatmul.mubr.bf16.gmra.mrb[0].mxu0 %v254
  %v452 = vpop.f32.mrb[0].mxu0
  %v453 = vadd.f32 0.0, %v452
  %v454 = vpop.f32.mrb[0].mxu0
  %v455 = vpop.f32.mrb[0].mxu0
  %v456 = vadd.f32 0.0, %v455
  %v457 = vpop.f32.mrb[0].mxu0
  %458 = vmatprep.mubr.bf16.mxu0 0
  %459 = vmatmul.mubr.bf16.gmra.mrb[0].mxu0 %v255
  %v460 = vpop.f32.mrb[0].mxu0
  %v461 = vadd.f32 0.0, %v460
  %v462 = vpop.f32.mrb[0].mxu0
  %v463 = vpop.f32.mrb[0].mxu0
  %v464 = vadd.f32 0.0, %v463
  %v465 = vpop.f32.mrb[0].mxu0
  %466 = vmatprep.mubr.bf16.mxu0 0
  %467 = vmatmul.mubr.bf16.gmra.mrb[0].mxu0 %v256
  %v468 = vpop.f32.mrb[0].mxu0
  %v469 = vadd.f32 0.0, %v468
  %v470 = vpop.f32.mrb[0].mxu0
  %v471 = vpop.f32.mrb[0].mxu0
  %v472 = vadd.f32 0.0, %v471
  %v473 = vpop.f32.mrb[0].mxu0
  %474 = vmatprep.mubr.bf16.mxu0 0
  %475 = vmatmul.mubr.bf16.gmra.mrb[0].mxu0 %v257
  %v476 = vpop.f32.mrb[0].mxu0
  %v477 = vadd.f32 0.0, %v476
  %v478 = vpop.f32.mrb[0].mxu0
  %v479 = vpop.f32.mrb[0].mxu0
  %v480 = vadd.f32 0.0, %v479
  %v481 = vpop.f32.mrb[0].mxu0
  %482 = vdwg.mxu0
  %v515 = vunpack.c.l.b16 %v113
  %v516 = vunpack.c.l.b16 %v114
  %v517 = vunpack.c.l.b16 %v115
  %v518 = vunpack.c.l.b16 %v116
  %v519 = vunpack.c.l.b16 %v117
  %v520 = vunpack.c.l.b16 %v118
  %v521 = vunpack.c.l.b16 %v119
  %v522 = vunpack.c.l.b16 %v120
  %v523 = vunpack.c.l.b16 %v121
  %v524 = vunpack.c.l.b16 %v122
  %v525 = vunpack.c.l.b16 %v123
  %v526 = vunpack.c.l.b16 %v124
  %v527 = vunpack.c.l.b16 %v125
  %v528 = vunpack.c.l.b16 %v126
  %v529 = vunpack.c.l.b16 %v127
  %v530 = vunpack.c.l.b16 %v128
  %v531 = vunpack.c.l.b16 %v129
  %v532 = vunpack.c.l.b16 %v130
  %v533 = vunpack.c.l.b16 %v131
  %v534 = vunpack.c.l.b16 %v132
  %v535 = vunpack.c.l.b16 %v133
  %v536 = vunpack.c.l.b16 %v134
  %v537 = vunpack.c.l.b16 %v135
  %v538 = vunpack.c.l.b16 %v136
  %v539 = vunpack.c.l.b16 %v137
  %v540 = vunpack.c.l.b16 %v138
  %v541 = vunpack.c.l.b16 %v139
  %v542 = vunpack.c.l.b16 %v140
  %v543 = vunpack.c.l.b16 %v141
  %v544 = vunpack.c.l.b16 %v142
  %v545 = vunpack.c.l.b16 %v143
  %v546 = vunpack.c.l.b16 %v144
  %v547 = vpack.c.b16 %v516, %v515
  %v548 = vpack.c.b16 %v518, %v517
  %v549 = vpack.c.b16 %v520, %v519
  %v550 = vpack.c.b16 %v522, %v521
  %v551 = vpack.c.b16 %v524, %v523
  %v552 = vpack.c.b16 %v526, %v525
  %v553 = vpack.c.b16 %v528, %v527
  %v554 = vpack.c.b16 %v530, %v529
  %v555 = vpack.c.b16 %v532, %v531
  %v556 = vpack.c.b16 %v534, %v533
  %v557 = vpack.c.b16 %v536, %v535
  %v558 = vpack.c.b16 %v538, %v537
  %v559 = vpack.c.b16 %v540, %v539
  %v560 = vpack.c.b16 %v542, %v541
  %v561 = vpack.c.b16 %v544, %v543
  %v562 = vpack.c.b16 %v546, %v545
  %v595 = vunpack.c.l.b16 %v162
  %v596 = vunpack.c.l.b16 %v163
  %v597 = vunpack.c.l.b16 %v164
  %v598 = vunpack.c.l.b16 %v165
  %v599 = vunpack.c.l.b16 %v166
  %v600 = vunpack.c.l.b16 %v167
  %v601 = vunpack.c.l.b16 %v168
  %v602 = vunpack.c.l.b16 %v169
  %v603 = vunpack.c.l.b16 %v170
  %v604 = vunpack.c.l.b16 %v171
  %v605 = vunpack.c.l.b16 %v172
  %v606 = vunpack.c.l.b16 %v173
  %v607 = vunpack.c.l.b16 %v174
  %v608 = vunpack.c.l.b16 %v175
  %v609 = vunpack.c.l.b16 %v176
  %v610 = vunpack.c.l.b16 %v177
  %v611 = vpack.c.b16 %v596, %v595
  %v612 = vpack.c.b16 %v598, %v597
  %v613 = vpack.c.b16 %v600, %v599
  %v614 = vpack.c.b16 %v602, %v601
  %v615 = vpack.c.b16 %v604, %v603
  %v616 = vpack.c.b16 %v606, %v605
  %v617 = vpack.c.b16 %v608, %v607
  %v618 = vpack.c.b16 %v610, %v609
  %627 = vmatprep.subr.bf16.mxu0 0
  %628 = vmatpush1.bf16.msra.mxu0 %v611
  %629 = vmatprep.subr.bf16.mxu0 0
  %630 = vmatpush1.bf16.msra.mxu0 %v612
  %631 = vmatprep.subr.bf16.mxu0 0
  %632 = vmatpush1.bf16.msra.mxu0 %v613
  %633 = vmatprep.subr.bf16.mxu0 0
  %634 = vmatpush1.bf16.msra.mxu0 %v614
  %635 = vmatprep.subr.bf16.mxu0 0
  %636 = vmatpush1.bf16.msra.mxu0 %v615
  %637 = vmatprep.subr.bf16.mxu0 0
  %638 = vmatpush1.bf16.msra.mxu0 %v616
  %639 = vmatprep.subr.bf16.mxu0 0
  %640 = vmatpush1.bf16.msra.mxu0 %v617
  %641 = vmatprep.subr.bf16.mxu0 0
  %642 = vmatpush1.bf16.msra.mxu0 %v618
  %643 = vmatprep.subr.bf16.mxu0 0
  %644 = vmatpush1.bf16.msra.mxu0 0
  %645 = vmatprep.subr.bf16.mxu0 0
  %646 = vmatpush1.bf16.msra.mxu0 0
  %647 = vmatprep.subr.bf16.mxu0 0
  %648 = vmatpush1.bf16.msra.mxu0 0
  %649 = vmatprep.subr.bf16.mxu0 0
  %650 = vmatpush1.bf16.msra.mxu0 0
  %651 = vmatprep.subr.bf16.mxu0 0
  %652 = vmatpush1.bf16.msra.mxu0 0
  %653 = vmatprep.subr.bf16.mxu0 0
  %654 = vmatpush1.bf16.msra.mxu0 0
  %655 = vmatprep.subr.bf16.mxu0 0
  %656 = vmatpush1.bf16.msra.mxu0 0
  %657 = vmatprep.subr.bf16.mxu0 0
  %658 = vmatpush1.bf16.msra.mxu0 0
  %659 = vmatprep.mubr.bf16.mxu0 0
  %660 = vmatmul.mubr.bf16.gmra.mrb[0].mxu0 %v547
  %v661 = vpop.f32.mrb[0].mxu0
  %v662 = vadd.f32 0.0, %v661
  %v663 = vpop.f32.mrb[0].mxu0
  %v664 = vpop.f32.mrb[0].mxu0
  %v665 = vadd.f32 0.0, %v664
  %v666 = vpop.f32.mrb[0].mxu0
  %667 = vmatprep.mubr.bf16.mxu0 0
  %668 = vmatmul.mubr.bf16.gmra.mrb[0].mxu0 %v548
  %v669 = vpop.f32.mrb[0].mxu0
  %v670 = vadd.f32 0.0, %v669
  %v671 = vpop.f32.mrb[0].mxu0
  %v672 = vpop.f32.mrb[0].mxu0
  %v673 = vadd.f32 0.0, %v672
  %v674 = vpop.f32.mrb[0].mxu0
  %675 = vmatprep.mubr.bf16.mxu0 0
  %676 = vmatmul.mubr.bf16.gmra.mrb[0].mxu0 %v549
  %v677 = vpop.f32.mrb[0].mxu0
  %v678 = vadd.f32 0.0, %v677
  %v679 = vpop.f32.mrb[0].mxu0
  %v680 = vpop.f32.mrb[0].mxu0
  %v681 = vadd.f32 0.0, %v680
  %v682 = vpop.f32.mrb[0].mxu0
  %683 = vmatprep.mubr.bf16.mxu0 0
  %684 = vmatmul.mubr.bf16.gmra.mrb[0].mxu0 %v550
  %v685 = vpop.f32.mrb[0].mxu0
  %v686 = vadd.f32 0.0, %v685
  %v687 = vpop.f32.mrb[0].mxu0
  %v688 = vpop.f32.mrb[0].mxu0
  %v689 = vadd.f32 0.0, %v688
  %v690 = vpop.f32.mrb[0].mxu0
  %691 = vmatprep.mubr.bf16.mxu0 0
  %692 = vmatmul.mubr.bf16.gmra.mrb[0].mxu0 %v551
  %v693 = vpop.f32.mrb[0].mxu0
  %v694 = vadd.f32 0.0, %v693
  %v695 = vpop.f32.mrb[0].mxu0
  %v696 = vpop.f32.mrb[0].mxu0
  %v697 = vadd.f32 0.0, %v696
  %v698 = vpop.f32.mrb[0].mxu0
  %699 = vmatprep.mubr.bf16.mxu0 0
  %700 = vmatmul.mubr.bf16.gmra.mrb[0].mxu0 %v552
  %v701 = vpop.f32.mrb[0].mxu0
  %v702 = vadd.f32 0.0, %v701
  %v703 = vpop.f32.mrb[0].mxu0
  %v704 = vpop.f32.mrb[0].mxu0
  %v705 = vadd.f32 0.0, %v704
  %v706 = vpop.f32.mrb[0].mxu0
  %707 = vmatprep.mubr.bf16.mxu0 0
  %708 = vmatmul.mubr.bf16.gmra.mrb[0].mxu0 %v553
  %v709 = vpop.f32.mrb[0].mxu0
  %v710 = vadd.f32 0.0, %v709
  %v711 = vpop.f32.mrb[0].mxu0
  %v712 = vpop.f32.mrb[0].mxu0
  %v713 = vadd.f32 0.0, %v712
  %v714 = vpop.f32.mrb[0].mxu0
  %715 = vmatprep.mubr.bf16.mxu0 0
  %716 = vmatmul.mubr.bf16.gmra.mrb[0].mxu0 %v554
  %v717 = vpop.f32.mrb[0].mxu0
  %v718 = vadd.f32 0.0, %v717
  %v719 = vpop.f32.mrb[0].mxu0
  %v720 = vpop.f32.mrb[0].mxu0
  %v721 = vadd.f32 0.0, %v720
  %v722 = vpop.f32.mrb[0].mxu0
  %723 = vmatprep.mubr.bf16.mxu0 0
  %724 = vmatmul.mubr.bf16.gmra.mrb[0].mxu0 %v555
  %v725 = vpop.f32.mrb[0].mxu0
  %v726 = vadd.f32 0.0, %v725
  %v727 = vpop.f32.mrb[0].mxu0
  %v728 = vpop.f32.mrb[0].mxu0
  %v729 = vadd.f32 0.0, %v728
  %v730 = vpop.f32.mrb[0].mxu0
  %731 = vmatprep.mubr.bf16.mxu0 0
  %732 = vmatmul.mubr.bf16.gmra.mrb[0].mxu0 %v556
  %v733 = vpop.f32.mrb[0].mxu0
  %v734 = vadd.f32 0.0, %v733
  %v735 = vpop.f32.mrb[0].mxu0
  %v736 = vpop.f32.mrb[0].mxu0
  %v737 = vadd.f32 0.0, %v736
  %v738 = vpop.f32.mrb[0].mxu0
  %739 = vmatprep.mubr.bf16.mxu0 0
  %740 = vmatmul.mubr.bf16.gmra.mrb[0].mxu0 %v557
  %v741 = vpop.f32.mrb[0].mxu0
  %v742 = vadd.f32 0.0, %v741
  %v743 = vpop.f32.mrb[0].mxu0
  %v744 = vpop.f32.mrb[0].mxu0
  %v745 = vadd.f32 0.0, %v744
  %v746 = vpop.f32.mrb[0].mxu0
  %747 = vmatprep.mubr.bf16.mxu0 0
  %748 = vmatmul.mubr.bf16.gmra.mrb[0].mxu0 %v558
  %v749 = vpop.f32.mrb[0].mxu0
  %v750 = vadd.f32 0.0, %v749
  %v751 = vpop.f32.mrb[0].mxu0
  %v752 = vpop.f32.mrb[0].mxu0
  %v753 = vadd.f32 0.0, %v752
  %v754 = vpop.f32.mrb[0].mxu0
  %755 = vmatprep.mubr.bf16.mxu0 0
  %756 = vmatmul.mubr.bf16.gmra.mrb[0].mxu0 %v559
  %v757 = vpop.f32.mrb[0].mxu0
  %v758 = vadd.f32 0.0, %v757
  %v759 = vpop.f32.mrb[0].mxu0
  %v760 = vpop.f32.mrb[0].mxu0
  %v761 = vadd.f32 0.0, %v760
  %v762 = vpop.f32.mrb[0].mxu0
  %763 = vmatprep.mubr.bf16.mxu0 0
  %764 = vmatmul.mubr.bf16.gmra.mrb[0].mxu0 %v560
  %v765 = vpop.f32.mrb[0].mxu0
  %v766 = vadd.f32 0.0, %v765
  %v767 = vpop.f32.mrb[0].mxu0
  %v768 = vpop.f32.mrb[0].mxu0
  %v769 = vadd.f32 0.0, %v768
  %v770 = vpop.f32.mrb[0].mxu0
  %771 = vmatprep.mubr.bf16.mxu0 0
  %772 = vmatmul.mubr.bf16.gmra.mrb[0].mxu0 %v561
  %v773 = vpop.f32.mrb[0].mxu0
  %v774 = vadd.f32 0.0, %v773
  %v775 = vpop.f32.mrb[0].mxu0
  %v776 = vpop.f32.mrb[0].mxu0
  %v777 = vadd.f32 0.0, %v776
  %v778 = vpop.f32.mrb[0].mxu0
  %779 = vmatprep.mubr.bf16.mxu0 0
  %780 = vmatmul.mubr.bf16.gmra.mrb[0].mxu0 %v562
  %v781 = vpop.f32.mrb[0].mxu0
  %v782 = vadd.f32 0.0, %v781
  %v783 = vpop.f32.mrb[0].mxu0
  %v784 = vpop.f32.mrb[0].mxu0
  %v785 = vadd.f32 0.0, %v784
  %v786 = vpop.f32.mrb[0].mxu0
  %787 = vdwg.mxu0
  %v788 = vadd.bf16 %v80, %v113
  %v789 = vadd.bf16 %v81, %v114
  %v790 = vadd.bf16 %v82, %v115
  %v791 = vadd.bf16 %v83, %v116
  %v792 = vadd.bf16 %v84, %v117
  %v793 = vadd.bf16 %v85, %v118
  %v794 = vadd.bf16 %v86, %v119
  %v795 = vadd.bf16 %v87, %v120
  %v796 = vadd.bf16 %v88, %v121
  %v797 = vadd.bf16 %v89, %v122
  %v798 = vadd.bf16 %v90, %v123
  %v799 = vadd.bf16 %v91, %v124
  %v800 = vadd.bf16 %v92, %v125
  %v801 = vadd.bf16 %v93, %v126
  %v802 = vadd.bf16 %v94, %v127
  %v803 = vadd.bf16 %v95, %v128
  %v804 = vadd.bf16 %v96, %v129
  %v805 = vadd.bf16 %v97, %v130
  %v806 = vadd.bf16 %v98, %v131
  %v807 = vadd.bf16 %v99, %v132
  %v808 = vadd.bf16 %v100, %v133
  %v809 = vadd.bf16 %v101, %v134
  %v810 = vadd.bf16 %v102, %v135
  %v811 = vadd.bf16 %v103, %v136
  %v812 = vadd.bf16 %v104, %v137
  %v813 = vadd.bf16 %v105, %v138
  %v814 = vadd.bf16 %v106, %v139
  %v815 = vadd.bf16 %v107, %v140
  %v816 = vadd.bf16 %v108, %v141
  %v817 = vadd.bf16 %v109, %v142
  %v818 = vadd.bf16 %v110, %v143
  %v819 = vadd.bf16 %v111, %v144
  %v820 = vadd.bf16 %v145, %v162
  %v821 = vadd.bf16 %v146, %v163
  %v822 = vadd.bf16 %v147, %v164
  %v823 = vadd.bf16 %v148, %v165
  %v824 = vadd.bf16 %v149, %v166
  %v825 = vadd.bf16 %v150, %v167
  %v826 = vadd.bf16 %v151, %v168
  %v827 = vadd.bf16 %v152, %v169
  %v828 = vadd.bf16 %v153, %v170
  %v829 = vadd.bf16 %v154, %v171
  %v830 = vadd.bf16 %v155, %v172
  %v831 = vadd.bf16 %v156, %v173
  %v832 = vadd.bf16 %v157, %v174
  %v833 = vadd.bf16 %v158, %v175
  %v834 = vadd.bf16 %v159, %v176
  %v835 = vadd.bf16 %v160, %v177
  %v868 = vunpack.c.l.b16 %v788
  %v869 = vunpack.c.l.b16 %v789
  %v870 = vunpack.c.l.b16 %v790
  %v871 = vunpack.c.l.b16 %v791
  %v872 = vunpack.c.l.b16 %v792
  %v873 = vunpack.c.l.b16 %v793
  %v874 = vunpack.c.l.b16 %v794
  %v875 = vunpack.c.l.b16 %v795
  %v876 = vunpack.c.l.b16 %v796
  %v877 = vunpack.c.l.b16 %v797
  %v878 = vunpack.c.l.b16 %v798
  %v879 = vunpack.c.l.b16 %v799
  %v880 = vunpack.c.l.b16 %v800
  %v881 = vunpack.c.l.b16 %v801
  %v882 = vunpack.c.l.b16 %v802
  %v883 = vunpack.c.l.b16 %v803
  %v884 = vunpack.c.l.b16 %v804
  %v885 = vunpack.c.l.b16 %v805
  %v886 = vunpack.c.l.b16 %v806
  %v887 = vunpack.c.l.b16 %v807
  %v888 = vunpack.c.l.b16 %v808
  %v889 = vunpack.c.l.b16 %v809
  %v890 = vunpack.c.l.b16 %v810
  %v891 = vunpack.c.l.b16 %v811
  %v892 = vunpack.c.l.b16 %v812
  %v893 = vunpack.c.l.b16 %v813
  %v894 = vunpack.c.l.b16 %v814
  %v895 = vunpack.c.l.b16 %v815
  %v896 = vunpack.c.l.b16 %v816
  %v897 = vunpack.c.l.b16 %v817
  %v898 = vunpack.c.l.b16 %v818
  %v899 = vunpack.c.l.b16 %v819
  %v900 = vpack.c.b16 %v869, %v868
  %v901 = vpack.c.b16 %v871, %v870
  %v902 = vpack.c.b16 %v873, %v872
  %v903 = vpack.c.b16 %v875, %v874
  %v904 = vpack.c.b16 %v877, %v876
  %v905 = vpack.c.b16 %v879, %v878
  %v906 = vpack.c.b16 %v881, %v880
  %v907 = vpack.c.b16 %v883, %v882
  %v908 = vpack.c.b16 %v885, %v884
  %v909 = vpack.c.b16 %v887, %v886
  %v910 = vpack.c.b16 %v889, %v888
  %v911 = vpack.c.b16 %v891, %v890
  %v912 = vpack.c.b16 %v893, %v892
  %v913 = vpack.c.b16 %v895, %v894
  %v914 = vpack.c.b16 %v897, %v896
  %v915 = vpack.c.b16 %v899, %v898
  %v948 = vunpack.c.l.b16 %v820
  %v949 = vunpack.c.l.b16 %v821
  %v950 = vunpack.c.l.b16 %v822
  %v951 = vunpack.c.l.b16 %v823
  %v952 = vunpack.c.l.b16 %v824
  %v953 = vunpack.c.l.b16 %v825
  %v954 = vunpack.c.l.b16 %v826
  %v955 = vunpack.c.l.b16 %v827
  %v956 = vunpack.c.l.b16 %v828
  %v957 = vunpack.c.l.b16 %v829
  %v958 = vunpack.c.l.b16 %v830
  %v959 = vunpack.c.l.b16 %v831
  %v960 = vunpack.c.l.b16 %v832
  %v961 = vunpack.c.l.b16 %v833
  %v962 = vunpack.c.l.b16 %v834
  %v963 = vunpack.c.l.b16 %v835
  %v964 = vpack.c.b16 %v949, %v948
  %v965 = vpack.c.b16 %v951, %v950
  %v966 = vpack.c.b16 %v953, %v952
  %v967 = vpack.c.b16 %v955, %v954
  %v968 = vpack.c.b16 %v957, %v956
  %v969 = vpack.c.b16 %v959, %v958
  %v970 = vpack.c.b16 %v961, %v960
  %v971 = vpack.c.b16 %v963, %v962
  %980 = vmatprep.subr.bf16.mxu0 0
  %981 = vmatpush1.bf16.msra.mxu0 %v964
  %982 = vmatprep.subr.bf16.mxu0 0
  %983 = vmatpush1.bf16.msra.mxu0 %v965
  %984 = vmatprep.subr.bf16.mxu0 0
  %985 = vmatpush1.bf16.msra.mxu0 %v966
  %986 = vmatprep.subr.bf16.mxu0 0
  %987 = vmatpush1.bf16.msra.mxu0 %v967
  %988 = vmatprep.subr.bf16.mxu0 0
  %989 = vmatpush1.bf16.msra.mxu0 %v968
  %990 = vmatprep.subr.bf16.mxu0 0
  %991 = vmatpush1.bf16.msra.mxu0 %v969
  %992 = vmatprep.subr.bf16.mxu0 0
  %993 = vmatpush1.bf16.msra.mxu0 %v970
  %994 = vmatprep.subr.bf16.mxu0 0
  %995 = vmatpush1.bf16.msra.mxu0 %v971
  %996 = vmatprep.subr.bf16.mxu0 0
  %997 = vmatpush1.bf16.msra.mxu0 0
  %998 = vmatprep.subr.bf16.mxu0 0
  %999 = vmatpush1.bf16.msra.mxu0 0
  %1000 = vmatprep.subr.bf16.mxu0 0
  %1001 = vmatpush1.bf16.msra.mxu0 0
  %1002 = vmatprep.subr.bf16.mxu0 0
  %1003 = vmatpush1.bf16.msra.mxu0 0
  %1004 = vmatprep.subr.bf16.mxu0 0
  %1005 = vmatpush1.bf16.msra.mxu0 0
  %1006 = vmatprep.subr.bf16.mxu0 0
  %1007 = vmatpush1.bf16.msra.mxu0 0
  %1008 = vmatprep.subr.bf16.mxu0 0
  %1009 = vmatpush1.bf16.msra.mxu0 0
  %1010 = vmatprep.subr.bf16.mxu0 0
  %1011 = vmatpush1.bf16.msra.mxu0 0
  %1012 = vmatprep.mubr.bf16.mxu0 0
  %1013 = vmatmul.mubr.bf16.gmra.mrb[0].mxu0 %v900
  %v1014 = vpop.f32.mrb[0].mxu0
  %v1015 = vadd.f32 0.0, %v1014
  %v1016 = vpop.f32.mrb[0].mxu0
  %v1017 = vpop.f32.mrb[0].mxu0
  %v1018 = vadd.f32 0.0, %v1017
  %v1019 = vpop.f32.mrb[0].mxu0
  %1020 = vmatprep.mubr.bf16.mxu0 0
  %1021 = vmatmul.mubr.bf16.gmra.mrb[0].mxu0 %v901
  %v1022 = vpop.f32.mrb[0].mxu0
  %v1023 = vadd.f32 0.0, %v1022
  %v1024 = vpop.f32.mrb[0].mxu0
  %v1025 = vpop.f32.mrb[0].mxu0
  %v1026 = vadd.f32 0.0, %v1025
  %v1027 = vpop.f32.mrb[0].mxu0
  %1028 = vmatprep.mubr.bf16.mxu0 0
  %1029 = vmatmul.mubr.bf16.gmra.mrb[0].mxu0 %v902
  %v1030 = vpop.f32.mrb[0].mxu0
  %v1031 = vadd.f32 0.0, %v1030
  %v1032 = vpop.f32.mrb[0].mxu0
  %v1033 = vpop.f32.mrb[0].mxu0
  %v1034 = vadd.f32 0.0, %v1033
  %v1035 = vpop.f32.mrb[0].mxu0
  %1036 = vmatprep.mubr.bf16.mxu0 0
  %1037 = vmatmul.mubr.bf16.gmra.mrb[0].mxu0 %v903
  %v1038 = vpop.f32.mrb[0].mxu0
  %v1039 = vadd.f32 0.0, %v1038
  %v1040 = vpop.f32.mrb[0].mxu0
  %v1041 = vpop.f32.mrb[0].mxu0
  %v1042 = vadd.f32 0.0, %v1041
  %v1043 = vpop.f32.mrb[0].mxu0
  %1044 = vmatprep.mubr.bf16.mxu0 0
  %1045 = vmatmul.mubr.bf16.gmra.mrb[0].mxu0 %v904
  %v1046 = vpop.f32.mrb[0].mxu0
  %v1047 = vadd.f32 0.0, %v1046
  %v1048 = vpop.f32.mrb[0].mxu0
  %v1049 = vpop.f32.mrb[0].mxu0
  %v1050 = vadd.f32 0.0, %v1049
  %v1051 = vpop.f32.mrb[0].mxu0
  %1052 = vmatprep.mubr.bf16.mxu0 0
  %1053 = vmatmul.mubr.bf16.gmra.mrb[0].mxu0 %v905
  %v1054 = vpop.f32.mrb[0].mxu0
  %v1055 = vadd.f32 0.0, %v1054
  %v1056 = vpop.f32.mrb[0].mxu0
  %v1057 = vpop.f32.mrb[0].mxu0
  %v1058 = vadd.f32 0.0, %v1057
  %v1059 = vpop.f32.mrb[0].mxu0
  %1060 = vmatprep.mubr.bf16.mxu0 0
  %1061 = vmatmul.mubr.bf16.gmra.mrb[0].mxu0 %v906
  %v1062 = vpop.f32.mrb[0].mxu0
  %v1063 = vadd.f32 0.0, %v1062
  %v1064 = vpop.f32.mrb[0].mxu0
  %v1065 = vpop.f32.mrb[0].mxu0
  %v1066 = vadd.f32 0.0, %v1065
  %v1067 = vpop.f32.mrb[0].mxu0
  %1068 = vmatprep.mubr.bf16.mxu0 0
  %1069 = vmatmul.mubr.bf16.gmra.mrb[0].mxu0 %v907
  %v1070 = vpop.f32.mrb[0].mxu0
  %v1071 = vadd.f32 0.0, %v1070
  %v1072 = vpop.f32.mrb[0].mxu0
  %v1073 = vpop.f32.mrb[0].mxu0
  %v1074 = vadd.f32 0.0, %v1073
  %v1075 = vpop.f32.mrb[0].mxu0
  %1076 = vmatprep.mubr.bf16.mxu0 0
  %1077 = vmatmul.mubr.bf16.gmra.mrb[0].mxu0 %v908
  %v1078 = vpop.f32.mrb[0].mxu0
  %v1079 = vadd.f32 0.0, %v1078
  %v1080 = vpop.f32.mrb[0].mxu0
  %v1081 = vpop.f32.mrb[0].mxu0
  %v1082 = vadd.f32 0.0, %v1081
  %v1083 = vpop.f32.mrb[0].mxu0
  %1084 = vmatprep.mubr.bf16.mxu0 0
  %1085 = vmatmul.mubr.bf16.gmra.mrb[0].mxu0 %v909
  %v1086 = vpop.f32.mrb[0].mxu0
  %v1087 = vadd.f32 0.0, %v1086
  %v1088 = vpop.f32.mrb[0].mxu0
  %v1089 = vpop.f32.mrb[0].mxu0
  %v1090 = vadd.f32 0.0, %v1089
  %v1091 = vpop.f32.mrb[0].mxu0
  %1092 = vmatprep.mubr.bf16.mxu0 0
  %1093 = vmatmul.mubr.bf16.gmra.mrb[0].mxu0 %v910
  %v1094 = vpop.f32.mrb[0].mxu0
  %v1095 = vadd.f32 0.0, %v1094
  %v1096 = vpop.f32.mrb[0].mxu0
  %v1097 = vpop.f32.mrb[0].mxu0
  %v1098 = vadd.f32 0.0, %v1097
  %v1099 = vpop.f32.mrb[0].mxu0
  %1100 = vmatprep.mubr.bf16.mxu0 0
  %1101 = vmatmul.mubr.bf16.gmra.mrb[0].mxu0 %v911
  %v1102 = vpop.f32.mrb[0].mxu0
  %v1103 = vadd.f32 0.0, %v1102
  %v1104 = vpop.f32.mrb[0].mxu0
  %v1105 = vpop.f32.mrb[0].mxu0
  %v1106 = vadd.f32 0.0, %v1105
  %v1107 = vpop.f32.mrb[0].mxu0
  %1108 = vmatprep.mubr.bf16.mxu0 0
  %1109 = vmatmul.mubr.bf16.gmra.mrb[0].mxu0 %v912
  %v1110 = vpop.f32.mrb[0].mxu0
  %v1111 = vadd.f32 0.0, %v1110
  %v1112 = vpop.f32.mrb[0].mxu0
  %v1113 = vpop.f32.mrb[0].mxu0
  %v1114 = vadd.f32 0.0, %v1113
  %v1115 = vpop.f32.mrb[0].mxu0
  %1116 = vmatprep.mubr.bf16.mxu0 0
  %1117 = vmatmul.mubr.bf16.gmra.mrb[0].mxu0 %v913
  %v1118 = vpop.f32.mrb[0].mxu0
  %v1119 = vadd.f32 0.0, %v1118
  %v1120 = vpop.f32.mrb[0].mxu0
  %v1121 = vpop.f32.mrb[0].mxu0
  %v1122 = vadd.f32 0.0, %v1121
  %v1123 = vpop.f32.mrb[0].mxu0
  %1124 = vmatprep.mubr.bf16.mxu0 0
  %1125 = vmatmul.mubr.bf16.gmra.mrb[0].mxu0 %v914
  %v1126 = vpop.f32.mrb[0].mxu0
  %v1127 = vadd.f32 0.0, %v1126
  %v1128 = vpop.f32.mrb[0].mxu0
  %v1129 = vpop.f32.mrb[0].mxu0
  %v1130 = vadd.f32 0.0, %v1129
  %v1131 = vpop.f32.mrb[0].mxu0
  %1132 = vmatprep.mubr.bf16.mxu0 0
  %1133 = vmatmul.mubr.bf16.gmra.mrb[0].mxu0 %v915
  %v1134 = vpop.f32.mrb[0].mxu0
  %v1135 = vadd.f32 0.0, %v1134
  %v1136 = vpop.f32.mrb[0].mxu0
  %v1137 = vpop.f32.mrb[0].mxu0
  %v1138 = vadd.f32 0.0, %v1137
  %v1139 = vpop.f32.mrb[0].mxu0
  %1140 = vdwg.mxu0
  %v1141 = vld [vmem:[#allocation2] sm:$0xff]
  %v1142 = vld [vmem:[#allocation2 + $0x8] sm:$0xff]
  %v1143 = vld [vmem:[#allocation2 + $0x10] sm:$0xff]
  %v1144 = vld [vmem:[#allocation2 + $0x18] sm:$0xff]
  %v1145 = vld [vmem:[#allocation2 + $0x20] sm:$0xff]
  %v1146 = vld [vmem:[#allocation2 + $0x28] sm:$0xff]
  %v1147 = vld [vmem:[#allocation2 + $0x30] sm:$0xff]
  %v1148 = vld [vmem:[#allocation2 + $0x38] sm:$0xff]
  %v1149 = vld [vmem:[#allocation2 + $0x40] sm:$0xff]
  %v1150 = vld [vmem:[#allocation2 + $0x48] sm:$0xff]
  %v1151 = vld [vmem:[#allocation2 + $0x50] sm:$0xff]
  %v1152 = vld [vmem:[#allocation2 + $0x58] sm:$0xff]
  %v1153 = vld [vmem:[#allocation2 + $0x60] sm:$0xff]
  %v1154 = vld [vmem:[#allocation2 + $0x68] sm:$0xff]
  %v1155 = vld [vmem:[#allocation2 + $0x70] sm:$0xff]
  %v1156 = vld [vmem:[#allocation2 + $0x78] sm:$0xff]
  %v1157 = vld [vmem:[#allocation2 + $0x80] sm:$0xff]
  %v1158 = vld [vmem:[#allocation2 + $0x88] sm:$0xff]
  %v1159 = vld [vmem:[#allocation2 + $0x90] sm:$0xff]
  %v1160 = vld [vmem:[#allocation2 + $0x98] sm:$0xff]
  %v1161 = vld [vmem:[#allocation2 + $0xa0] sm:$0xff]
  %v1162 = vld [vmem:[#allocation2 + $0xa8] sm:$0xff]
  %v1163 = vld [vmem:[#allocation2 + $0xb0] sm:$0xff]
  %v1164 = vld [vmem:[#allocation2 + $0xb8] sm:$0xff]
  %v1165 = vld [vmem:[#allocation2 + $0xc0] sm:$0xff]
  %v1166 = vld [vmem:[#allocation2 + $0xc8] sm:$0xff]
  %v1167 = vld [vmem:[#allocation2 + $0xd0] sm:$0xff]
  %v1168 = vld [vmem:[#allocation2 + $0xd8] sm:$0xff]
  %v1169 = vld [vmem:[#allocation2 + $0xe0] sm:$0xff]
  %v1170 = vld [vmem:[#allocation2 + $0xe8] sm:$0xff]
  %v1171 = vld [vmem:[#allocation2 + $0xf0] sm:$0xff]
  %v1172 = vld [vmem:[#allocation2 + $0xf8] sm:$0xff]
  %v1173 = vsub.f32 %v357, %v662
  %v1174 = vsub.f32 %v360, %v665
  %v1175 = vsub.f32 %v365, %v670
  %v1176 = vsub.f32 %v368, %v673
  %v1177 = vsub.f32 %v373, %v678
  %v1178 = vsub.f32 %v376, %v681
  %v1179 = vsub.f32 %v381, %v686
  %v1180 = vsub.f32 %v384, %v689
  %v1181 = vsub.f32 %v389, %v694
  %v1182 = vsub.f32 %v392, %v697
  %v1183 = vsub.f32 %v397, %v702
  %v1184 = vsub.f32 %v400, %v705
  %v1185 = vsub.f32 %v405, %v710
  %v1186 = vsub.f32 %v408, %v713
  %v1187 = vsub.f32 %v413, %v718
  %v1188 = vsub.f32 %v416, %v721
  %v1189 = vsub.f32 %v421, %v726
  %v1190 = vsub.f32 %v424, %v729
  %v1191 = vsub.f32 %v429, %v734
  %v1192 = vsub.f32 %v432, %v737
  %v1193 = vsub.f32 %v437, %v742
  %v1194 = vsub.f32 %v440, %v745
  %v1195 = vsub.f32 %v445, %v750
  %v1196 = vsub.f32 %v448, %v753
  %v1197 = vsub.f32 %v453, %v758
  %v1198 = vsub.f32 %v456, %v761
  %v1199 = vsub.f32 %v461, %v766
  %v1200 = vsub.f32 %v464, %v769
  %v1201 = vsub.f32 %v469, %v774
  %v1202 = vsub.f32 %v472, %v777
  %v1203 = vsub.f32 %v477, %v782
  %v1204 = vsub.f32 %v480, %v785
  %v1205 = vadd.f32 %v1141, %v1173
  %v1206 = vadd.f32 %v1142, %v1174
  %v1207 = vadd.f32 %v1143, %v1175
  %v1208 = vadd.f32 %v1144, %v1176
  %v1209 = vadd.f32 %v1145, %v1177
  %v1210 = vadd.f32 %v1146, %v1178
  %v1211 = vadd.f32 %v1147, %v1179
  %v1212 = vadd.f32 %v1148, %v1180
  %v1213 = vadd.f32 %v1149, %v1181
  %v1214 = vadd.f32 %v1150, %v1182
  %v1215 = vadd.f32 %v1151, %v1183
  %v1216 = vadd.f32 %v1152, %v1184
  %v1217 = vadd.f32 %v1153, %v1185
  %v1218 = vadd.f32 %v1154, %v1186
  %v1219 = vadd.f32 %v1155, %v1187
  %v1220 = vadd.f32 %v1156, %v1188
  %v1221 = vadd.f32 %v1157, %v1189
  %v1222 = vadd.f32 %v1158, %v1190
  %v1223 = vadd.f32 %v1159, %v1191
  %v1224 = vadd.f32 %v1160, %v1192
  %v1225 = vadd.f32 %v1161, %v1193
  %v1226 = vadd.f32 %v1162, %v1194
  %v1227 = vadd.f32 %v1163, %v1195
  %v1228 = vadd.f32 %v1164, %v1196
  %v1229 = vadd.f32 %v1165, %v1197
  %v1230 = vadd.f32 %v1166, %v1198
  %v1231 = vadd.f32 %v1167, %v1199
  %v1232 = vadd.f32 %v1168, %v1200
  %v1233 = vadd.f32 %v1169, %v1201
  %v1234 = vadd.f32 %v1170, %v1202
  %v1235 = vadd.f32 %v1171, %v1203
  %v1236 = vadd.f32 %v1172, %v1204
  %1237 = vst [vmem:[#allocation2] sm:$0xff] %v1205
  %1238 = vst [vmem:[#allocation2 + $0x8] sm:$0xff] %v1206
  %1239 = vst [vmem:[#allocation2 + $0x10] sm:$0xff] %v1207
  %1240 = vst [vmem:[#allocation2 + $0x18] sm:$0xff] %v1208
  %1241 = vst [vmem:[#allocation2 + $0x20] sm:$0xff] %v1209
  %1242 = vst [vmem:[#allocation2 + $0x28] sm:$0xff] %v1210
  %1243 = vst [vmem:[#allocation2 + $0x30] sm:$0xff] %v1211
  %1244 = vst [vmem:[#allocation2 + $0x38] sm:$0xff] %v1212
  %1245 = vst [vmem:[#allocation2 + $0x40] sm:$0xff] %v1213
  %1246 = vst [vmem:[#allocation2 + $0x48] sm:$0xff] %v1214
  %1247 = vst [vmem:[#allocation2 + $0x50] sm:$0xff] %v1215
  %1248 = vst [vmem:[#allocation2 + $0x58] sm:$0xff] %v1216
  %1249 = vst [vmem:[#allocation2 + $0x60] sm:$0xff] %v1217
  %1250 = vst [vmem:[#allocation2 + $0x68] sm:$0xff] %v1218
  %1251 = vst [vmem:[#allocation2 + $0x70] sm:$0xff] %v1219
  %1252 = vst [vmem:[#allocation2 + $0x78] sm:$0xff] %v1220
  %1253 = vst [vmem:[#allocation2 + $0x80] sm:$0xff] %v1221
  %1254 = vst [vmem:[#allocation2 + $0x88] sm:$0xff] %v1222
  %1255 = vst [vmem:[#allocation2 + $0x90] sm:$0xff] %v1223
  %1256 = vst [vmem:[#allocation2 + $0x98] sm:$0xff] %v1224
  %1257 = vst [vmem:[#allocation2 + $0xa0] sm:$0xff] %v1225
  %1258 = vst [vmem:[#allocation2 + $0xa8] sm:$0xff] %v1226
  %1259 = vst [vmem:[#allocation2 + $0xb0] sm:$0xff] %v1227
  %1260 = vst [vmem:[#allocation2 + $0xb8] sm:$0xff] %v1228
  %1261 = vst [vmem:[#allocation2 + $0xc0] sm:$0xff] %v1229
  %1262 = vst [vmem:[#allocation2 + $0xc8] sm:$0xff] %v1230
  %1263 = vst [vmem:[#allocation2 + $0xd0] sm:$0xff] %v1231
  %1264 = vst [vmem:[#allocation2 + $0xd8] sm:$0xff] %v1232
  %1265 = vst [vmem:[#allocation2 + $0xe0] sm:$0xff] %v1233
  %1266 = vst [vmem:[#allocation2 + $0xe8] sm:$0xff] %v1234
  %1267 = vst [vmem:[#allocation2 + $0xf0] sm:$0xff] %v1235
  %1268 = vst [vmem:[#allocation2 + $0xf8] sm:$0xff] %v1236
  %v1269 = vld [vmem:[#allocation3] sm:$0xff]
  %v1270 = vld [vmem:[#allocation3 + $0x8] sm:$0xff]
  %v1271 = vld [vmem:[#allocation3 + $0x10] sm:$0xff]
  %v1272 = vld [vmem:[#allocation3 + $0x18] sm:$0xff]
  %v1273 = vld [vmem:[#allocation3 + $0x20] sm:$0xff]
  %v1274 = vld [vmem:[#allocation3 + $0x28] sm:$0xff]
  %v1275 = vld [vmem:[#allocation3 + $0x30] sm:$0xff]
  %v1276 = vld [vmem:[#allocation3 + $0x38] sm:$0xff]
  %v1277 = vld [vmem:[#allocation3 + $0x40] sm:$0xff]
  %v1278 = vld [vmem:[#allocation3 + $0x48] sm:$0xff]
  %v1279 = vld [vmem:[#allocation3 + $0x50] sm:$0xff]
  %v1280 = vld [vmem:[#allocation3 + $0x58] sm:$0xff]
  %v1281 = vld [vmem:[#allocation3 + $0x60] sm:$0xff]
  %v1282 = vld [vmem:[#allocation3 + $0x68] sm:$0xff]
  %v1283 = vld [vmem:[#allocation3 + $0x70] sm:$0xff]
  %v1284 = vld [vmem:[#allocation3 + $0x78] sm:$0xff]
  %v1285 = vld [vmem:[#allocation3 + $0x80] sm:$0xff]
  %v1286 = vld [vmem:[#allocation3 + $0x88] sm:$0xff]
  %v1287 = vld [vmem:[#allocation3 + $0x90] sm:$0xff]
  %v1288 = vld [vmem:[#allocation3 + $0x98] sm:$0xff]
  %v1289 = vld [vmem:[#allocation3 + $0xa0] sm:$0xff]
  %v1290 = vld [vmem:[#allocation3 + $0xa8] sm:$0xff]
  %v1291 = vld [vmem:[#allocation3 + $0xb0] sm:$0xff]
  %v1292 = vld [vmem:[#allocation3 + $0xb8] sm:$0xff]
  %v1293 = vld [vmem:[#allocation3 + $0xc0] sm:$0xff]
  %v1294 = vld [vmem:[#allocation3 + $0xc8] sm:$0xff]
  %v1295 = vld [vmem:[#allocation3 + $0xd0] sm:$0xff]
  %v1296 = vld [vmem:[#allocation3 + $0xd8] sm:$0xff]
  %v1297 = vld [vmem:[#allocation3 + $0xe0] sm:$0xff]
  %v1298 = vld [vmem:[#allocation3 + $0xe8] sm:$0xff]
  %v1299 = vld [vmem:[#allocation3 + $0xf0] sm:$0xff]
  %v1300 = vld [vmem:[#allocation3 + $0xf8] sm:$0xff]
  %v1301 = vsub.f32 %v1015, %v357
  %v1302 = vsub.f32 %v1018, %v360
  %v1303 = vsub.f32 %v1023, %v365
  %v1304 = vsub.f32 %v1026, %v368
  %v1305 = vsub.f32 %v1031, %v373
  %v1306 = vsub.f32 %v1034, %v376
  %v1307 = vsub.f32 %v1039, %v381
  %v1308 = vsub.f32 %v1042, %v384
  %v1309 = vsub.f32 %v1047, %v389
  %v1310 = vsub.f32 %v1050, %v392
  %v1311 = vsub.f32 %v1055, %v397
  %v1312 = vsub.f32 %v1058, %v400
  %v1313 = vsub.f32 %v1063, %v405
  %v1314 = vsub.f32 %v1066, %v408
  %v1315 = vsub.f32 %v1071, %v413
  %v1316 = vsub.f32 %v1074, %v416
  %v1317 = vsub.f32 %v1079, %v421
  %v1318 = vsub.f32 %v1082, %v424
  %v1319 = vsub.f32 %v1087, %v429
  %v1320 = vsub.f32 %v1090, %v432
  %v1321 = vsub.f32 %v1095, %v437
  %v1322 = vsub.f32 %v1098, %v440
  %v1323 = vsub.f32 %v1103, %v445
  %v1324 = vsub.f32 %v1106, %v448
  %v1325 = vsub.f32 %v1111, %v453
  %v1326 = vsub.f32 %v1114, %v456
  %v1327 = vsub.f32 %v1119, %v461
  %v1328 = vsub.f32 %v1122, %v464
  %v1329 = vsub.f32 %v1127, %v469
  %v1330 = vsub.f32 %v1130, %v472
  %v1331 = vsub.f32 %v1135, %v477
  %v1332 = vsub.f32 %v1138, %v480
  %v1333 = vsub.f32 %v1301, %v662
  %v1334 = vsub.f32 %v1302, %v665
  %v1335 = vsub.f32 %v1303, %v670
  %v1336 = vsub.f32 %v1304, %v673
  %v1337 = vsub.f32 %v1305, %v678
  %v1338 = vsub.f32 %v1306, %v681
  %v1339 = vsub.f32 %v1307, %v686
  %v1340 = vsub.f32 %v1308, %v689
  %v1341 = vsub.f32 %v1309, %v694
  %v1342 = vsub.f32 %v1310, %v697
  %v1343 = vsub.f32 %v1311, %v702
  %v1344 = vsub.f32 %v1312, %v705
  %v1345 = vsub.f32 %v1313, %v710
  %v1346 = vsub.f32 %v1314, %v713
  %v1347 = vsub.f32 %v1315, %v718
  %v1348 = vsub.f32 %v1316, %v721
  %v1349 = vsub.f32 %v1317, %v726
  %v1350 = vsub.f32 %v1318, %v729
  %v1351 = vsub.f32 %v1319, %v734
  %v1352 = vsub.f32 %v1320, %v737
  %v1353 = vsub.f32 %v1321, %v742
  %v1354 = vsub.f32 %v1322, %v745
  %v1355 = vsub.f32 %v1323, %v750
  %v1356 = vsub.f32 %v1324, %v753
  %v1357 = vsub.f32 %v1325, %v758
  %v1358 = vsub.f32 %v1326, %v761
  %v1359 = vsub.f32 %v1327, %v766
  %v1360 = vsub.f32 %v1328, %v769
  %v1361 = vsub.f32 %v1329, %v774
  %v1362 = vsub.f32 %v1330, %v777
  %v1363 = vsub.f32 %v1331, %v782
  %v1364 = vsub.f32 %v1332, %v785
  %v1365 = vadd.f32 %v1269, %v1333
  %v1366 = vadd.f32 %v1270, %v1334
  %v1367 = vadd.f32 %v1271, %v1335
  %v1368 = vadd.f32 %v1272, %v1336
  %v1369 = vadd.f32 %v1273, %v1337
  %v1370 = vadd.f32 %v1274, %v1338
  %v1371 = vadd.f32 %v1275, %v1339
  %v1372 = vadd.f32 %v1276, %v1340
  %v1373 = vadd.f32 %v1277, %v1341
  %v1374 = vadd.f32 %v1278, %v1342
  %v1375 = vadd.f32 %v1279, %v1343
  %v1376 = vadd.f32 %v1280, %v1344
  %v1377 = vadd.f32 %v1281, %v1345
  %v1378 = vadd.f32 %v1282, %v1346
  %v1379 = vadd.f32 %v1283, %v1347
  %v1380 = vadd.f32 %v1284, %v1348
  %v1381 = vadd.f32 %v1285, %v1349
  %v1382 = vadd.f32 %v1286, %v1350
  %v1383 = vadd.f32 %v1287, %v1351
  %v1384 = vadd.f32 %v1288, %v1352
  %v1385 = vadd.f32 %v1289, %v1353
  %v1386 = vadd.f32 %v1290, %v1354
  %v1387 = vadd.f32 %v1291, %v1355
  %v1388 = vadd.f32 %v1292, %v1356
  %v1389 = vadd.f32 %v1293, %v1357
  %v1390 = vadd.f32 %v1294, %v1358
  %v1391 = vadd.f32 %v1295, %v1359
  %v1392 = vadd.f32 %v1296, %v1360
  %v1393 = vadd.f32 %v1297, %v1361
  %v1394 = vadd.f32 %v1298, %v1362
  %v1395 = vadd.f32 %v1299, %v1363
  %v1396 = vadd.f32 %v1300, %v1364
  %1397 = vst [vmem:[#allocation3] sm:$0xff] %v1365
  %1398 = vst [vmem:[#allocation3 + $0x8] sm:$0xff] %v1366
  %1399 = vst [vmem:[#allocation3 + $0x10] sm:$0xff] %v1367
  %1400 = vst [vmem:[#allocation3 + $0x18] sm:$0xff] %v1368
  %1401 = vst [vmem:[#allocation3 + $0x20] sm:$0xff] %v1369
  %1402 = vst [vmem:[#allocation3 + $0x28] sm:$0xff] %v1370
  %1403 = vst [vmem:[#allocation3 + $0x30] sm:$0xff] %v1371
  %1404 = vst [vmem:[#allocation3 + $0x38] sm:$0xff] %v1372
  %1405 = vst [vmem:[#allocation3 + $0x40] sm:$0xff] %v1373
  %1406 = vst [vmem:[#allocation3 + $0x48] sm:$0xff] %v1374
  %1407 = vst [vmem:[#allocation3 + $0x50] sm:$0xff] %v1375
  %1408 = vst [vmem:[#allocation3 + $0x58] sm:$0xff] %v1376
  %1409 = vst [vmem:[#allocation3 + $0x60] sm:$0xff] %v1377
  %1410 = vst [vmem:[#allocation3 + $0x68] sm:$0xff] %v1378
  %1411 = vst [vmem:[#allocation3 + $0x70] sm:$0xff] %v1379
  %1412 = vst [vmem:[#allocation3 + $0x78] sm:$0xff] %v1380
  %1413 = vst [vmem:[#allocation3 + $0x80] sm:$0xff] %v1381
  %1414 = vst [vmem:[#allocation3 + $0x88] sm:$0xff] %v1382
  %1415 = vst [vmem:[#allocation3 + $0x90] sm:$0xff] %v1383
  %1416 = vst [vmem:[#allocation3 + $0x98] sm:$0xff] %v1384
  %1417 = vst [vmem:[#allocation3 + $0xa0] sm:$0xff] %v1385
  %1418 = vst [vmem:[#allocation3 + $0xa8] sm:$0xff] %v1386
  %1419 = vst [vmem:[#allocation3 + $0xb0] sm:$0xff] %v1387
  %1420 = vst [vmem:[#allocation3 + $0xb8] sm:$0xff] %v1388
  %1421 = vst [vmem:[#allocation3 + $0xc0] sm:$0xff] %v1389
  %1422 = vst [vmem:[#allocation3 + $0xc8] sm:$0xff] %v1390
  %1423 = vst [vmem:[#allocation3 + $0xd0] sm:$0xff] %v1391
  %1424 = vst [vmem:[#allocation3 + $0xd8] sm:$0xff] %v1392
  %1425 = vst [vmem:[#allocation3 + $0xe0] sm:$0xff] %v1393
  %1426 = vst [vmem:[#allocation3 + $0xe8] sm:$0xff] %v1394
  %1427 = vst [vmem:[#allocation3 + $0xf0] sm:$0xff] %v1395
  %1428 = vst [vmem:[#allocation3 + $0xf8] sm:$0xff] %v1396
  // Predicated region
  $region14: #{unitary_complex_linear.1} parent=0 // pred_check
    %p1429 = pneg %p12
  $region15: #{unitary_complex_linear.1} parent=0 // pred_check_branch
    %1431 = sbr.rel (%p1429) target = $region17
  $region16: #{unitary_complex_linear.1} parent=0 // pred_region
    %v1432 = vld [vmem:[#allocation2] sm:$0xff]
    %v1433 = vld [vmem:[#allocation2 + $0x8] sm:$0xff]
    %v1434 = vld [vmem:[#allocation2 + $0x10] sm:$0xff]
    %v1435 = vld [vmem:[#allocation2 + $0x18] sm:$0xff]
    %v1436 = vld [vmem:[#allocation2 + $0x20] sm:$0xff]
    %v1437 = vld [vmem:[#allocation2 + $0x28] sm:$0xff]
    %v1438 = vld [vmem:[#allocation2 + $0x30] sm:$0xff]
    %v1439 = vld [vmem:[#allocation2 + $0x38] sm:$0xff]
    %v1440 = vld [vmem:[#allocation2 + $0x40] sm:$0xff]
    %v1441 = vld [vmem:[#allocation2 + $0x48] sm:$0xff]
    %v1442 = vld [vmem:[#allocation2 + $0x50] sm:$0xff]
    %v1443 = vld [vmem:[#allocation2 + $0x58] sm:$0xff]
    %v1444 = vld [vmem:[#allocation2 + $0x60] sm:$0xff]
    %v1445 = vld [vmem:[#allocation2 + $0x68] sm:$0xff]
    %v1446 = vld [vmem:[#allocation2 + $0x70] sm:$0xff]
    %v1447 = vld [vmem:[#allocation2 + $0x78] sm:$0xff]
    %v1448 = vld [vmem:[#allocation2 + $0x80] sm:$0xff]
    %v1449 = vld [vmem:[#allocation2 + $0x88] sm:$0xff]
    %v1450 = vld [vmem:[#allocation2 + $0x90] sm:$0xff]
    %v1451 = vld [vmem:[#allocation2 + $0x98] sm:$0xff]
    %v1452 = vld [vmem:[#allocation2 + $0xa0] sm:$0xff]
    %v1453 = vld [vmem:[#allocation2 + $0xa8] sm:$0xff]
    %v1454 = vld [vmem:[#allocation2 + $0xb0] sm:$0xff]
    %v1455 = vld [vmem:[#allocation2 + $0xb8] sm:$0xff]
    %v1456 = vld [vmem:[#allocation2 + $0xc0] sm:$0xff]
    %v1457 = vld [vmem:[#allocation2 + $0xc8] sm:$0xff]
    %v1458 = vld [vmem:[#allocation2 + $0xd0] sm:$0xff]
    %v1459 = vld [vmem:[#allocation2 + $0xd8] sm:$0xff]
    %v1460 = vld [vmem:[#allocation2 + $0xe0] sm:$0xff]
    %v1461 = vld [vmem:[#allocation2 + $0xe8] sm:$0xff]
    %v1462 = vld [vmem:[#allocation2 + $0xf0] sm:$0xff]
    %v1463 = vld [vmem:[#allocation2 + $0xf8] sm:$0xff]
    %1464 = vst [vmem:[%s2] sm:$0xff] %v1432
    %1465 = vst [vmem:[%s2 + $0x8] sm:$0xff] %v1433
    %1466 = vst [vmem:[%s2 + $0x10] sm:$0xff] %v1434
    %1467 = vst [vmem:[%s2 + $0x18] sm:$0xff] %v1435
    %1468 = vst [vmem:[%s2 + $0x20] sm:$0xff] %v1436
    %1469 = vst [vmem:[%s2 + $0x28] sm:$0xff] %v1437
    %1470 = vst [vmem:[%s2 + $0x30] sm:$0xff] %v1438
    %1471 = vst [vmem:[%s2 + $0x38] sm:$0xff] %v1439
    %1472 = vst [vmem:[%s2 + $0x40] sm:$0xff] %v1440
    %1473 = vst [vmem:[%s2 + $0x48] sm:$0xff] %v1441
    %1474 = vst [vmem:[%s2 + $0x50] sm:$0xff] %v1442
    %1475 = vst [vmem:[%s2 + $0x58] sm:$0xff] %v1443
    %1476 = vst [vmem:[%s2 + $0x60] sm:$0xff] %v1444
    %1477 = vst [vmem:[%s2 + $0x68] sm:$0xff] %v1445
    %1478 = vst [vmem:[%s2 + $0x70] sm:$0xff] %v1446
    %1479 = vst [vmem:[%s2 + $0x78] sm:$0xff] %v1447
    %1480 = vst [vmem:[%s2 + $0x80] sm:$0xff] %v1448
    %1481 = vst [vmem:[%s2 + $0x88] sm:$0xff] %v1449
    %1482 = vst [vmem:[%s2 + $0x90] sm:$0xff] %v1450
    %1483 = vst [vmem:[%s2 + $0x98] sm:$0xff] %v1451
    %1484 = vst [vmem:[%s2 + $0xa0] sm:$0xff] %v1452
    %1485 = vst [vmem:[%s2 + $0xa8] sm:$0xff] %v1453
    %1486 = vst [vmem:[%s2 + $0xb0] sm:$0xff] %v1454
    %1487 = vst [vmem:[%s2 + $0xb8] sm:$0xff] %v1455
    %1488 = vst [vmem:[%s2 + $0xc0] sm:$0xff] %v1456
    %1489 = vst [vmem:[%s2 + $0xc8] sm:$0xff] %v1457
    %1490 = vst [vmem:[%s2 + $0xd0] sm:$0xff] %v1458
    %1491 = vst [vmem:[%s2 + $0xd8] sm:$0xff] %v1459
    %1492 = vst [vmem:[%s2 + $0xe0] sm:$0xff] %v1460
    %1493 = vst [vmem:[%s2 + $0xe8] sm:$0xff] %v1461
    %1494 = vst [vmem:[%s2 + $0xf0] sm:$0xff] %v1462
    %1495 = vst [vmem:[%s2 + $0xf8] sm:$0xff] %v1463
    %v1496 = vld [vmem:[#allocation3] sm:$0xff]
    %v1497 = vld [vmem:[#allocation3 + $0x8] sm:$0xff]
    %v1498 = vld [vmem:[#allocation3 + $0x10] sm:$0xff]
    %v1499 = vld [vmem:[#allocation3 + $0x18] sm:$0xff]
    %v1500 = vld [vmem:[#allocation3 + $0x20] sm:$0xff]
    %v1501 = vld [vmem:[#allocation3 + $0x28] sm:$0xff]
    %v1502 = vld [vmem:[#allocation3 + $0x30] sm:$0xff]
    %v1503 = vld [vmem:[#allocation3 + $0x38] sm:$0xff]
    %v1504 = vld [vmem:[#allocation3 + $0x40] sm:$0xff]
    %v1505 = vld [vmem:[#allocation3 + $0x48] sm:$0xff]
    %v1506 = vld [vmem:[#allocation3 + $0x50] sm:$0xff]
    %v1507 = vld [vmem:[#allocation3 + $0x58] sm:$0xff]
    %v1508 = vld [vmem:[#allocation3 + $0x60] sm:$0xff]
    %v1509 = vld [vmem:[#allocation3 + $0x68] sm:$0xff]
    %v1510 = vld [vmem:[#allocation3 + $0x70] sm:$0xff]
    %v1511 = vld [vmem:[#allocation3 + $0x78] sm:$0xff]
    %v1512 = vld [vmem:[#allocation3 + $0x80] sm:$0xff]
    %v1513 = vld [vmem:[#allocation3 + $0x88] sm:$0xff]
    %v1514 = vld [vmem:[#allocation3 + $0x90] sm:$0xff]
    %v1515 = vld [vmem:[#allocation3 + $0x98] sm:$0xff]
    %v1516 = vld [vmem:[#allocation3 + $0xa0] sm:$0xff]
    %v1517 = vld [vmem:[#allocation3 + $0xa8] sm:$0xff]
    %v1518 = vld [vmem:[#allocation3 + $0xb0] sm:$0xff]
    %v1519 = vld [vmem:[#allocation3 + $0xb8] sm:$0xff]
    %v1520 = vld [vmem:[#allocation3 + $0xc0] sm:$0xff]
    %v1521 = vld [vmem:[#allocation3 + $0xc8] sm:$0xff]
    %v1522 = vld [vmem:[#allocation3 + $0xd0] sm:$0xff]
    %v1523 = vld [vmem:[#allocation3 + $0xd8] sm:$0xff]
    %v1524 = vld [vmem:[#allocation3 + $0xe0] sm:$0xff]
    %v1525 = vld [vmem:[#allocation3 + $0xe8] sm:$0xff]
    %v1526 = vld [vmem:[#allocation3 + $0xf0] sm:$0xff]
    %v1527 = vld [vmem:[#allocation3 + $0xf8] sm:$0xff]
    %s1528 = scalar_lea.vmem %s2, 256
    %1529 = vst [vmem:[%s1528] sm:$0xff] %v1496
    %1530 = vst [vmem:[%s1528 + $0x8] sm:$0xff] %v1497
    %1531 = vst [vmem:[%s1528 + $0x10] sm:$0xff] %v1498
    %1532 = vst [vmem:[%s1528 + $0x18] sm:$0xff] %v1499
    %1533 = vst [vmem:[%s1528 + $0x20] sm:$0xff] %v1500
    %1534 = vst [vmem:[%s1528 + $0x28] sm:$0xff] %v1501
    %1535 = vst [vmem:[%s1528 + $0x30] sm:$0xff] %v1502
    %1536 = vst [vmem:[%s1528 + $0x38] sm:$0xff] %v1503
    %1537 = vst [vmem:[%s1528 + $0x40] sm:$0xff] %v1504
    %1538 = vst [vmem:[%s1528 + $0x48] sm:$0xff] %v1505
    %1539 = vst [vmem:[%s1528 + $0x50] sm:$0xff] %v1506
    %1540 = vst [vmem:[%s1528 + $0x58] sm:$0xff] %v1507
    %1541 = vst [vmem:[%s1528 + $0x60] sm:$0xff] %v1508
    %1542 = vst [vmem:[%s1528 + $0x68] sm:$0xff] %v1509
    %1543 = vst [vmem:[%s1528 + $0x70] sm:$0xff] %v1510
    %1544 = vst [vmem:[%s1528 + $0x78] sm:$0xff] %v1511
    %1545 = vst [vmem:[%s1528 + $0x80] sm:$0xff] %v1512
    %1546 = vst [vmem:[%s1528 + $0x88] sm:$0xff] %v1513
    %1547 = vst [vmem:[%s1528 + $0x90] sm:$0xff] %v1514
    %1548 = vst [vmem:[%s1528 + $0x98] sm:$0xff] %v1515
    %1549 = vst [vmem:[%s1528 + $0xa0] sm:$0xff] %v1516
    %1550 = vst [vmem:[%s1528 + $0xa8] sm:$0xff] %v1517
    %1551 = vst [vmem:[%s1528 + $0xb0] sm:$0xff] %v1518
    %1552 = vst [vmem:[%s1528 + $0xb8] sm:$0xff] %v1519
    %1553 = vst [vmem:[%s1528 + $0xc0] sm:$0xff] %v1520
    %1554 = vst [vmem:[%s1528 + $0xc8] sm:$0xff] %v1521
    %1555 = vst [vmem:[%s1528 + $0xd0] sm:$0xff] %v1522
    %1556 = vst [vmem:[%s1528 + $0xd8] sm:$0xff] %v1523
    %1557 = vst [vmem:[%s1528 + $0xe0] sm:$0xff] %v1524
    %1558 = vst [vmem:[%s1528 + $0xe8] sm:$0xff] %v1525
    %1559 = vst [vmem:[%s1528 + $0xf0] sm:$0xff] %v1526
    %1560 = vst [vmem:[%s1528 + $0xf8] sm:$0xff] %v1527
  $region17: #{unitary_complex_linear.1} parent=0 // pred_fallthru
    _
  // Predicated region
  $region18: #{unitary_complex_linear.1} parent=0 // pred_check
    _
  $region19: #{unitary_complex_linear.1} parent=0 // pred_check_branch
    %1562 = sbr.rel (0) target = $region21
  $region20: #{unitary_complex_linear.1} parent=0 // pred_region
    _
  $region21: #{unitary_complex_linear.1} parent=0 // pred_fallthru
    _
  // Predicated region
  $region22: #{unitary_complex_linear.1} parent=0 // pred_check
    _
  $region23: #{unitary_complex_linear.1} parent=0 // pred_check_branch
    %1564 = sbr.rel (0) target = $region25
  $region24: #{unitary_complex_linear.1} parent=0 // pred_region
    _
  $region25: #{unitary_complex_linear.1} parent=0 // pred_fallthru
    _

</llo_original>
